<compile_context>
chip_gen: v7x
topology: tpu7x:2x2x1
jax: 0.10.0
libtpu: 0.0.40
codegen_flags: <defaults>
</compile_context>

<pallas_src>
import functools
import math

import jax
import jax.numpy as jnp
from jax.experimental import pallas as pl
from jax.experimental.pallas import tpu as pltpu


def _round_up(x, m):
    return ((x + m - 1) // m) * m


def _vmem_capacity_bytes():
    """Per-generation VMEM capacity (falls back to the smallest, v7x's 64 MiB)."""
    try:
        info = pltpu.get_tpu_info()
        cap = int(getattr(info, "vmem_capacity_bytes", 0))
        if cap > 0:
            return cap
    except Exception:
        pass
    return 64 * 1024 * 1024


def _step_vmem_bytes(bt, S, Dp, Hp, in_bytes):
    """All VMEM residents of one grid step (pipelined blocks + intermediates)."""
    n = bt * S
    x_blk = 2 * n * Dp * in_bytes        # X block, double-buffered
    o_blk = 2 * n * Hp * in_bytes        # output block, double-buffered
    w_blk = 2 * Dp * 3 * Hp * in_bytes   # fused W_qkv block (constant index)
    b_blk = 2 * 3 * Hp * 4               # fused b_qkv block (f32)
    qkv = n * 3 * Hp * 4                 # f32 QKV projection intermediate
    att = 2 * n * n * 4                  # f32 scores + exp/weights
    out32 = n * Hp * 4                   # f32 PV result before downcast
    return x_blk + o_blk + w_blk + b_blk + qkv + att + out32


def _pick_batch_tile(B, S, Dp, Hp, in_bytes, budget_bytes):
    """Largest batch tile whose per-step footprint fits `budget_bytes`.

    Blocks are flattened (bt*S, .) slabs, so bt*S must stay sublane-aligned
    (multiple of 8) unless bt == B (full-extent block is always legal).
    A >= 2-way split (megacore / v7x dual-TC) is only re-introduced when each
    half still carries several microseconds of MXU work.
    """
    best = None
    for bt in range(1, B + 1):
        if B % bt:
            continue
        if bt != B and (bt * S) % 8 != 0:
            continue
        if _step_vmem_bytes(bt, S, Dp, Hp, in_bytes) <= budget_bytes:
            best = bt
    if best is None:
        # Even one aligned tile exceeds the soft budget: fall back to the full
        # batch and let vmem_limit_bytes absorb it.
        # TODO(synk): at this point a flash (online-softmax) restructure is the
        # right fix, not a bigger tile.
        best = B

    if best == B and B % 2 == 0 and ((B // 2) * S) % 8 == 0:
        n_half = (B // 2) * S
        half_flops = 2 * n_half * Dp * 3 * Hp + 4 * n_half * n_half * Hp
        if half_flops >= 2_000_000_000:   # several us of MXU work per step
            best = B // 2
    return best


def _self_attention_kernel(x_ref, wqkv_ref, bqkv_ref, o_ref, *, hp, seq, bt):
    """One grid step: `bt` batch elements flattened to n = bt*seq rows.

    x_ref:    (n, Dp)     activations (native dtype)
    wqkv_ref: (Dp, 3*Hp)  [Wq*scale | Wk | Wv], zero-padded, x.dtype
    bqkv_ref: (1, 3*Hp)   [bq*scale | bk | bv], zero-padded, f32
    o_ref:    (n, Hp)     lane-dense output (Hp % 128 == 0)
    """
    n = x_ref.shape[0]
    cdt = x_ref.dtype

    # Fused QKV projection: one MXU matmul with M = n rows, f32 accumulation.
    qkv = jnp.dot(x_ref[...], wqkv_ref[...], preferred_element_type=jnp.float32)
    qkv = qkv + bqkv_ref[...]                                   # (n, 3*Hp) f32

    q = qkv[:, 0 * hp:1 * hp]        # already carries the 1/sqrt(H) scale
    k = qkv[:, 1 * hp:2 * hp]
    v = qkv[:, 2 * hp:3 * hp]

    # scores[i, j] = q[i, :] . k[j, :]  -- one well-shaped 2-D matmul over all
    # bt*seq rows (no per-batch tiny matmuls, no explicit K^T copy).
    scores = jax.lax.dot_general(
        q.astype(cdt), k.astype(cdt), (((1,), (1,)), ((), ())),
        preferred_element_type=jnp.float32)                     # (n, n)

    if bt > 1:
        # Block-diagonal batch mask: rows/cols from different batch elements
        # must not attend to each other.  Applied before the softmax max/sum.
        row = jax.lax.broadcasted_iota(jnp.int32, (n, n), 0)
        col = jax.lax.broadcasted_iota(jnp.int32, (n, n), 1)
        inv_s = jnp.float32(1.0 / seq)
        row_b = jnp.floor((row.astype(jnp.float32) + 0.5) * inv_s)
        col_b = jnp.floor((col.astype(jnp.float32) + 0.5) * inv_s)
        scores = jnp.where(row_b == col_b, scores, jnp.float32(-1e30))

    # Numerically-stable softmax along the key axis (f32 math).
    m = jnp.max(scores, axis=-1, keepdims=True)
    e = jnp.exp(scores - m)
    denom = jnp.sum(e, axis=-1, keepdims=True)
    weights = e * pl.reciprocal(denom, approx=True)             # EUP slot

    out = jnp.dot(weights.astype(cdt), v.astype(cdt),
                  preferred_element_type=jnp.float32)           # (n, Hp)
    o_ref[...] = out.astype(o_ref.dtype)


@jax.jit
def self_attention_pallas(x, wq, wk, wv, bq, bk, bv):
    """x: [B, S, D]; w*: [D, H]; b*: [1, H] -> [B, S, H]."""
    B, S, D = x.shape
    H = wq.shape[1]

    Dp = _round_up(D, 128)   # lane-dense contraction dim
    Hp = _round_up(H, 128)   # lane-dense per-head output dim

    in_bytes = jnp.dtype(x.dtype).itemsize
    vmem_cap = _vmem_capacity_bytes()
    vmem_limit = min(int(0.75 * vmem_cap), 96 * 1024 * 1024)
    budget = int(0.8 * vmem_limit)

    # Fold the attention scale into Wq / bq; fuse Q/K/V weights into one wide
    # [Dp, 3*Hp] matrix; MXU weight operand in x.dtype (bias stays f32 since it
    # is added to the f32 accumulator).
    scale = 1.0 / math.sqrt(float(H))

    def pad2(w, rows, cols):
        w = w.astype(jnp.float32)
        if w.shape != (rows, cols):
            w = jnp.pad(w, ((0, rows - w.shape[0]), (0, cols - w.shape[1])))
        return w

    wqkv = jnp.concatenate(
        [pad2(wq * scale, Dp, Hp), pad2(wk, Dp, Hp), pad2(wv, Dp, Hp)],
        axis=1).astype(x.dtype)
    bqkv = jnp.concatenate(
        [pad2(bq * scale, 1, Hp), pad2(bk, 1, Hp), pad2(bv, 1, Hp)], axis=1)

    # Flatten batch/seq (free, row-major); pad D only if it is not already
    # lane-aligned -- no HBM pad round-trip in the common aligned case.
    x2 = x.reshape(B * S, D)
    if Dp != D:
        x2 = jnp.pad(x2, ((0, 0), (0, Dp - D)))

    bt = _pick_batch_tile(B, S, Dp, Hp, in_bytes, budget)
    n_blk = bt * S
    grid = (B // bt,)

    kernel = functools.partial(_self_attention_kernel, hp=Hp, seq=S, bt=bt)

    out2 = pl.pallas_call(
        kernel,
        out_shape=jax.ShapeDtypeStruct((B * S, Hp), x.dtype),
        grid_spec=pltpu.PrefetchScalarGridSpec(
            num_scalar_prefetch=0,
            grid=grid,
            in_specs=[
                pl.BlockSpec((n_blk, Dp), lambda i: (i, 0)),    # X rows
                pl.BlockSpec((Dp, 3 * Hp), lambda i: (0, 0)),   # fused W_qkv
                pl.BlockSpec((1, 3 * Hp), lambda i: (0, 0)),    # fused b_qkv
            ],
            out_specs=pl.BlockSpec((n_blk, Hp), lambda i: (i, 0)),
        ),
        compiler_params=pltpu.CompilerParams(
            dimension_semantics=("parallel",),
            vmem_limit_bytes=vmem_limit),
    )(x2, wqkv, bqkv)

    return out2[:, :H].reshape(B, S, H)


def self_attention_ref(x, wq, wk, wv, bq, bk, bv):
    q = x @ wq + bq
    k = x @ wk + bk
    v = x @ wv + bv
    scores = jnp.einsum("bqd,bkd->bqk", q, k) / jnp.sqrt(jnp.float32(wq.shape[1]))
    w = jax.nn.softmax(scores, axis=-1)
    return jnp.einsum("bqk,bkd->bqd", w, v)


if __name__ == "__main__":
    # Shapes from the module spec: [B=32, S=10, D=512] -> [B, S, H=64].
    batch_size, seq_length, input_dim, hidden_dim = 32, 10, 512, 64

    key = jax.random.PRNGKey(0)
    kx, kq, kk, kv, kbq, kbk, kbv = jax.random.split(key, 7)

    x = jax.random.normal(kx, (batch_size, seq_length, input_dim), jnp.float32)

    # torch.nn.Linear-style init: U(-1/sqrt(fan_in), 1/sqrt(fan_in)).
    bound = 1.0 / math.sqrt(float(input_dim))
    init_w = lambda k: jax.random.uniform(k, (input_dim, hidden_dim),
                                          jnp.float32, -bound, bound)
    init_b = lambda k: jax.random.uniform(k, (1, hidden_dim),
                                          jnp.float32, -bound, bound)
    wq, wk, wv = init_w(kq), init_w(kk), init_w(kv)
    bq, bk, bv = init_b(kbq), init_b(kbk), init_b(kbv)

    out = self_attention_pallas(x, wq, wk, wv, bq, bk, bv)
    out = jax.block_until_ready(out)

    ref = self_attention_ref(x, wq, wk, wv, bq, bk, bv)
    assert out.shape == (batch_size, seq_length, hidden_dim)
    # approx=True reciprocal (EUP) -> slightly looser tolerance than exact div.
    assert jnp.allclose(out, ref, atol=1e-2, rtol=1e-2), \
        float(jnp.max(jnp.abs(out - ref)))

    print("KERNEL_OK")
</pallas_src>

<mosaic_0001>
module attributes {stable_mosaic.version = 11 : i64} {
  func.func @_self_attention_kernel(%arg0: i32, %arg1: memref<320x512xf32, #tpu.memory_space<vmem>>, %arg2: memref<512x384xf32, #tpu.memory_space<vmem>>, %arg3: memref<1x384xf32, #tpu.memory_space<vmem>>, %arg4: memref<320x128xf32, #tpu.memory_space<vmem>>) attributes {dimension_semantics = [#tpu.dimension_semantics<parallel>], iteration_bounds = array<i64: 1>, scalar_prefetch = 0 : i64, scratch_operands = 0 : i64, tpu.core_type = #tpu.core_type<tc>, window_params = [{transform_indices = @transform_0, window_bounds = array<i64: 320, 512>}, {pipeline_mode = #tpu.pipeline_mode<synchronous>, transform_indices = @transform_1, window_bounds = array<i64: 512, 384>}, {pipeline_mode = #tpu.pipeline_mode<synchronous>, transform_indices = @transform_2, window_bounds = array<i64: 1, 384>}, {transform_indices = @transform_3, window_bounds = array<i64: 320, 128>}]} {
    %c0 = arith.constant 0 : index
    %c0_0 = arith.constant 0 : index
    %0 = vector.load %arg1[%c0, %c0_0] : memref<320x512xf32, #tpu.memory_space<vmem>>, vector<320x512xf32>
    %c0_1 = arith.constant 0 : index
    %c0_2 = arith.constant 0 : index
    %1 = vector.load %arg2[%c0_1, %c0_2] : memref<512x384xf32, #tpu.memory_space<vmem>>, vector<512x384xf32>
    %cst = arith.constant dense<0.000000e+00> : vector<320x384xf32>
    %2 = tpu.matmul %0, %1, %cst {dimension_numbers = #tpu.dot_dimension_numbers<[1], [0], [0], [1], [0, 0, 1, 1], [], []>} : vector<320x512xf32>, vector<512x384xf32>, vector<320x384xf32> -> vector<320x384xf32>
    %c0_3 = arith.constant 0 : index
    %c0_4 = arith.constant 0 : index
    %3 = vector.load %arg3[%c0_3, %c0_4] : memref<1x384xf32, #tpu.memory_space<vmem>>, vector<1x384xf32>
    %4 = vector.broadcast %3 : vector<1x384xf32> to vector<320x384xf32>
    %5 = arith.addf %2, %4 : vector<320x384xf32>
    %6 = vector.extract_strided_slice %5 {offsets = [0, 0], sizes = [320, 128], strides = [1, 1]} : vector<320x384xf32> to vector<320x128xf32>
    %7 = vector.extract_strided_slice %5 {offsets = [0, 128], sizes = [320, 128], strides = [1, 1]} : vector<320x384xf32> to vector<320x128xf32>
    %8 = vector.extract_strided_slice %5 {offsets = [0, 256], sizes = [320, 128], strides = [1, 1]} : vector<320x384xf32> to vector<320x128xf32>
    %cst_5 = arith.constant dense<0.000000e+00> : vector<320x320xf32>
    %9 = tpu.matmul %6, %7, %cst_5 {dimension_numbers = #tpu.dot_dimension_numbers<[1], [1], [0], [0], [0, 0, 1, 0], [], []>} : vector<320x128xf32>, vector<320x128xf32>, vector<320x320xf32> -> vector<320x320xf32>
    %10 = tpu.iota {dimensions = array<i32: 0>} : vector<320x320xi32>
    %11 = tpu.iota {dimensions = array<i32: 1>} : vector<320x320xi32>
    %12 = arith.sitofp %10 : vector<320x320xi32> to vector<320x320xf32>
    %cst_6 = arith.constant 5.000000e-01 : f32
    %13 = vector.broadcast %cst_6 : f32 to vector<320x320xf32>
    %14 = arith.addf %12, %13 : vector<320x320xf32>
    %cst_7 = arith.constant 1.000000e-01 : f32
    %15 = vector.broadcast %cst_7 : f32 to vector<320x320xf32>
    %16 = arith.mulf %14, %15 : vector<320x320xf32>
    %17 = math.floor %16 : vector<320x320xf32>
    %18 = arith.sitofp %11 : vector<320x320xi32> to vector<320x320xf32>
    %cst_8 = arith.constant 5.000000e-01 : f32
    %19 = vector.broadcast %cst_8 : f32 to vector<320x320xf32>
    %20 = arith.addf %18, %19 : vector<320x320xf32>
    %cst_9 = arith.constant 1.000000e-01 : f32
    %21 = vector.broadcast %cst_9 : f32 to vector<320x320xf32>
    %22 = arith.mulf %20, %21 : vector<320x320xf32>
    %23 = math.floor %22 : vector<320x320xf32>
    %24 = arith.cmpf oeq, %17, %23 : vector<320x320xf32>
    %cst_10 = arith.constant -1.000000e+30 : f32
    %25 = vector.broadcast %cst_10 : f32 to vector<320x320xf32>
    %26 = arith.select %24, %9, %25 : vector<320x320xi1>, vector<320x320xf32>
    %cst_11 = arith.constant dense<0xFF800000> : vector<320xf32>
    %27 = vector.multi_reduction <maximumf>, %26, %cst_11 [1] : vector<320x320xf32> to vector<320xf32>
    %28 = vector.shape_cast %27 : vector<320xf32> to vector<320x1xf32>
    %29 = vector.broadcast %28 : vector<320x1xf32> to vector<320x320xf32>
    %30 = arith.subf %26, %29 : vector<320x320xf32>
    %31 = math.exp %30 : vector<320x320xf32>
    %cst_12 = arith.constant dense<0.000000e+00> : vector<320xf32>
    %32 = vector.multi_reduction <add>, %31, %cst_12 [1] : vector<320x320xf32> to vector<320xf32>
    %33 = vector.shape_cast %32 : vector<320xf32> to vector<320x1xf32>
    %34 = tpu.reciprocal %33 {approx = true} : vector<320x1xf32> -> vector<320x1xf32>
    %35 = vector.broadcast %34 : vector<320x1xf32> to vector<320x320xf32>
    %36 = arith.mulf %31, %35 : vector<320x320xf32>
    %cst_13 = arith.constant dense<0.000000e+00> : vector<320x128xf32>
    %37 = tpu.matmul %36, %8, %cst_13 {dimension_numbers = #tpu.dot_dimension_numbers<[1], [0], [0], [1], [0, 0, 1, 1], [], []>} : vector<320x320xf32>, vector<320x128xf32>, vector<320x128xf32> -> vector<320x128xf32>
    %c0_14 = arith.constant 0 : index
    %c0_15 = arith.constant 0 : index
    %38 = vector.load %arg4[%c0_14, %c0_15] : memref<320x128xf32, #tpu.memory_space<vmem>>, vector<320x128xf32>
    tpu.vector_store %arg4[%c0_14, %c0_15], %37 {strides = array<i32>} : memref<320x128xf32, #tpu.memory_space<vmem>>, vector<320x128xf32>,
    return
  }
  func.func @transform_0(%arg0: i32) -> (i32, i32) {
    %c0_i32 = arith.constant 0 : i32
    %c0_i32_0 = arith.constant 0 : i32
    return %arg0, %c0_i32 : i32, i32
  }
  func.func @transform_1(%arg0: i32) -> (i32, i32) {
    %c0_i32 = arith.constant 0 : i32
    %c0_i32_0 = arith.constant 0 : i32
    %c0_i32_1 = arith.constant 0 : i32
    return %c0_i32, %c0_i32_0 : i32, i32
  }
  func.func @transform_2(%arg0: i32) -> (i32, i32) {
    %c0_i32 = arith.constant 0 : i32
    %c0_i32_0 = arith.constant 0 : i32
    %c0_i32_1 = arith.constant 0 : i32
    return %c0_i32, %c0_i32_0 : i32, i32
  }
  func.func @transform_3(%arg0: i32) -> (i32, i32) {
    %c0_i32 = arith.constant 0 : i32
    %c0_i32_0 = arith.constant 0 : i32
    return %arg0, %c0_i32 : i32, i32
  }
}

</mosaic_0001>

<llo_original>
// kernel: self_attention_pallas.1
$region0: #{self_attention_pallas.1}
  #allocation0 [shape = 'u32[]', space=smem, size = 0x4, offset = 0x4, fixed_abs, tag = 'smem constant byte address 0x4 - core index']
  #allocation1 [shape = 'u32[144,128]{1,0:T(1,128)}', space=vmem, size = 0x12000, scoped, tag = 'internal scratch']
  %s0 = inlined_call_operand.vmem [shape: f32[320,512], index: 0, kind: input, shape index: {}]
  %s1 = inlined_call_operand.vmem [shape: f32[512,384], index: 1, kind: input, shape index: {}]
  %s2 = inlined_call_operand.vmem [shape: f32[1,384], index: 2, kind: input, shape index: {}]
  %s3 = inlined_call_operand.vmem [shape: f32[320,128], index: 3, kind: output, shape index: {}]
  %s4 = sld [smem:[#allocation0]]
  $region22: #{self_attention_pallas.1} parent=0
    _
  %s6 = ssub.s32 1, %s4
  %s7 = scalar_select 0, %s6, %s4
  // Predicated region
  $region2: #{self_attention_pallas.1} parent=0 // pred_check
    _
  $region3: #{self_attention_pallas.1} parent=0 // pred_check_branch
    %9 = sbr.rel (0) target = $region5
  $region4: #{self_attention_pallas.1} parent=0 // pred_region
    _
  $region5: #{self_attention_pallas.1} parent=0 // pred_fallthru
    _
  // Predicated region
  $region6: #{self_attention_pallas.1} parent=0 // pred_check
    _
  $region7: #{self_attention_pallas.1} parent=0 // pred_check_branch
    %11 = sbr.rel (0) target = $region9
  $region8: #{self_attention_pallas.1} parent=0 // pred_region
    _
  $region9: #{self_attention_pallas.1} parent=0 // pred_fallthru
    _
  // Predicated region
  $region10: #{self_attention_pallas.1} parent=0 // pred_check
    _
  $region11: #{self_attention_pallas.1} parent=0 // pred_check_branch
    %13 = sbr.rel (0) target = $region13
  $region12: #{self_attention_pallas.1} parent=0 // pred_region
    _
  $region13: #{self_attention_pallas.1} parent=0 // pred_fallthru
    _
  %v14 = vld [vmem:[%s0] sm:$0xff]
  %v15 = vld [vmem:[%s0 + $0x8] sm:$0xff]
  %v16 = vld [vmem:[%s0 + $0x10] sm:$0xff]
  %v17 = vld [vmem:[%s0 + $0x18] sm:$0xff]
  %v18 = vld [vmem:[%s0 + $0x20] sm:$0xff]
  %v19 = vld [vmem:[%s0 + $0x28] sm:$0xff]
  %v20 = vld [vmem:[%s0 + $0x30] sm:$0xff]
  %v21 = vld [vmem:[%s0 + $0x38] sm:$0xff]
  %v22 = vld [vmem:[%s0 + $0x40] sm:$0xff]
  %v23 = vld [vmem:[%s0 + $0x48] sm:$0xff]
  %v24 = vld [vmem:[%s0 + $0x50] sm:$0xff]
  %v25 = vld [vmem:[%s0 + $0x58] sm:$0xff]
  %v26 = vld [vmem:[%s0 + $0x60] sm:$0xff]
  %v27 = vld [vmem:[%s0 + $0x68] sm:$0xff]
  %v28 = vld [vmem:[%s0 + $0x70] sm:$0xff]
  %v29 = vld [vmem:[%s0 + $0x78] sm:$0xff]
  %v30 = vld [vmem:[%s0 + $0x80] sm:$0xff]
  %v31 = vld [vmem:[%s0 + $0x88] sm:$0xff]
  %v32 = vld [vmem:[%s0 + $0x90] sm:$0xff]
  %v33 = vld [vmem:[%s0 + $0x98] sm:$0xff]
  %v34 = vld [vmem:[%s0 + $0xa0] sm:$0xff]
  %v35 = vld [vmem:[%s0 + $0xa8] sm:$0xff]
  %v36 = vld [vmem:[%s0 + $0xb0] sm:$0xff]
  %v37 = vld [vmem:[%s0 + $0xb8] sm:$0xff]
  %v38 = vld [vmem:[%s0 + $0xc0] sm:$0xff]
  %v39 = vld [vmem:[%s0 + $0xc8] sm:$0xff]
  %v40 = vld [vmem:[%s0 + $0xd0] sm:$0xff]
  %v41 = vld [vmem:[%s0 + $0xd8] sm:$0xff]
  %v42 = vld [vmem:[%s0 + $0xe0] sm:$0xff]
  %v43 = vld [vmem:[%s0 + $0xe8] sm:$0xff]
  %v44 = vld [vmem:[%s0 + $0xf0] sm:$0xff]
  %v45 = vld [vmem:[%s0 + $0xf8] sm:$0xff]
  %v46 = vld [vmem:[%s0 + $0x100] sm:$0xff]
  %v47 = vld [vmem:[%s0 + $0x108] sm:$0xff]
  %v48 = vld [vmem:[%s0 + $0x110] sm:$0xff]
  %v49 = vld [vmem:[%s0 + $0x118] sm:$0xff]
  %v50 = vld [vmem:[%s0 + $0x120] sm:$0xff]
  %v51 = vld [vmem:[%s0 + $0x128] sm:$0xff]
  %v52 = vld [vmem:[%s0 + $0x130] sm:$0xff]
  %v53 = vld [vmem:[%s0 + $0x138] sm:$0xff]
  %v54 = vld [vmem:[%s0 + $0x140] sm:$0xff]
  %v55 = vld [vmem:[%s0 + $0x148] sm:$0xff]
  %v56 = vld [vmem:[%s0 + $0x150] sm:$0xff]
  %v57 = vld [vmem:[%s0 + $0x158] sm:$0xff]
  %v58 = vld [vmem:[%s0 + $0x160] sm:$0xff]
  %v59 = vld [vmem:[%s0 + $0x168] sm:$0xff]
  %v60 = vld [vmem:[%s0 + $0x170] sm:$0xff]
  %v61 = vld [vmem:[%s0 + $0x178] sm:$0xff]
  %v62 = vld [vmem:[%s0 + $0x180] sm:$0xff]
  %v63 = vld [vmem:[%s0 + $0x188] sm:$0xff]
  %v64 = vld [vmem:[%s0 + $0x190] sm:$0xff]
  %v65 = vld [vmem:[%s0 + $0x198] sm:$0xff]
  %v66 = vld [vmem:[%s0 + $0x1a0] sm:$0xff]
  %v67 = vld [vmem:[%s0 + $0x1a8] sm:$0xff]
  %v68 = vld [vmem:[%s0 + $0x1b0] sm:$0xff]
  %v69 = vld [vmem:[%s0 + $0x1b8] sm:$0xff]
  %v70 = vld [vmem:[%s0 + $0x1c0] sm:$0xff]
  %v71 = vld [vmem:[%s0 + $0x1c8] sm:$0xff]
  %v72 = vld [vmem:[%s0 + $0x1d0] sm:$0xff]
  %v73 = vld [vmem:[%s0 + $0x1d8] sm:$0xff]
  %v74 = vld [vmem:[%s0 + $0x1e0] sm:$0xff]
  %v75 = vld [vmem:[%s0 + $0x1e8] sm:$0xff]
  %v76 = vld [vmem:[%s0 + $0x1f0] sm:$0xff]
  %v77 = vld [vmem:[%s0 + $0x1f8] sm:$0xff]
  %v78 = vld [vmem:[%s0 + $0x200] sm:$0xff]
  %v79 = vld [vmem:[%s0 + $0x208] sm:$0xff]
  %v80 = vld [vmem:[%s0 + $0x210] sm:$0xff]
  %v81 = vld [vmem:[%s0 + $0x218] sm:$0xff]
  %v82 = vld [vmem:[%s0 + $0x220] sm:$0xff]
  %v83 = vld [vmem:[%s0 + $0x228] sm:$0xff]
  %v84 = vld [vmem:[%s0 + $0x230] sm:$0xff]
  %v85 = vld [vmem:[%s0 + $0x238] sm:$0xff]
  %v86 = vld [vmem:[%s0 + $0x240] sm:$0xff]
  %v87 = vld [vmem:[%s0 + $0x248] sm:$0xff]
  %v88 = vld [vmem:[%s0 + $0x250] sm:$0xff]
  %v89 = vld [vmem:[%s0 + $0x258] sm:$0xff]
  %v90 = vld [vmem:[%s0 + $0x260] sm:$0xff]
  %v91 = vld [vmem:[%s0 + $0x268] sm:$0xff]
  %v92 = vld [vmem:[%s0 + $0x270] sm:$0xff]
  %v93 = vld [vmem:[%s0 + $0x278] sm:$0xff]
  %v94 = vld [vmem:[%s0 + $0x280] sm:$0xff]
  %v95 = vld [vmem:[%s0 + $0x288] sm:$0xff]
  %v96 = vld [vmem:[%s0 + $0x290] sm:$0xff]
  %v97 = vld [vmem:[%s0 + $0x298] sm:$0xff]
  %v98 = vld [vmem:[%s0 + $0x2a0] sm:$0xff]
  %v99 = vld [vmem:[%s0 + $0x2a8] sm:$0xff]
  %v100 = vld [vmem:[%s0 + $0x2b0] sm:$0xff]
  %v101 = vld [vmem:[%s0 + $0x2b8] sm:$0xff]
  %v102 = vld [vmem:[%s0 + $0x2c0] sm:$0xff]
  %v103 = vld [vmem:[%s0 + $0x2c8] sm:$0xff]
  %v104 = vld [vmem:[%s0 + $0x2d0] sm:$0xff]
  %v105 = vld [vmem:[%s0 + $0x2d8] sm:$0xff]
  %v106 = vld [vmem:[%s0 + $0x2e0] sm:$0xff]
  %v107 = vld [vmem:[%s0 + $0x2e8] sm:$0xff]
  %v108 = vld [vmem:[%s0 + $0x2f0] sm:$0xff]
  %v109 = vld [vmem:[%s0 + $0x2f8] sm:$0xff]
  %v110 = vld [vmem:[%s0 + $0x300] sm:$0xff]
  %v111 = vld [vmem:[%s0 + $0x308] sm:$0xff]
  %v112 = vld [vmem:[%s0 + $0x310] sm:$0xff]
  %v113 = vld [vmem:[%s0 + $0x318] sm:$0xff]
  %v114 = vld [vmem:[%s0 + $0x320] sm:$0xff]
  %v115 = vld [vmem:[%s0 + $0x328] sm:$0xff]
  %v116 = vld [vmem:[%s0 + $0x330] sm:$0xff]
  %v117 = vld [vmem:[%s0 + $0x338] sm:$0xff]
  %v118 = vld [vmem:[%s0 + $0x340] sm:$0xff]
  %v119 = vld [vmem:[%s0 + $0x348] sm:$0xff]
  %v120 = vld [vmem:[%s0 + $0x350] sm:$0xff]
  %v121 = vld [vmem:[%s0 + $0x358] sm:$0xff]
  %v122 = vld [vmem:[%s0 + $0x360] sm:$0xff]
  %v123 = vld [vmem:[%s0 + $0x368] sm:$0xff]
  %v124 = vld [vmem:[%s0 + $0x370] sm:$0xff]
  %v125 = vld [vmem:[%s0 + $0x378] sm:$0xff]
  %v126 = vld [vmem:[%s0 + $0x380] sm:$0xff]
  %v127 = vld [vmem:[%s0 + $0x388] sm:$0xff]
  %v128 = vld [vmem:[%s0 + $0x390] sm:$0xff]
  %v129 = vld [vmem:[%s0 + $0x398] sm:$0xff]
  %v130 = vld [vmem:[%s0 + $0x3a0] sm:$0xff]
  %v131 = vld [vmem:[%s0 + $0x3a8] sm:$0xff]
  %v132 = vld [vmem:[%s0 + $0x3b0] sm:$0xff]
  %v133 = vld [vmem:[%s0 + $0x3b8] sm:$0xff]
  %v134 = vld [vmem:[%s0 + $0x3c0] sm:$0xff]
  %v135 = vld [vmem:[%s0 + $0x3c8] sm:$0xff]
  %v136 = vld [vmem:[%s0 + $0x3d0] sm:$0xff]
  %v137 = vld [vmem:[%s0 + $0x3d8] sm:$0xff]
  %v138 = vld [vmem:[%s0 + $0x3e0] sm:$0xff]
  %v139 = vld [vmem:[%s0 + $0x3e8] sm:$0xff]
  %v140 = vld [vmem:[%s0 + $0x3f0] sm:$0xff]
  %v141 = vld [vmem:[%s0 + $0x3f8] sm:$0xff]
  %v142 = vld [vmem:[%s0 + $0x400] sm:$0xff]
  %v143 = vld [vmem:[%s0 + $0x408] sm:$0xff]
  %v144 = vld [vmem:[%s0 + $0x410] sm:$0xff]
  %v145 = vld [vmem:[%s0 + $0x418] sm:$0xff]
  %v146 = vld [vmem:[%s0 + $0x420] sm:$0xff]
  %v147 = vld [vmem:[%s0 + $0x428] sm:$0xff]
  %v148 = vld [vmem:[%s0 + $0x430] sm:$0xff]
  %v149 = vld [vmem:[%s0 + $0x438] sm:$0xff]
  %v150 = vld [vmem:[%s0 + $0x440] sm:$0xff]
  %v151 = vld [vmem:[%s0 + $0x448] sm:$0xff]
  %v152 = vld [vmem:[%s0 + $0x450] sm:$0xff]
  %v153 = vld [vmem:[%s0 + $0x458] sm:$0xff]
  %v154 = vld [vmem:[%s0 + $0x460] sm:$0xff]
  %v155 = vld [vmem:[%s0 + $0x468] sm:$0xff]
  %v156 = vld [vmem:[%s0 + $0x470] sm:$0xff]
  %v157 = vld [vmem:[%s0 + $0x478] sm:$0xff]
  %v158 = vld [vmem:[%s0 + $0x480] sm:$0xff]
  %v159 = vld [vmem:[%s0 + $0x488] sm:$0xff]
  %v160 = vld [vmem:[%s0 + $0x490] sm:$0xff]
  %v161 = vld [vmem:[%s0 + $0x498] sm:$0xff]
  %v162 = vld [vmem:[%s0 + $0x4a0] sm:$0xff]
  %v163 = vld [vmem:[%s0 + $0x4a8] sm:$0xff]
  %v164 = vld [vmem:[%s0 + $0x4b0] sm:$0xff]
  %v165 = vld [vmem:[%s0 + $0x4b8] sm:$0xff]
  %v166 = vld [vmem:[%s0 + $0x4c0] sm:$0xff]
  %v167 = vld [vmem:[%s0 + $0x4c8] sm:$0xff]
  %v168 = vld [vmem:[%s0 + $0x4d0] sm:$0xff]
  %v169 = vld [vmem:[%s0 + $0x4d8] sm:$0xff]
  %v170 = vld [vmem:[%s0 + $0x4e0] sm:$0xff]
  %v171 = vld [vmem:[%s0 + $0x4e8] sm:$0xff]
  %v172 = vld [vmem:[%s0 + $0x4f0] sm:$0xff]
  %v173 = vld [vmem:[%s0 + $0x4f8] sm:$0xff]
  %v174 = vld [vmem:[%s1] sm:$0xff]
  %v175 = vld [vmem:[%s1 + $0x8] sm:$0xff]
  %v176 = vld [vmem:[%s1 + $0x10] sm:$0xff]
  %v177 = vld [vmem:[%s1 + $0x18] sm:$0xff]
  %v178 = vld [vmem:[%s1 + $0x20] sm:$0xff]
  %v179 = vld [vmem:[%s1 + $0x28] sm:$0xff]
  %v180 = vld [vmem:[%s1 + $0x30] sm:$0xff]
  %v181 = vld [vmem:[%s1 + $0x38] sm:$0xff]
  %v182 = vld [vmem:[%s1 + $0x40] sm:$0xff]
  %v183 = vld [vmem:[%s1 + $0x48] sm:$0xff]
  %v184 = vld [vmem:[%s1 + $0x50] sm:$0xff]
  %v185 = vld [vmem:[%s1 + $0x58] sm:$0xff]
  %v186 = vld [vmem:[%s1 + $0x60] sm:$0xff]
  %v187 = vld [vmem:[%s1 + $0x68] sm:$0xff]
  %v188 = vld [vmem:[%s1 + $0x70] sm:$0xff]
  %v189 = vld [vmem:[%s1 + $0x78] sm:$0xff]
  %v190 = vld [vmem:[%s1 + $0x80] sm:$0xff]
  %v191 = vld [vmem:[%s1 + $0x88] sm:$0xff]
  %v192 = vld [vmem:[%s1 + $0x90] sm:$0xff]
  %v193 = vld [vmem:[%s1 + $0x98] sm:$0xff]
  %v194 = vld [vmem:[%s1 + $0xa0] sm:$0xff]
  %v195 = vld [vmem:[%s1 + $0xa8] sm:$0xff]
  %v196 = vld [vmem:[%s1 + $0xb0] sm:$0xff]
  %v197 = vld [vmem:[%s1 + $0xb8] sm:$0xff]
  %v198 = vld [vmem:[%s1 + $0xc0] sm:$0xff]
  %v199 = vld [vmem:[%s1 + $0xc8] sm:$0xff]
  %v200 = vld [vmem:[%s1 + $0xd0] sm:$0xff]
  %v201 = vld [vmem:[%s1 + $0xd8] sm:$0xff]
  %v202 = vld [vmem:[%s1 + $0xe0] sm:$0xff]
  %v203 = vld [vmem:[%s1 + $0xe8] sm:$0xff]
  %v204 = vld [vmem:[%s1 + $0xf0] sm:$0xff]
  %v205 = vld [vmem:[%s1 + $0xf8] sm:$0xff]
  %v206 = vld [vmem:[%s1 + $0x100] sm:$0xff]
  %v207 = vld [vmem:[%s1 + $0x108] sm:$0xff]
  %v208 = vld [vmem:[%s1 + $0x110] sm:$0xff]
  %v209 = vld [vmem:[%s1 + $0x118] sm:$0xff]
  %v210 = vld [vmem:[%s1 + $0x120] sm:$0xff]
  %v211 = vld [vmem:[%s1 + $0x128] sm:$0xff]
  %v212 = vld [vmem:[%s1 + $0x130] sm:$0xff]
  %v213 = vld [vmem:[%s1 + $0x138] sm:$0xff]
  %v214 = vld [vmem:[%s1 + $0x140] sm:$0xff]
  %v215 = vld [vmem:[%s1 + $0x148] sm:$0xff]
  %v216 = vld [vmem:[%s1 + $0x150] sm:$0xff]
  %v217 = vld [vmem:[%s1 + $0x158] sm:$0xff]
  %v218 = vld [vmem:[%s1 + $0x160] sm:$0xff]
  %v219 = vld [vmem:[%s1 + $0x168] sm:$0xff]
  %v220 = vld [vmem:[%s1 + $0x170] sm:$0xff]
  %v221 = vld [vmem:[%s1 + $0x178] sm:$0xff]
  %v222 = vld [vmem:[%s1 + $0x180] sm:$0xff]
  %v223 = vld [vmem:[%s1 + $0x188] sm:$0xff]
  %v224 = vld [vmem:[%s1 + $0x190] sm:$0xff]
  %v225 = vld [vmem:[%s1 + $0x198] sm:$0xff]
  %v226 = vld [vmem:[%s1 + $0x1a0] sm:$0xff]
  %v227 = vld [vmem:[%s1 + $0x1a8] sm:$0xff]
  %v228 = vld [vmem:[%s1 + $0x1b0] sm:$0xff]
  %v229 = vld [vmem:[%s1 + $0x1b8] sm:$0xff]
  %v230 = vld [vmem:[%s1 + $0x1c0] sm:$0xff]
  %v231 = vld [vmem:[%s1 + $0x1c8] sm:$0xff]
  %v232 = vld [vmem:[%s1 + $0x1d0] sm:$0xff]
  %v233 = vld [vmem:[%s1 + $0x1d8] sm:$0xff]
  %v234 = vld [vmem:[%s1 + $0x1e0] sm:$0xff]
  %v235 = vld [vmem:[%s1 + $0x1e8] sm:$0xff]
  %v236 = vld [vmem:[%s1 + $0x1f0] sm:$0xff]
  %v237 = vld [vmem:[%s1 + $0x1f8] sm:$0xff]
  %v238 = vld [vmem:[%s1 + $0x200] sm:$0xff]
  %v239 = vld [vmem:[%s1 + $0x208] sm:$0xff]
  %v240 = vld [vmem:[%s1 + $0x210] sm:$0xff]
  %v241 = vld [vmem:[%s1 + $0x218] sm:$0xff]
  %v242 = vld [vmem:[%s1 + $0x220] sm:$0xff]
  %v243 = vld [vmem:[%s1 + $0x228] sm:$0xff]
  %v244 = vld [vmem:[%s1 + $0x230] sm:$0xff]
  %v245 = vld [vmem:[%s1 + $0x238] sm:$0xff]
  %v246 = vld [vmem:[%s1 + $0x240] sm:$0xff]
  %v247 = vld [vmem:[%s1 + $0x248] sm:$0xff]
  %v248 = vld [vmem:[%s1 + $0x250] sm:$0xff]
  %v249 = vld [vmem:[%s1 + $0x258] sm:$0xff]
  %v250 = vld [vmem:[%s1 + $0x260] sm:$0xff]
  %v251 = vld [vmem:[%s1 + $0x268] sm:$0xff]
  %v252 = vld [vmem:[%s1 + $0x270] sm:$0xff]
  %v253 = vld [vmem:[%s1 + $0x278] sm:$0xff]
  %v254 = vld [vmem:[%s1 + $0x280] sm:$0xff]
  %v255 = vld [vmem:[%s1 + $0x288] sm:$0xff]
  %v256 = vld [vmem:[%s1 + $0x290] sm:$0xff]
  %v257 = vld [vmem:[%s1 + $0x298] sm:$0xff]
  %v258 = vld [vmem:[%s1 + $0x2a0] sm:$0xff]
  %v259 = vld [vmem:[%s1 + $0x2a8] sm:$0xff]
  %v260 = vld [vmem:[%s1 + $0x2b0] sm:$0xff]
  %v261 = vld [vmem:[%s1 + $0x2b8] sm:$0xff]
  %v262 = vld [vmem:[%s1 + $0x2c0] sm:$0xff]
  %v263 = vld [vmem:[%s1 + $0x2c8] sm:$0xff]
  %v264 = vld [vmem:[%s1 + $0x2d0] sm:$0xff]
  %v265 = vld [vmem:[%s1 + $0x2d8] sm:$0xff]
  %v266 = vld [vmem:[%s1 + $0x2e0] sm:$0xff]
  %v267 = vld [vmem:[%s1 + $0x2e8] sm:$0xff]
  %v268 = vld [vmem:[%s1 + $0x2f0] sm:$0xff]
  %v269 = vld [vmem:[%s1 + $0x2f8] sm:$0xff]
  %v270 = vld [vmem:[%s1 + $0x300] sm:$0xff]
  %v271 = vld [vmem:[%s1 + $0x308] sm:$0xff]
  %v272 = vld [vmem:[%s1 + $0x310] sm:$0xff]
  %v273 = vld [vmem:[%s1 + $0x318] sm:$0xff]
  %v274 = vld [vmem:[%s1 + $0x320] sm:$0xff]
  %v275 = vld [vmem:[%s1 + $0x328] sm:$0xff]
  %v276 = vld [vmem:[%s1 + $0x330] sm:$0xff]
  %v277 = vld [vmem:[%s1 + $0x338] sm:$0xff]
  %v278 = vld [vmem:[%s1 + $0x340] sm:$0xff]
  %v279 = vld [vmem:[%s1 + $0x348] sm:$0xff]
  %v280 = vld [vmem:[%s1 + $0x350] sm:$0xff]
  %v281 = vld [vmem:[%s1 + $0x358] sm:$0xff]
  %v282 = vld [vmem:[%s1 + $0x360] sm:$0xff]
  %v283 = vld [vmem:[%s1 + $0x368] sm:$0xff]
  %v284 = vld [vmem:[%s1 + $0x370] sm:$0xff]
  %v285 = vld [vmem:[%s1 + $0x378] sm:$0xff]
  %v286 = vld [vmem:[%s1 + $0x380] sm:$0xff]
  %v287 = vld [vmem:[%s1 + $0x388] sm:$0xff]
  %v288 = vld [vmem:[%s1 + $0x390] sm:$0xff]
  %v289 = vld [vmem:[%s1 + $0x398] sm:$0xff]
  %v290 = vld [vmem:[%s1 + $0x3a0] sm:$0xff]
  %v291 = vld [vmem:[%s1 + $0x3a8] sm:$0xff]
  %v292 = vld [vmem:[%s1 + $0x3b0] sm:$0xff]
  %v293 = vld [vmem:[%s1 + $0x3b8] sm:$0xff]
  %v294 = vld [vmem:[%s1 + $0x3c0] sm:$0xff]
  %v295 = vld [vmem:[%s1 + $0x3c8] sm:$0xff]
  %v296 = vld [vmem:[%s1 + $0x3d0] sm:$0xff]
  %v297 = vld [vmem:[%s1 + $0x3d8] sm:$0xff]
  %v298 = vld [vmem:[%s1 + $0x3e0] sm:$0xff]
  %v299 = vld [vmem:[%s1 + $0x3e8] sm:$0xff]
  %v300 = vld [vmem:[%s1 + $0x3f0] sm:$0xff]
  %v301 = vld [vmem:[%s1 + $0x3f8] sm:$0xff]
  %v302 = vld [vmem:[%s1 + $0x400] sm:$0xff]
  %v303 = vld [vmem:[%s1 + $0x408] sm:$0xff]
  %v304 = vld [vmem:[%s1 + $0x410] sm:$0xff]
  %v305 = vld [vmem:[%s1 + $0x418] sm:$0xff]
  %v306 = vld [vmem:[%s1 + $0x420] sm:$0xff]
  %v307 = vld [vmem:[%s1 + $0x428] sm:$0xff]
  %v308 = vld [vmem:[%s1 + $0x430] sm:$0xff]
  %v309 = vld [vmem:[%s1 + $0x438] sm:$0xff]
  %v310 = vld [vmem:[%s1 + $0x440] sm:$0xff]
  %v311 = vld [vmem:[%s1 + $0x448] sm:$0xff]
  %v312 = vld [vmem:[%s1 + $0x450] sm:$0xff]
  %v313 = vld [vmem:[%s1 + $0x458] sm:$0xff]
  %v314 = vld [vmem:[%s1 + $0x460] sm:$0xff]
  %v315 = vld [vmem:[%s1 + $0x468] sm:$0xff]
  %v316 = vld [vmem:[%s1 + $0x470] sm:$0xff]
  %v317 = vld [vmem:[%s1 + $0x478] sm:$0xff]
  %v318 = vld [vmem:[%s1 + $0x480] sm:$0xff]
  %v319 = vld [vmem:[%s1 + $0x488] sm:$0xff]
  %v320 = vld [vmem:[%s1 + $0x490] sm:$0xff]
  %v321 = vld [vmem:[%s1 + $0x498] sm:$0xff]
  %v322 = vld [vmem:[%s1 + $0x4a0] sm:$0xff]
  %v323 = vld [vmem:[%s1 + $0x4a8] sm:$0xff]
  %v324 = vld [vmem:[%s1 + $0x4b0] sm:$0xff]
  %v325 = vld [vmem:[%s1 + $0x4b8] sm:$0xff]
  %v326 = vld [vmem:[%s1 + $0x4c0] sm:$0xff]
  %v327 = vld [vmem:[%s1 + $0x4c8] sm:$0xff]
  %v328 = vld [vmem:[%s1 + $0x4d0] sm:$0xff]
  %v329 = vld [vmem:[%s1 + $0x4d8] sm:$0xff]
  %v330 = vld [vmem:[%s1 + $0x4e0] sm:$0xff]
  %v331 = vld [vmem:[%s1 + $0x4e8] sm:$0xff]
  %v332 = vld [vmem:[%s1 + $0x4f0] sm:$0xff]
  %v333 = vld [vmem:[%s1 + $0x4f8] sm:$0xff]
  %v334 = vld [vmem:[%s1 + $0x500] sm:$0xff]
  %v335 = vld [vmem:[%s1 + $0x508] sm:$0xff]
  %v336 = vld [vmem:[%s1 + $0x510] sm:$0xff]
  %v337 = vld [vmem:[%s1 + $0x518] sm:$0xff]
  %v338 = vld [vmem:[%s1 + $0x520] sm:$0xff]
  %v339 = vld [vmem:[%s1 + $0x528] sm:$0xff]
  %v340 = vld [vmem:[%s1 + $0x530] sm:$0xff]
  %v341 = vld [vmem:[%s1 + $0x538] sm:$0xff]
  %v342 = vld [vmem:[%s1 + $0x540] sm:$0xff]
  %v343 = vld [vmem:[%s1 + $0x548] sm:$0xff]
  %v344 = vld [vmem:[%s1 + $0x550] sm:$0xff]
  %v345 = vld [vmem:[%s1 + $0x558] sm:$0xff]
  %v346 = vld [vmem:[%s1 + $0x560] sm:$0xff]
  %v347 = vld [vmem:[%s1 + $0x568] sm:$0xff]
  %v348 = vld [vmem:[%s1 + $0x570] sm:$0xff]
  %v349 = vld [vmem:[%s1 + $0x578] sm:$0xff]
  %v350 = vld [vmem:[%s1 + $0x580] sm:$0xff]
  %v351 = vld [vmem:[%s1 + $0x588] sm:$0xff]
  %v352 = vld [vmem:[%s1 + $0x590] sm:$0xff]
  %v353 = vld [vmem:[%s1 + $0x598] sm:$0xff]
  %v354 = vld [vmem:[%s1 + $0x5a0] sm:$0xff]
  %v355 = vld [vmem:[%s1 + $0x5a8] sm:$0xff]
  %v356 = vld [vmem:[%s1 + $0x5b0] sm:$0xff]
  %v357 = vld [vmem:[%s1 + $0x5b8] sm:$0xff]
  %v358 = vld [vmem:[%s1 + $0x5c0] sm:$0xff]
  %v359 = vld [vmem:[%s1 + $0x5c8] sm:$0xff]
  %v360 = vld [vmem:[%s1 + $0x5d0] sm:$0xff]
  %v361 = vld [vmem:[%s1 + $0x5d8] sm:$0xff]
  %v362 = vld [vmem:[%s1 + $0x5e0] sm:$0xff]
  %v363 = vld [vmem:[%s1 + $0x5e8] sm:$0xff]
  %v364 = vld [vmem:[%s1 + $0x5f0] sm:$0xff]
  %v365 = vld [vmem:[%s1 + $0x5f8] sm:$0xff]
  %v366 = vld [vmem:[%s2] sm:$0x7]
  %v368 = vlaneseq
  %v369 = vshrl.u32 %v368, 7
  %v370 = vsub.s32 0, %v369
  %v371 = vrot.slane %v366, %v370
  %v372 = vlaneseq
  %v373 = vshrl.u32 %v372, 7
  %v374 = vsub.s32 1, %v373
  %v375 = vrot.slane %v366, %v374
  %v376 = vlaneseq
  %v377 = vshrl.u32 %v376, 7
  %v378 = vsub.s32 2, %v377
  %v379 = vrot.slane %v366, %v378
  %383 = vmatprep.subr.mxu0 %v175
  %384 = vmatpush1.msra.mxu0 %v174
  %385 = vmatprep.subr.mxu0 %v178
  %386 = vmatpush1.msra.mxu0 %v177
  %387 = vmatprep.subr.mxu0 %v181
  %388 = vmatpush1.msra.mxu0 %v180
  %389 = vmatprep.subr.mxu0 %v184
  %390 = vmatpush1.msra.mxu0 %v183
  %391 = vmatprep.subr.mxu0 %v187
  %392 = vmatpush1.msra.mxu0 %v186
  %393 = vmatprep.subr.mxu0 %v190
  %394 = vmatpush1.msra.mxu0 %v189
  %395 = vmatprep.subr.mxu0 %v193
  %396 = vmatpush1.msra.mxu0 %v192
  %397 = vmatprep.subr.mxu0 %v196
  %398 = vmatpush1.msra.mxu0 %v195
  %399 = vmatprep.subr.mxu0 %v199
  %400 = vmatpush1.msra.mxu0 %v198
  %401 = vmatprep.subr.mxu0 %v202
  %402 = vmatpush1.msra.mxu0 %v201
  %403 = vmatprep.subr.mxu0 %v205
  %404 = vmatpush1.msra.mxu0 %v204
  %405 = vmatprep.subr.mxu0 %v208
  %406 = vmatpush1.msra.mxu0 %v207
  %407 = vmatprep.subr.mxu0 %v211
  %408 = vmatpush1.msra.mxu0 %v210
  %409 = vmatprep.subr.mxu0 %v214
  %410 = vmatpush1.msra.mxu0 %v213
  %411 = vmatprep.subr.mxu0 %v217
  %412 = vmatpush1.msra.mxu0 %v216
  %413 = vmatprep.subr.mxu0 %v220
  %414 = vmatpush1.msra.mxu0 %v219
  %415 = vmatprep.subr.mxu0 %v223
  %416 = vmatpush1.msra.mxu0 %v222
  %417 = vmatprep.subr.mxu0 %v226
  %418 = vmatpush1.msra.mxu0 %v225
  %419 = vmatprep.subr.mxu0 %v229
  %420 = vmatpush1.msra.mxu0 %v228
  %421 = vmatprep.subr.mxu0 %v232
  %422 = vmatpush1.msra.mxu0 %v231
  %423 = vmatprep.subr.mxu0 %v235
  %424 = vmatpush1.msra.mxu0 %v234
  %425 = vmatprep.subr.mxu0 %v238
  %426 = vmatpush1.msra.mxu0 %v237
  %427 = vmatprep.subr.mxu0 %v241
  %428 = vmatpush1.msra.mxu0 %v240
  %429 = vmatprep.subr.mxu0 %v244
  %430 = vmatpush1.msra.mxu0 %v243
  %431 = vmatprep.subr.mxu0 %v247
  %432 = vmatpush1.msra.mxu0 %v246
  %433 = vmatprep.subr.mxu0 %v250
  %434 = vmatpush1.msra.mxu0 %v249
  %435 = vmatprep.subr.mxu0 %v253
  %436 = vmatpush1.msra.mxu0 %v252
  %437 = vmatprep.subr.mxu0 %v256
  %438 = vmatpush1.msra.mxu0 %v255
  %439 = vmatprep.subr.mxu0 %v259
  %440 = vmatpush1.msra.mxu0 %v258
  %441 = vmatprep.subr.mxu0 %v262
  %442 = vmatpush1.msra.mxu0 %v261
  %443 = vmatprep.subr.mxu0 %v265
  %444 = vmatpush1.msra.mxu0 %v264
  %445 = vmatprep.subr.mxu0 %v268
  %446 = vmatpush1.msra.mxu0 %v267
  %447 = vmatprep.mubr.f32.mxu0 %v15
  %448 = vmatmul.mubr.f32.gmra.mrb[0].mxu0 %v14
  %v449 = vpop.f32.mrb[0].mxu0
  %v450 = vadd.f32 %v371, %v449
  %v451 = vpop.f32.mrb[0].mxu0
  %v452 = vadd.f32 %v375, %v451
  %453 = vmatprep.mubr.f32.mxu0 %v19
  %454 = vmatmul.mubr.f32.gmra.mrb[0].mxu0 %v18
  %v455 = vpop.f32.mrb[0].mxu0
  %v456 = vadd.f32 %v371, %v455
  %v457 = vpop.f32.mrb[0].mxu0
  %v458 = vadd.f32 %v375, %v457
  %459 = vmatprep.mubr.f32.mxu0 %v23
  %460 = vmatmul.mubr.f32.gmra.mrb[0].mxu0 %v22
  %v461 = vpop.f32.mrb[0].mxu0
  %v462 = vadd.f32 %v371, %v461
  %v463 = vpop.f32.mrb[0].mxu0
  %v464 = vadd.f32 %v375, %v463
  %465 = vmatprep.mubr.f32.mxu0 %v27
  %466 = vmatmul.mubr.f32.gmra.mrb[0].mxu0 %v26
  %v467 = vpop.f32.mrb[0].mxu0
  %v468 = vadd.f32 %v371, %v467
  %v469 = vpop.f32.mrb[0].mxu0
  %v470 = vadd.f32 %v375, %v469
  %471 = vmatprep.mubr.f32.mxu0 %v31
  %472 = vmatmul.mubr.f32.gmra.mrb[0].mxu0 %v30
  %v473 = vpop.f32.mrb[0].mxu0
  %v474 = vadd.f32 %v371, %v473
  %v475 = vpop.f32.mrb[0].mxu0
  %v476 = vadd.f32 %v375, %v475
  %477 = vmatprep.mubr.f32.mxu0 %v35
  %478 = vmatmul.mubr.f32.gmra.mrb[0].mxu0 %v34
  %v479 = vpop.f32.mrb[0].mxu0
  %v480 = vadd.f32 %v371, %v479
  %v481 = vpop.f32.mrb[0].mxu0
  %v482 = vadd.f32 %v375, %v481
  %483 = vmatprep.mubr.f32.mxu0 %v39
  %484 = vmatmul.mubr.f32.gmra.mrb[0].mxu0 %v38
  %v485 = vpop.f32.mrb[0].mxu0
  %v486 = vadd.f32 %v371, %v485
  %v487 = vpop.f32.mrb[0].mxu0
  %v488 = vadd.f32 %v375, %v487
  %489 = vmatprep.mubr.f32.mxu0 %v43
  %490 = vmatmul.mubr.f32.gmra.mrb[0].mxu0 %v42
  %v491 = vpop.f32.mrb[0].mxu0
  %v492 = vadd.f32 %v371, %v491
  %v493 = vpop.f32.mrb[0].mxu0
  %v494 = vadd.f32 %v375, %v493
  %495 = vmatprep.mubr.f32.mxu0 %v47
  %496 = vmatmul.mubr.f32.gmra.mrb[0].mxu0 %v46
  %v497 = vpop.f32.mrb[0].mxu0
  %v498 = vadd.f32 %v371, %v497
  %v499 = vpop.f32.mrb[0].mxu0
  %v500 = vadd.f32 %v375, %v499
  %501 = vmatprep.mubr.f32.mxu0 %v51
  %502 = vmatmul.mubr.f32.gmra.mrb[0].mxu0 %v50
  %v503 = vpop.f32.mrb[0].mxu0
  %v504 = vadd.f32 %v371, %v503
  %v505 = vpop.f32.mrb[0].mxu0
  %v506 = vadd.f32 %v375, %v505
  %507 = vmatprep.mubr.f32.mxu0 %v55
  %508 = vmatmul.mubr.f32.gmra.mrb[0].mxu0 %v54
  %v509 = vpop.f32.mrb[0].mxu0
  %v510 = vadd.f32 %v371, %v509
  %v511 = vpop.f32.mrb[0].mxu0
  %v512 = vadd.f32 %v375, %v511
  %513 = vmatprep.mubr.f32.mxu0 %v59
  %514 = vmatmul.mubr.f32.gmra.mrb[0].mxu0 %v58
  %v515 = vpop.f32.mrb[0].mxu0
  %v516 = vadd.f32 %v371, %v515
  %v517 = vpop.f32.mrb[0].mxu0
  %v518 = vadd.f32 %v375, %v517
  %519 = vmatprep.mubr.f32.mxu0 %v63
  %520 = vmatmul.mubr.f32.gmra.mrb[0].mxu0 %v62
  %v521 = vpop.f32.mrb[0].mxu0
  %v522 = vadd.f32 %v371, %v521
  %v523 = vpop.f32.mrb[0].mxu0
  %v524 = vadd.f32 %v375, %v523
  %525 = vmatprep.mubr.f32.mxu0 %v67
  %526 = vmatmul.mubr.f32.gmra.mrb[0].mxu0 %v66
  %v527 = vpop.f32.mrb[0].mxu0
  %v528 = vadd.f32 %v371, %v527
  %v529 = vpop.f32.mrb[0].mxu0
  %v530 = vadd.f32 %v375, %v529
  %531 = vmatprep.mubr.f32.mxu0 %v71
  %532 = vmatmul.mubr.f32.gmra.mrb[0].mxu0 %v70
  %v533 = vpop.f32.mrb[0].mxu0
  %v534 = vadd.f32 %v371, %v533
  %v535 = vpop.f32.mrb[0].mxu0
  %v536 = vadd.f32 %v375, %v535
  %537 = vmatprep.mubr.f32.mxu0 %v75
  %538 = vmatmul.mubr.f32.gmra.mrb[0].mxu0 %v74
  %v539 = vpop.f32.mrb[0].mxu0
  %v540 = vadd.f32 %v371, %v539
  %v541 = vpop.f32.mrb[0].mxu0
  %v542 = vadd.f32 %v375, %v541
  %543 = vmatprep.mubr.f32.mxu0 %v79
  %544 = vmatmul.mubr.f32.gmra.mrb[0].mxu0 %v78
  %v545 = vpop.f32.mrb[0].mxu0
  %v546 = vadd.f32 %v371, %v545
  %v547 = vpop.f32.mrb[0].mxu0
  %v548 = vadd.f32 %v375, %v547
  %549 = vmatprep.mubr.f32.mxu0 %v83
  %550 = vmatmul.mubr.f32.gmra.mrb[0].mxu0 %v82
  %v551 = vpop.f32.mrb[0].mxu0
  %v552 = vadd.f32 %v371, %v551
  %v553 = vpop.f32.mrb[0].mxu0
  %v554 = vadd.f32 %v375, %v553
  %555 = vmatprep.mubr.f32.mxu0 %v87
  %556 = vmatmul.mubr.f32.gmra.mrb[0].mxu0 %v86
  %v557 = vpop.f32.mrb[0].mxu0
  %v558 = vadd.f32 %v371, %v557
  %v559 = vpop.f32.mrb[0].mxu0
  %v560 = vadd.f32 %v375, %v559
  %561 = vmatprep.mubr.f32.mxu0 %v91
  %562 = vmatmul.mubr.f32.gmra.mrb[0].mxu0 %v90
  %v563 = vpop.f32.mrb[0].mxu0
  %v564 = vadd.f32 %v371, %v563
  %v565 = vpop.f32.mrb[0].mxu0
  %v566 = vadd.f32 %v375, %v565
  %567 = vmatprep.mubr.f32.mxu0 %v95
  %568 = vmatmul.mubr.f32.gmra.mrb[0].mxu0 %v94
  %v569 = vpop.f32.mrb[0].mxu0
  %v570 = vadd.f32 %v371, %v569
  %v571 = vpop.f32.mrb[0].mxu0
  %v572 = vadd.f32 %v375, %v571
  %573 = vmatprep.mubr.f32.mxu0 %v99
  %574 = vmatmul.mubr.f32.gmra.mrb[0].mxu0 %v98
  %v575 = vpop.f32.mrb[0].mxu0
  %v576 = vadd.f32 %v371, %v575
  %v577 = vpop.f32.mrb[0].mxu0
  %v578 = vadd.f32 %v375, %v577
  %579 = vmatprep.mubr.f32.mxu0 %v103
  %580 = vmatmul.mubr.f32.gmra.mrb[0].mxu0 %v102
  %v581 = vpop.f32.mrb[0].mxu0
  %v582 = vadd.f32 %v371, %v581
  %v583 = vpop.f32.mrb[0].mxu0
  %v584 = vadd.f32 %v375, %v583
  %585 = vmatprep.mubr.f32.mxu0 %v107
  %586 = vmatmul.mubr.f32.gmra.mrb[0].mxu0 %v106
  %v587 = vpop.f32.mrb[0].mxu0
  %v588 = vadd.f32 %v371, %v587
  %v589 = vpop.f32.mrb[0].mxu0
  %v590 = vadd.f32 %v375, %v589
  %591 = vmatprep.mubr.f32.mxu0 %v111
  %592 = vmatmul.mubr.f32.gmra.mrb[0].mxu0 %v110
  %v593 = vpop.f32.mrb[0].mxu0
  %v594 = vadd.f32 %v371, %v593
  %v595 = vpop.f32.mrb[0].mxu0
  %v596 = vadd.f32 %v375, %v595
  %597 = vmatprep.mubr.f32.mxu0 %v115
  %598 = vmatmul.mubr.f32.gmra.mrb[0].mxu0 %v114
  %v599 = vpop.f32.mrb[0].mxu0
  %v600 = vadd.f32 %v371, %v599
  %v601 = vpop.f32.mrb[0].mxu0
  %v602 = vadd.f32 %v375, %v601
  %603 = vmatprep.mubr.f32.mxu0 %v119
  %604 = vmatmul.mubr.f32.gmra.mrb[0].mxu0 %v118
  %v605 = vpop.f32.mrb[0].mxu0
  %v606 = vadd.f32 %v371, %v605
  %v607 = vpop.f32.mrb[0].mxu0
  %v608 = vadd.f32 %v375, %v607
  %609 = vmatprep.mubr.f32.mxu0 %v123
  %610 = vmatmul.mubr.f32.gmra.mrb[0].mxu0 %v122
  %v611 = vpop.f32.mrb[0].mxu0
  %v612 = vadd.f32 %v371, %v611
  %v613 = vpop.f32.mrb[0].mxu0
  %v614 = vadd.f32 %v375, %v613
  %615 = vmatprep.mubr.f32.mxu0 %v127
  %616 = vmatmul.mubr.f32.gmra.mrb[0].mxu0 %v126
  %v617 = vpop.f32.mrb[0].mxu0
  %v618 = vadd.f32 %v371, %v617
  %v619 = vpop.f32.mrb[0].mxu0
  %v620 = vadd.f32 %v375, %v619
  %621 = vmatprep.mubr.f32.mxu0 %v131
  %622 = vmatmul.mubr.f32.gmra.mrb[0].mxu0 %v130
  %v623 = vpop.f32.mrb[0].mxu0
  %v624 = vadd.f32 %v371, %v623
  %v625 = vpop.f32.mrb[0].mxu0
  %v626 = vadd.f32 %v375, %v625
  %627 = vmatprep.mubr.f32.mxu0 %v135
  %628 = vmatmul.mubr.f32.gmra.mrb[0].mxu0 %v134
  %v629 = vpop.f32.mrb[0].mxu0
  %v630 = vadd.f32 %v371, %v629
  %v631 = vpop.f32.mrb[0].mxu0
  %v632 = vadd.f32 %v375, %v631
  %633 = vmatprep.mubr.f32.mxu0 %v139
  %634 = vmatmul.mubr.f32.gmra.mrb[0].mxu0 %v138
  %v635 = vpop.f32.mrb[0].mxu0
  %v636 = vadd.f32 %v371, %v635
  %v637 = vpop.f32.mrb[0].mxu0
  %v638 = vadd.f32 %v375, %v637
  %639 = vmatprep.mubr.f32.mxu0 %v143
  %640 = vmatmul.mubr.f32.gmra.mrb[0].mxu0 %v142
  %v641 = vpop.f32.mrb[0].mxu0
  %v642 = vadd.f32 %v371, %v641
  %v643 = vpop.f32.mrb[0].mxu0
  %v644 = vadd.f32 %v375, %v643
  %645 = vmatprep.mubr.f32.mxu0 %v147
  %646 = vmatmul.mubr.f32.gmra.mrb[0].mxu0 %v146
  %v647 = vpop.f32.mrb[0].mxu0
  %v648 = vadd.f32 %v371, %v647
  %v649 = vpop.f32.mrb[0].mxu0
  %v650 = vadd.f32 %v375, %v649
  %651 = vmatprep.mubr.f32.mxu0 %v151
  %652 = vmatmul.mubr.f32.gmra.mrb[0].mxu0 %v150
  %v653 = vpop.f32.mrb[0].mxu0
  %v654 = vadd.f32 %v371, %v653
  %v655 = vpop.f32.mrb[0].mxu0
  %v656 = vadd.f32 %v375, %v655
  %657 = vmatprep.mubr.f32.mxu0 %v155
  %658 = vmatmul.mubr.f32.gmra.mrb[0].mxu0 %v154
  %v659 = vpop.f32.mrb[0].mxu0
  %v660 = vadd.f32 %v371, %v659
  %v661 = vpop.f32.mrb[0].mxu0
  %v662 = vadd.f32 %v375, %v661
  %663 = vmatprep.mubr.f32.mxu0 %v159
  %664 = vmatmul.mubr.f32.gmra.mrb[0].mxu0 %v158
  %v665 = vpop.f32.mrb[0].mxu0
  %v666 = vadd.f32 %v371, %v665
  %v667 = vpop.f32.mrb[0].mxu0
  %v668 = vadd.f32 %v375, %v667
  %669 = vmatprep.mubr.f32.mxu0 %v163
  %670 = vmatmul.mubr.f32.gmra.mrb[0].mxu0 %v162
  %v671 = vpop.f32.mrb[0].mxu0
  %v672 = vadd.f32 %v371, %v671
  %v673 = vpop.f32.mrb[0].mxu0
  %v674 = vadd.f32 %v375, %v673
  %675 = vmatprep.mubr.f32.mxu0 %v167
  %676 = vmatmul.mubr.f32.gmra.mrb[0].mxu0 %v166
  %v677 = vpop.f32.mrb[0].mxu0
  %v678 = vadd.f32 %v371, %v677
  %v679 = vpop.f32.mrb[0].mxu0
  %v680 = vadd.f32 %v375, %v679
  %681 = vmatprep.mubr.f32.mxu0 %v171
  %682 = vmatmul.mubr.f32.gmra.mrb[0].mxu0 %v170
  %v683 = vpop.f32.mrb[0].mxu0
  %v684 = vadd.f32 %v371, %v683
  %v685 = vpop.f32.mrb[0].mxu0
  %v686 = vadd.f32 %v375, %v685
  %687 = vdwg.mxu0
  %688 = vmatprep.subr.mxu0 %v271
  %689 = vmatpush1.msra.mxu0 %v270
  %690 = vmatprep.subr.mxu0 %v274
  %691 = vmatpush1.msra.mxu0 %v273
  %692 = vmatprep.subr.mxu0 %v277
  %693 = vmatpush1.msra.mxu0 %v276
  %694 = vmatprep.subr.mxu0 %v280
  %695 = vmatpush1.msra.mxu0 %v279
  %696 = vmatprep.subr.mxu0 %v283
  %697 = vmatpush1.msra.mxu0 %v282
  %698 = vmatprep.subr.mxu0 %v286
  %699 = vmatpush1.msra.mxu0 %v285
  %700 = vmatprep.subr.mxu0 %v289
  %701 = vmatpush1.msra.mxu0 %v288
  %702 = vmatprep.subr.mxu0 %v292
  %703 = vmatpush1.msra.mxu0 %v291
  %704 = vmatprep.subr.mxu0 %v295
  %705 = vmatpush1.msra.mxu0 %v294
  %706 = vmatprep.subr.mxu0 %v298
  %707 = vmatpush1.msra.mxu0 %v297
  %708 = vmatprep.subr.mxu0 %v301
  %709 = vmatpush1.msra.mxu0 %v300
  %710 = vmatprep.subr.mxu0 %v304
  %711 = vmatpush1.msra.mxu0 %v303
  %712 = vmatprep.subr.mxu0 %v307
  %713 = vmatpush1.msra.mxu0 %v306
  %714 = vmatprep.subr.mxu0 %v310
  %715 = vmatpush1.msra.mxu0 %v309
  %716 = vmatprep.subr.mxu0 %v313
  %717 = vmatpush1.msra.mxu0 %v312
  %718 = vmatprep.subr.mxu0 %v316
  %719 = vmatpush1.msra.mxu0 %v315
  %720 = vmatprep.subr.mxu0 %v319
  %721 = vmatpush1.msra.mxu0 %v318
  %722 = vmatprep.subr.mxu0 %v322
  %723 = vmatpush1.msra.mxu0 %v321
  %724 = vmatprep.subr.mxu0 %v325
  %725 = vmatpush1.msra.mxu0 %v324
  %726 = vmatprep.subr.mxu0 %v328
  %727 = vmatpush1.msra.mxu0 %v327
  %728 = vmatprep.subr.mxu0 %v331
  %729 = vmatpush1.msra.mxu0 %v330
  %730 = vmatprep.subr.mxu0 %v334
  %731 = vmatpush1.msra.mxu0 %v333
  %732 = vmatprep.subr.mxu0 %v337
  %733 = vmatpush1.msra.mxu0 %v336
  %734 = vmatprep.subr.mxu0 %v340
  %735 = vmatpush1.msra.mxu0 %v339
  %736 = vmatprep.subr.mxu0 %v343
  %737 = vmatpush1.msra.mxu0 %v342
  %738 = vmatprep.subr.mxu0 %v346
  %739 = vmatpush1.msra.mxu0 %v345
  %740 = vmatprep.subr.mxu0 %v349
  %741 = vmatpush1.msra.mxu0 %v348
  %742 = vmatprep.subr.mxu0 %v352
  %743 = vmatpush1.msra.mxu0 %v351
  %744 = vmatprep.subr.mxu0 %v355
  %745 = vmatpush1.msra.mxu0 %v354
  %746 = vmatprep.subr.mxu0 %v358
  %747 = vmatpush1.msra.mxu0 %v357
  %748 = vmatprep.subr.mxu0 %v361
  %749 = vmatpush1.msra.mxu0 %v360
  %750 = vmatprep.subr.mxu0 %v364
  %751 = vmatpush1.msra.mxu0 %v363
  %752 = vmatprep.mubr.f32.mxu0 %v17
  %753 = vmatmul.mubr.f32.gmra.mrb[0].mxu0 %v16
  %v754 = vpop.f32.mrb[0].mxu0
  %v755 = vadd.f32 %v450, %v754
  %v756 = vpop.f32.mrb[0].mxu0
  %v757 = vadd.f32 %v452, %v756
  %758 = vmatprep.mubr.f32.mxu0 %v21
  %759 = vmatmul.mubr.f32.gmra.mrb[0].mxu0 %v20
  %v760 = vpop.f32.mrb[0].mxu0
  %v761 = vadd.f32 %v456, %v760
  %v762 = vpop.f32.mrb[0].mxu0
  %v763 = vadd.f32 %v458, %v762
  %764 = vmatprep.mubr.f32.mxu0 %v25
  %765 = vmatmul.mubr.f32.gmra.mrb[0].mxu0 %v24
  %v766 = vpop.f32.mrb[0].mxu0
  %v767 = vadd.f32 %v462, %v766
  %v768 = vpop.f32.mrb[0].mxu0
  %v769 = vadd.f32 %v464, %v768
  %770 = vmatprep.mubr.f32.mxu0 %v29
  %771 = vmatmul.mubr.f32.gmra.mrb[0].mxu0 %v28
  %v772 = vpop.f32.mrb[0].mxu0
  %v773 = vadd.f32 %v468, %v772
  %v774 = vpop.f32.mrb[0].mxu0
  %v775 = vadd.f32 %v470, %v774
  %776 = vmatprep.mubr.f32.mxu0 %v33
  %777 = vmatmul.mubr.f32.gmra.mrb[0].mxu0 %v32
  %v778 = vpop.f32.mrb[0].mxu0
  %v779 = vadd.f32 %v474, %v778
  %v780 = vpop.f32.mrb[0].mxu0
  %v781 = vadd.f32 %v476, %v780
  %782 = vmatprep.mubr.f32.mxu0 %v37
  %783 = vmatmul.mubr.f32.gmra.mrb[0].mxu0 %v36
  %v784 = vpop.f32.mrb[0].mxu0
  %v785 = vadd.f32 %v480, %v784
  %v786 = vpop.f32.mrb[0].mxu0
  %v787 = vadd.f32 %v482, %v786
  %788 = vmatprep.mubr.f32.mxu0 %v41
  %789 = vmatmul.mubr.f32.gmra.mrb[0].mxu0 %v40
  %v790 = vpop.f32.mrb[0].mxu0
  %v791 = vadd.f32 %v486, %v790
  %v792 = vpop.f32.mrb[0].mxu0
  %v793 = vadd.f32 %v488, %v792
  %794 = vmatprep.mubr.f32.mxu0 %v45
  %795 = vmatmul.mubr.f32.gmra.mrb[0].mxu0 %v44
  %v796 = vpop.f32.mrb[0].mxu0
  %v797 = vadd.f32 %v492, %v796
  %v798 = vpop.f32.mrb[0].mxu0
  %v799 = vadd.f32 %v494, %v798
  %800 = vmatprep.mubr.f32.mxu0 %v49
  %801 = vmatmul.mubr.f32.gmra.mrb[0].mxu0 %v48
  %v802 = vpop.f32.mrb[0].mxu0
  %v803 = vadd.f32 %v498, %v802
  %v804 = vpop.f32.mrb[0].mxu0
  %v805 = vadd.f32 %v500, %v804
  %806 = vmatprep.mubr.f32.mxu0 %v53
  %807 = vmatmul.mubr.f32.gmra.mrb[0].mxu0 %v52
  %v808 = vpop.f32.mrb[0].mxu0
  %v809 = vadd.f32 %v504, %v808
  %v810 = vpop.f32.mrb[0].mxu0
  %v811 = vadd.f32 %v506, %v810
  %812 = vmatprep.mubr.f32.mxu0 %v57
  %813 = vmatmul.mubr.f32.gmra.mrb[0].mxu0 %v56
  %v814 = vpop.f32.mrb[0].mxu0
  %v815 = vadd.f32 %v510, %v814
  %v816 = vpop.f32.mrb[0].mxu0
  %v817 = vadd.f32 %v512, %v816
  %818 = vmatprep.mubr.f32.mxu0 %v61
  %819 = vmatmul.mubr.f32.gmra.mrb[0].mxu0 %v60
  %v820 = vpop.f32.mrb[0].mxu0
  %v821 = vadd.f32 %v516, %v820
  %v822 = vpop.f32.mrb[0].mxu0
  %v823 = vadd.f32 %v518, %v822
  %824 = vmatprep.mubr.f32.mxu0 %v65
  %825 = vmatmul.mubr.f32.gmra.mrb[0].mxu0 %v64
  %v826 = vpop.f32.mrb[0].mxu0
  %v827 = vadd.f32 %v522, %v826
  %v828 = vpop.f32.mrb[0].mxu0
  %v829 = vadd.f32 %v524, %v828
  %830 = vmatprep.mubr.f32.mxu0 %v69
  %831 = vmatmul.mubr.f32.gmra.mrb[0].mxu0 %v68
  %v832 = vpop.f32.mrb[0].mxu0
  %v833 = vadd.f32 %v528, %v832
  %v834 = vpop.f32.mrb[0].mxu0
  %v835 = vadd.f32 %v530, %v834
  %836 = vmatprep.mubr.f32.mxu0 %v73
  %837 = vmatmul.mubr.f32.gmra.mrb[0].mxu0 %v72
  %v838 = vpop.f32.mrb[0].mxu0
  %v839 = vadd.f32 %v534, %v838
  %v840 = vpop.f32.mrb[0].mxu0
  %v841 = vadd.f32 %v536, %v840
  %842 = vmatprep.mubr.f32.mxu0 %v77
  %843 = vmatmul.mubr.f32.gmra.mrb[0].mxu0 %v76
  %v844 = vpop.f32.mrb[0].mxu0
  %v845 = vadd.f32 %v540, %v844
  %v846 = vpop.f32.mrb[0].mxu0
  %v847 = vadd.f32 %v542, %v846
  %848 = vmatprep.mubr.f32.mxu0 %v81
  %849 = vmatmul.mubr.f32.gmra.mrb[0].mxu0 %v80
  %v850 = vpop.f32.mrb[0].mxu0
  %v851 = vadd.f32 %v546, %v850
  %v852 = vpop.f32.mrb[0].mxu0
  %v853 = vadd.f32 %v548, %v852
  %854 = vmatprep.mubr.f32.mxu0 %v85
  %855 = vmatmul.mubr.f32.gmra.mrb[0].mxu0 %v84
  %v856 = vpop.f32.mrb[0].mxu0
  %v857 = vadd.f32 %v552, %v856
  %v858 = vpop.f32.mrb[0].mxu0
  %v859 = vadd.f32 %v554, %v858
  %860 = vmatprep.mubr.f32.mxu0 %v89
  %861 = vmatmul.mubr.f32.gmra.mrb[0].mxu0 %v88
  %v862 = vpop.f32.mrb[0].mxu0
  %v863 = vadd.f32 %v558, %v862
  %v864 = vpop.f32.mrb[0].mxu0
  %v865 = vadd.f32 %v560, %v864
  %866 = vmatprep.mubr.f32.mxu0 %v93
  %867 = vmatmul.mubr.f32.gmra.mrb[0].mxu0 %v92
  %v868 = vpop.f32.mrb[0].mxu0
  %v869 = vadd.f32 %v564, %v868
  %v870 = vpop.f32.mrb[0].mxu0
  %v871 = vadd.f32 %v566, %v870
  %872 = vmatprep.mubr.f32.mxu0 %v97
  %873 = vmatmul.mubr.f32.gmra.mrb[0].mxu0 %v96
  %v874 = vpop.f32.mrb[0].mxu0
  %v875 = vadd.f32 %v570, %v874
  %v876 = vpop.f32.mrb[0].mxu0
  %v877 = vadd.f32 %v572, %v876
  %878 = vmatprep.mubr.f32.mxu0 %v101
  %879 = vmatmul.mubr.f32.gmra.mrb[0].mxu0 %v100
  %v880 = vpop.f32.mrb[0].mxu0
  %v881 = vadd.f32 %v576, %v880
  %v882 = vpop.f32.mrb[0].mxu0
  %v883 = vadd.f32 %v578, %v882
  %884 = vmatprep.mubr.f32.mxu0 %v105
  %885 = vmatmul.mubr.f32.gmra.mrb[0].mxu0 %v104
  %v886 = vpop.f32.mrb[0].mxu0
  %v887 = vadd.f32 %v582, %v886
  %v888 = vpop.f32.mrb[0].mxu0
  %v889 = vadd.f32 %v584, %v888
  %890 = vmatprep.mubr.f32.mxu0 %v109
  %891 = vmatmul.mubr.f32.gmra.mrb[0].mxu0 %v108
  %v892 = vpop.f32.mrb[0].mxu0
  %v893 = vadd.f32 %v588, %v892
  %v894 = vpop.f32.mrb[0].mxu0
  %v895 = vadd.f32 %v590, %v894
  %896 = vmatprep.mubr.f32.mxu0 %v113
  %897 = vmatmul.mubr.f32.gmra.mrb[0].mxu0 %v112
  %v898 = vpop.f32.mrb[0].mxu0
  %v899 = vadd.f32 %v594, %v898
  %v900 = vpop.f32.mrb[0].mxu0
  %v901 = vadd.f32 %v596, %v900
  %902 = vmatprep.mubr.f32.mxu0 %v117
  %903 = vmatmul.mubr.f32.gmra.mrb[0].mxu0 %v116
  %v904 = vpop.f32.mrb[0].mxu0
  %v905 = vadd.f32 %v600, %v904
  %v906 = vpop.f32.mrb[0].mxu0
  %v907 = vadd.f32 %v602, %v906
  %908 = vmatprep.mubr.f32.mxu0 %v121
  %909 = vmatmul.mubr.f32.gmra.mrb[0].mxu0 %v120
  %v910 = vpop.f32.mrb[0].mxu0
  %v911 = vadd.f32 %v606, %v910
  %v912 = vpop.f32.mrb[0].mxu0
  %v913 = vadd.f32 %v608, %v912
  %914 = vmatprep.mubr.f32.mxu0 %v125
  %915 = vmatmul.mubr.f32.gmra.mrb[0].mxu0 %v124
  %v916 = vpop.f32.mrb[0].mxu0
  %v917 = vadd.f32 %v612, %v916
  %v918 = vpop.f32.mrb[0].mxu0
  %v919 = vadd.f32 %v614, %v918
  %920 = vmatprep.mubr.f32.mxu0 %v129
  %921 = vmatmul.mubr.f32.gmra.mrb[0].mxu0 %v128
  %v922 = vpop.f32.mrb[0].mxu0
  %v923 = vadd.f32 %v618, %v922
  %v924 = vpop.f32.mrb[0].mxu0
  %v925 = vadd.f32 %v620, %v924
  %926 = vmatprep.mubr.f32.mxu0 %v133
  %927 = vmatmul.mubr.f32.gmra.mrb[0].mxu0 %v132
  %v928 = vpop.f32.mrb[0].mxu0
  %v929 = vadd.f32 %v624, %v928
  %v930 = vpop.f32.mrb[0].mxu0
  %v931 = vadd.f32 %v626, %v930
  %932 = vmatprep.mubr.f32.mxu0 %v137
  %933 = vmatmul.mubr.f32.gmra.mrb[0].mxu0 %v136
  %v934 = vpop.f32.mrb[0].mxu0
  %v935 = vadd.f32 %v630, %v934
  %v936 = vpop.f32.mrb[0].mxu0
  %v937 = vadd.f32 %v632, %v936
  %938 = vmatprep.mubr.f32.mxu0 %v141
  %939 = vmatmul.mubr.f32.gmra.mrb[0].mxu0 %v140
  %v940 = vpop.f32.mrb[0].mxu0
  %v941 = vadd.f32 %v636, %v940
  %v942 = vpop.f32.mrb[0].mxu0
  %v943 = vadd.f32 %v638, %v942
  %944 = vmatprep.mubr.f32.mxu0 %v145
  %945 = vmatmul.mubr.f32.gmra.mrb[0].mxu0 %v144
  %v946 = vpop.f32.mrb[0].mxu0
  %v947 = vadd.f32 %v642, %v946
  %v948 = vpop.f32.mrb[0].mxu0
  %v949 = vadd.f32 %v644, %v948
  %950 = vmatprep.mubr.f32.mxu0 %v149
  %951 = vmatmul.mubr.f32.gmra.mrb[0].mxu0 %v148
  %v952 = vpop.f32.mrb[0].mxu0
  %v953 = vadd.f32 %v648, %v952
  %v954 = vpop.f32.mrb[0].mxu0
  %v955 = vadd.f32 %v650, %v954
  %956 = vmatprep.mubr.f32.mxu0 %v153
  %957 = vmatmul.mubr.f32.gmra.mrb[0].mxu0 %v152
  %v958 = vpop.f32.mrb[0].mxu0
  %v959 = vadd.f32 %v654, %v958
  %v960 = vpop.f32.mrb[0].mxu0
  %v961 = vadd.f32 %v656, %v960
  %962 = vmatprep.mubr.f32.mxu0 %v157
  %963 = vmatmul.mubr.f32.gmra.mrb[0].mxu0 %v156
  %v964 = vpop.f32.mrb[0].mxu0
  %v965 = vadd.f32 %v660, %v964
  %v966 = vpop.f32.mrb[0].mxu0
  %v967 = vadd.f32 %v662, %v966
  %968 = vmatprep.mubr.f32.mxu0 %v161
  %969 = vmatmul.mubr.f32.gmra.mrb[0].mxu0 %v160
  %v970 = vpop.f32.mrb[0].mxu0
  %v971 = vadd.f32 %v666, %v970
  %v972 = vpop.f32.mrb[0].mxu0
  %v973 = vadd.f32 %v668, %v972
  %974 = vmatprep.mubr.f32.mxu0 %v165
  %975 = vmatmul.mubr.f32.gmra.mrb[0].mxu0 %v164
  %v976 = vpop.f32.mrb[0].mxu0
  %v977 = vadd.f32 %v672, %v976
  %v978 = vpop.f32.mrb[0].mxu0
  %v979 = vadd.f32 %v674, %v978
  %980 = vmatprep.mubr.f32.mxu0 %v169
  %981 = vmatmul.mubr.f32.gmra.mrb[0].mxu0 %v168
  %v982 = vpop.f32.mrb[0].mxu0
  %v983 = vadd.f32 %v678, %v982
  %v984 = vpop.f32.mrb[0].mxu0
  %v985 = vadd.f32 %v680, %v984
  %986 = vmatprep.mubr.f32.mxu0 %v173
  %987 = vmatmul.mubr.f32.gmra.mrb[0].mxu0 %v172
  %v988 = vpop.f32.mrb[0].mxu0
  %v989 = vadd.f32 %v684, %v988
  %v990 = vpop.f32.mrb[0].mxu0
  %v991 = vadd.f32 %v686, %v990
  %992 = vdwg.mxu0
  %993 = vmatprep.subr.mxu0 0.0
  %994 = vmatpush1.msra.mxu0 %v176
  %995 = vmatprep.subr.mxu0 0.0
  %996 = vmatpush1.msra.mxu0 %v179
  %997 = vmatprep.subr.mxu0 0.0
  %998 = vmatpush1.msra.mxu0 %v182
  %999 = vmatprep.subr.mxu0 0.0
  %1000 = vmatpush1.msra.mxu0 %v185
  %1001 = vmatprep.subr.mxu0 0.0
  %1002 = vmatpush1.msra.mxu0 %v188
  %1003 = vmatprep.subr.mxu0 0.0
  %1004 = vmatpush1.msra.mxu0 %v191
  %1005 = vmatprep.subr.mxu0 0.0
  %1006 = vmatpush1.msra.mxu0 %v194
  %1007 = vmatprep.subr.mxu0 0.0
  %1008 = vmatpush1.msra.mxu0 %v197
  %1009 = vmatprep.subr.mxu0 0.0
  %1010 = vmatpush1.msra.mxu0 %v200
  %1011 = vmatprep.subr.mxu0 0.0
  %1012 = vmatpush1.msra.mxu0 %v203
  %1013 = vmatprep.subr.mxu0 0.0
  %1014 = vmatpush1.msra.mxu0 %v206
  %1015 = vmatprep.subr.mxu0 0.0
  %1016 = vmatpush1.msra.mxu0 %v209
  %1017 = vmatprep.subr.mxu0 0.0
  %1018 = vmatpush1.msra.mxu0 %v212
  %1019 = vmatprep.subr.mxu0 0.0
  %1020 = vmatpush1.msra.mxu0 %v215
  %1021 = vmatprep.subr.mxu0 0.0
  %1022 = vmatpush1.msra.mxu0 %v218
  %1023 = vmatprep.subr.mxu0 0.0
  %1024 = vmatpush1.msra.mxu0 %v221
  %1025 = vmatprep.subr.mxu0 0.0
  %1026 = vmatpush1.msra.mxu0 %v224
  %1027 = vmatprep.subr.mxu0 0.0
  %1028 = vmatpush1.msra.mxu0 %v227
  %1029 = vmatprep.subr.mxu0 0.0
  %1030 = vmatpush1.msra.mxu0 %v230
  %1031 = vmatprep.subr.mxu0 0.0
  %1032 = vmatpush1.msra.mxu0 %v233
  %1033 = vmatprep.subr.mxu0 0.0
  %1034 = vmatpush1.msra.mxu0 %v236
  %1035 = vmatprep.subr.mxu0 0.0
  %1036 = vmatpush1.msra.mxu0 %v239
  %1037 = vmatprep.subr.mxu0 0.0
  %1038 = vmatpush1.msra.mxu0 %v242
  %1039 = vmatprep.subr.mxu0 0.0
  %1040 = vmatpush1.msra.mxu0 %v245
  %1041 = vmatprep.subr.mxu0 0.0
  %1042 = vmatpush1.msra.mxu0 %v248
  %1043 = vmatprep.subr.mxu0 0.0
  %1044 = vmatpush1.msra.mxu0 %v251
  %1045 = vmatprep.subr.mxu0 0.0
  %1046 = vmatpush1.msra.mxu0 %v254
  %1047 = vmatprep.subr.mxu0 0.0
  %1048 = vmatpush1.msra.mxu0 %v257
  %1049 = vmatprep.subr.mxu0 0.0
  %1050 = vmatpush1.msra.mxu0 %v260
  %1051 = vmatprep.subr.mxu0 0.0
  %1052 = vmatpush1.msra.mxu0 %v263
  %1053 = vmatprep.subr.mxu0 0.0
  %1054 = vmatpush1.msra.mxu0 %v266
  %1055 = vmatprep.subr.mxu0 0.0
  %1056 = vmatpush1.msra.mxu0 %v269
  %1057 = vmatprep.mubr.f32.mxu0 %v15
  %1058 = vmatmul.mubr.f32.gmra.mrb[0].mxu0 %v14
  %v1059 = vpop.f32.mrb[0].mxu0
  %v1060 = vadd.f32 %v379, %v1059
  %v1061 = vpop.f32.mrb[0].mxu0
  %1062 = vmatprep.mubr.f32.mxu0 %v19
  %1063 = vmatmul.mubr.f32.gmra.mrb[0].mxu0 %v18
  %v1064 = vpop.f32.mrb[0].mxu0
  %v1065 = vadd.f32 %v379, %v1064
  %v1066 = vpop.f32.mrb[0].mxu0
  %1067 = vmatprep.mubr.f32.mxu0 %v23
  %1068 = vmatmul.mubr.f32.gmra.mrb[0].mxu0 %v22
  %v1069 = vpop.f32.mrb[0].mxu0
  %v1070 = vadd.f32 %v379, %v1069
  %v1071 = vpop.f32.mrb[0].mxu0
  %1072 = vmatprep.mubr.f32.mxu0 %v27
  %1073 = vmatmul.mubr.f32.gmra.mrb[0].mxu0 %v26
  %v1074 = vpop.f32.mrb[0].mxu0
  %v1075 = vadd.f32 %v379, %v1074
  %v1076 = vpop.f32.mrb[0].mxu0
  %1077 = vmatprep.mubr.f32.mxu0 %v31
  %1078 = vmatmul.mubr.f32.gmra.mrb[0].mxu0 %v30
  %v1079 = vpop.f32.mrb[0].mxu0
  %v1080 = vadd.f32 %v379, %v1079
  %v1081 = vpop.f32.mrb[0].mxu0
  %1082 = vmatprep.mubr.f32.mxu0 %v35
  %1083 = vmatmul.mubr.f32.gmra.mrb[0].mxu0 %v34
  %v1084 = vpop.f32.mrb[0].mxu0
  %v1085 = vadd.f32 %v379, %v1084
  %v1086 = vpop.f32.mrb[0].mxu0
  %1087 = vmatprep.mubr.f32.mxu0 %v39
  %1088 = vmatmul.mubr.f32.gmra.mrb[0].mxu0 %v38
  %v1089 = vpop.f32.mrb[0].mxu0
  %v1090 = vadd.f32 %v379, %v1089
  %v1091 = vpop.f32.mrb[0].mxu0
  %1092 = vmatprep.mubr.f32.mxu0 %v43
  %1093 = vmatmul.mubr.f32.gmra.mrb[0].mxu0 %v42
  %v1094 = vpop.f32.mrb[0].mxu0
  %v1095 = vadd.f32 %v379, %v1094
  %v1096 = vpop.f32.mrb[0].mxu0
  %1097 = vmatprep.mubr.f32.mxu0 %v47
  %1098 = vmatmul.mubr.f32.gmra.mrb[0].mxu0 %v46
  %v1099 = vpop.f32.mrb[0].mxu0
  %v1100 = vadd.f32 %v379, %v1099
  %v1101 = vpop.f32.mrb[0].mxu0
  %1102 = vmatprep.mubr.f32.mxu0 %v51
  %1103 = vmatmul.mubr.f32.gmra.mrb[0].mxu0 %v50
  %v1104 = vpop.f32.mrb[0].mxu0
  %v1105 = vadd.f32 %v379, %v1104
  %v1106 = vpop.f32.mrb[0].mxu0
  %1107 = vmatprep.mubr.f32.mxu0 %v55
  %1108 = vmatmul.mubr.f32.gmra.mrb[0].mxu0 %v54
  %v1109 = vpop.f32.mrb[0].mxu0
  %v1110 = vadd.f32 %v379, %v1109
  %v1111 = vpop.f32.mrb[0].mxu0
  %1112 = vmatprep.mubr.f32.mxu0 %v59
  %1113 = vmatmul.mubr.f32.gmra.mrb[0].mxu0 %v58
  %v1114 = vpop.f32.mrb[0].mxu0
  %v1115 = vadd.f32 %v379, %v1114
  %v1116 = vpop.f32.mrb[0].mxu0
  %1117 = vmatprep.mubr.f32.mxu0 %v63
  %1118 = vmatmul.mubr.f32.gmra.mrb[0].mxu0 %v62
  %v1119 = vpop.f32.mrb[0].mxu0
  %v1120 = vadd.f32 %v379, %v1119
  %v1121 = vpop.f32.mrb[0].mxu0
  %1122 = vmatprep.mubr.f32.mxu0 %v67
  %1123 = vmatmul.mubr.f32.gmra.mrb[0].mxu0 %v66
  %v1124 = vpop.f32.mrb[0].mxu0
  %v1125 = vadd.f32 %v379, %v1124
  %v1126 = vpop.f32.mrb[0].mxu0
  %1127 = vmatprep.mubr.f32.mxu0 %v71
  %1128 = vmatmul.mubr.f32.gmra.mrb[0].mxu0 %v70
  %v1129 = vpop.f32.mrb[0].mxu0
  %v1130 = vadd.f32 %v379, %v1129
  %v1131 = vpop.f32.mrb[0].mxu0
  %1132 = vmatprep.mubr.f32.mxu0 %v75
  %1133 = vmatmul.mubr.f32.gmra.mrb[0].mxu0 %v74
  %v1134 = vpop.f32.mrb[0].mxu0
  %v1135 = vadd.f32 %v379, %v1134
  %v1136 = vpop.f32.mrb[0].mxu0
  %1137 = vmatprep.mubr.f32.mxu0 %v79
  %1138 = vmatmul.mubr.f32.gmra.mrb[0].mxu0 %v78
  %v1139 = vpop.f32.mrb[0].mxu0
  %v1140 = vadd.f32 %v379, %v1139
  %v1141 = vpop.f32.mrb[0].mxu0
  %1142 = vmatprep.mubr.f32.mxu0 %v83
  %1143 = vmatmul.mubr.f32.gmra.mrb[0].mxu0 %v82
  %v1144 = vpop.f32.mrb[0].mxu0
  %v1145 = vadd.f32 %v379, %v1144
  %v1146 = vpop.f32.mrb[0].mxu0
  %1147 = vmatprep.mubr.f32.mxu0 %v87
  %1148 = vmatmul.mubr.f32.gmra.mrb[0].mxu0 %v86
  %v1149 = vpop.f32.mrb[0].mxu0
  %v1150 = vadd.f32 %v379, %v1149
  %v1151 = vpop.f32.mrb[0].mxu0
  %1152 = vmatprep.mubr.f32.mxu0 %v91
  %1153 = vmatmul.mubr.f32.gmra.mrb[0].mxu0 %v90
  %v1154 = vpop.f32.mrb[0].mxu0
  %v1155 = vadd.f32 %v379, %v1154
  %v1156 = vpop.f32.mrb[0].mxu0
  %1157 = vmatprep.mubr.f32.mxu0 %v95
  %1158 = vmatmul.mubr.f32.gmra.mrb[0].mxu0 %v94
  %v1159 = vpop.f32.mrb[0].mxu0
  %v1160 = vadd.f32 %v379, %v1159
  %v1161 = vpop.f32.mrb[0].mxu0
  %1162 = vmatprep.mubr.f32.mxu0 %v99
  %1163 = vmatmul.mubr.f32.gmra.mrb[0].mxu0 %v98
  %v1164 = vpop.f32.mrb[0].mxu0
  %v1165 = vadd.f32 %v379, %v1164
  %v1166 = vpop.f32.mrb[0].mxu0
  %1167 = vmatprep.mubr.f32.mxu0 %v103
  %1168 = vmatmul.mubr.f32.gmra.mrb[0].mxu0 %v102
  %v1169 = vpop.f32.mrb[0].mxu0
  %v1170 = vadd.f32 %v379, %v1169
  %v1171 = vpop.f32.mrb[0].mxu0
  %1172 = vmatprep.mubr.f32.mxu0 %v107
  %1173 = vmatmul.mubr.f32.gmra.mrb[0].mxu0 %v106
  %v1174 = vpop.f32.mrb[0].mxu0
  %v1175 = vadd.f32 %v379, %v1174
  %v1176 = vpop.f32.mrb[0].mxu0
  %1177 = vmatprep.mubr.f32.mxu0 %v111
  %1178 = vmatmul.mubr.f32.gmra.mrb[0].mxu0 %v110
  %v1179 = vpop.f32.mrb[0].mxu0
  %v1180 = vadd.f32 %v379, %v1179
  %v1181 = vpop.f32.mrb[0].mxu0
  %1182 = vmatprep.mubr.f32.mxu0 %v115
  %1183 = vmatmul.mubr.f32.gmra.mrb[0].mxu0 %v114
  %v1184 = vpop.f32.mrb[0].mxu0
  %v1185 = vadd.f32 %v379, %v1184
  %v1186 = vpop.f32.mrb[0].mxu0
  %1187 = vmatprep.mubr.f32.mxu0 %v119
  %1188 = vmatmul.mubr.f32.gmra.mrb[0].mxu0 %v118
  %v1189 = vpop.f32.mrb[0].mxu0
  %v1190 = vadd.f32 %v379, %v1189
  %v1191 = vpop.f32.mrb[0].mxu0
  %1192 = vmatprep.mubr.f32.mxu0 %v123
  %1193 = vmatmul.mubr.f32.gmra.mrb[0].mxu0 %v122
  %v1194 = vpop.f32.mrb[0].mxu0
  %v1195 = vadd.f32 %v379, %v1194
  %v1196 = vpop.f32.mrb[0].mxu0
  %1197 = vmatprep.mubr.f32.mxu0 %v127
  %1198 = vmatmul.mubr.f32.gmra.mrb[0].mxu0 %v126
  %v1199 = vpop.f32.mrb[0].mxu0
  %v1200 = vadd.f32 %v379, %v1199
  %v1201 = vpop.f32.mrb[0].mxu0
  %1202 = vmatprep.mubr.f32.mxu0 %v131
  %1203 = vmatmul.mubr.f32.gmra.mrb[0].mxu0 %v130
  %v1204 = vpop.f32.mrb[0].mxu0
  %v1205 = vadd.f32 %v379, %v1204
  %v1206 = vpop.f32.mrb[0].mxu0
  %1207 = vmatprep.mubr.f32.mxu0 %v135
  %1208 = vmatmul.mubr.f32.gmra.mrb[0].mxu0 %v134
  %v1209 = vpop.f32.mrb[0].mxu0
  %v1210 = vadd.f32 %v379, %v1209
  %v1211 = vpop.f32.mrb[0].mxu0
  %1212 = vmatprep.mubr.f32.mxu0 %v139
  %1213 = vmatmul.mubr.f32.gmra.mrb[0].mxu0 %v138
  %v1214 = vpop.f32.mrb[0].mxu0
  %v1215 = vadd.f32 %v379, %v1214
  %v1216 = vpop.f32.mrb[0].mxu0
  %1217 = vmatprep.mubr.f32.mxu0 %v143
  %1218 = vmatmul.mubr.f32.gmra.mrb[0].mxu0 %v142
  %v1219 = vpop.f32.mrb[0].mxu0
  %v1220 = vadd.f32 %v379, %v1219
  %v1221 = vpop.f32.mrb[0].mxu0
  %1222 = vmatprep.mubr.f32.mxu0 %v147
  %1223 = vmatmul.mubr.f32.gmra.mrb[0].mxu0 %v146
  %v1224 = vpop.f32.mrb[0].mxu0
  %v1225 = vadd.f32 %v379, %v1224
  %v1226 = vpop.f32.mrb[0].mxu0
  %1227 = vmatprep.mubr.f32.mxu0 %v151
  %1228 = vmatmul.mubr.f32.gmra.mrb[0].mxu0 %v150
  %v1229 = vpop.f32.mrb[0].mxu0
  %v1230 = vadd.f32 %v379, %v1229
  %v1231 = vpop.f32.mrb[0].mxu0
  %1232 = vmatprep.mubr.f32.mxu0 %v155
  %1233 = vmatmul.mubr.f32.gmra.mrb[0].mxu0 %v154
  %v1234 = vpop.f32.mrb[0].mxu0
  %v1235 = vadd.f32 %v379, %v1234
  %v1236 = vpop.f32.mrb[0].mxu0
  %1237 = vmatprep.mubr.f32.mxu0 %v159
  %1238 = vmatmul.mubr.f32.gmra.mrb[0].mxu0 %v158
  %v1239 = vpop.f32.mrb[0].mxu0
  %v1240 = vadd.f32 %v379, %v1239
  %v1241 = vpop.f32.mrb[0].mxu0
  %1242 = vmatprep.mubr.f32.mxu0 %v163
  %1243 = vmatmul.mubr.f32.gmra.mrb[0].mxu0 %v162
  %v1244 = vpop.f32.mrb[0].mxu0
  %v1245 = vadd.f32 %v379, %v1244
  %v1246 = vpop.f32.mrb[0].mxu0
  %1247 = vmatprep.mubr.f32.mxu0 %v167
  %1248 = vmatmul.mubr.f32.gmra.mrb[0].mxu0 %v166
  %v1249 = vpop.f32.mrb[0].mxu0
  %v1250 = vadd.f32 %v379, %v1249
  %v1251 = vpop.f32.mrb[0].mxu0
  %1252 = vmatprep.mubr.f32.mxu0 %v171
  %1253 = vmatmul.mubr.f32.gmra.mrb[0].mxu0 %v170
  %v1254 = vpop.f32.mrb[0].mxu0
  %v1255 = vadd.f32 %v379, %v1254
  %v1256 = vpop.f32.mrb[0].mxu0
  %1257 = vdwg.mxu0
  %1258 = vmatprep.subr.mxu0 0.0
  %1259 = vmatpush1.msra.mxu0 %v272
  %1260 = vmatprep.subr.mxu0 0.0
  %1261 = vmatpush1.msra.mxu0 %v275
  %1262 = vmatprep.subr.mxu0 0.0
  %1263 = vmatpush1.msra.mxu0 %v278
  %1264 = vmatprep.subr.mxu0 0.0
  %1265 = vmatpush1.msra.mxu0 %v281
  %1266 = vmatprep.subr.mxu0 0.0
  %1267 = vmatpush1.msra.mxu0 %v284
  %1268 = vmatprep.subr.mxu0 0.0
  %1269 = vmatpush1.msra.mxu0 %v287
  %1270 = vmatprep.subr.mxu0 0.0
  %1271 = vmatpush1.msra.mxu0 %v290
  %1272 = vmatprep.subr.mxu0 0.0
  %1273 = vmatpush1.msra.mxu0 %v293
  %1274 = vmatprep.subr.mxu0 0.0
  %1275 = vmatpush1.msra.mxu0 %v296
  %1276 = vmatprep.subr.mxu0 0.0
  %1277 = vmatpush1.msra.mxu0 %v299
  %1278 = vmatprep.subr.mxu0 0.0
  %1279 = vmatpush1.msra.mxu0 %v302
  %1280 = vmatprep.subr.mxu0 0.0
  %1281 = vmatpush1.msra.mxu0 %v305
  %1282 = vmatprep.subr.mxu0 0.0
  %1283 = vmatpush1.msra.mxu0 %v308
  %1284 = vmatprep.subr.mxu0 0.0
  %1285 = vmatpush1.msra.mxu0 %v311
  %1286 = vmatprep.subr.mxu0 0.0
  %1287 = vmatpush1.msra.mxu0 %v314
  %1288 = vmatprep.subr.mxu0 0.0
  %1289 = vmatpush1.msra.mxu0 %v317
  %1290 = vmatprep.subr.mxu0 0.0
  %1291 = vmatpush1.msra.mxu0 %v320
  %1292 = vmatprep.subr.mxu0 0.0
  %1293 = vmatpush1.msra.mxu0 %v323
  %1294 = vmatprep.subr.mxu0 0.0
  %1295 = vmatpush1.msra.mxu0 %v326
  %1296 = vmatprep.subr.mxu0 0.0
  %1297 = vmatpush1.msra.mxu0 %v329
  %1298 = vmatprep.subr.mxu0 0.0
  %1299 = vmatpush1.msra.mxu0 %v332
  %1300 = vmatprep.subr.mxu0 0.0
  %1301 = vmatpush1.msra.mxu0 %v335
  %1302 = vmatprep.subr.mxu0 0.0
  %1303 = vmatpush1.msra.mxu0 %v338
  %1304 = vmatprep.subr.mxu0 0.0
  %1305 = vmatpush1.msra.mxu0 %v341
  %1306 = vmatprep.subr.mxu0 0.0
  %1307 = vmatpush1.msra.mxu0 %v344
  %1308 = vmatprep.subr.mxu0 0.0
  %1309 = vmatpush1.msra.mxu0 %v347
  %1310 = vmatprep.subr.mxu0 0.0
  %1311 = vmatpush1.msra.mxu0 %v350
  %1312 = vmatprep.subr.mxu0 0.0
  %1313 = vmatpush1.msra.mxu0 %v353
  %1314 = vmatprep.subr.mxu0 0.0
  %1315 = vmatpush1.msra.mxu0 %v356
  %1316 = vmatprep.subr.mxu0 0.0
  %1317 = vmatpush1.msra.mxu0 %v359
  %1318 = vmatprep.subr.mxu0 0.0
  %1319 = vmatpush1.msra.mxu0 %v362
  %1320 = vmatprep.subr.mxu0 0.0
  %1321 = vmatpush1.msra.mxu0 %v365
  %1322 = vmatprep.mubr.f32.mxu0 %v17
  %1323 = vmatmul.mubr.f32.gmra.mrb[0].mxu0 %v16
  %v1324 = vpop.f32.mrb[0].mxu0
  %v1325 = vadd.f32 %v1060, %v1324
  %v1326 = vpop.f32.mrb[0].mxu0
  %1327 = vmatprep.mubr.f32.mxu0 %v21
  %1328 = vmatmul.mubr.f32.gmra.mrb[0].mxu0 %v20
  %v1329 = vpop.f32.mrb[0].mxu0
  %v1330 = vadd.f32 %v1065, %v1329
  %v1331 = vpop.f32.mrb[0].mxu0
  %1332 = vmatprep.mubr.f32.mxu0 %v25
  %1333 = vmatmul.mubr.f32.gmra.mrb[0].mxu0 %v24
  %v1334 = vpop.f32.mrb[0].mxu0
  %v1335 = vadd.f32 %v1070, %v1334
  %v1336 = vpop.f32.mrb[0].mxu0
  %1337 = vmatprep.mubr.f32.mxu0 %v29
  %1338 = vmatmul.mubr.f32.gmra.mrb[0].mxu0 %v28
  %v1339 = vpop.f32.mrb[0].mxu0
  %v1340 = vadd.f32 %v1075, %v1339
  %v1341 = vpop.f32.mrb[0].mxu0
  %1342 = vmatprep.mubr.f32.mxu0 %v33
  %1343 = vmatmul.mubr.f32.gmra.mrb[0].mxu0 %v32
  %v1344 = vpop.f32.mrb[0].mxu0
  %v1345 = vadd.f32 %v1080, %v1344
  %v1346 = vpop.f32.mrb[0].mxu0
  %1347 = vmatprep.mubr.f32.mxu0 %v37
  %1348 = vmatmul.mubr.f32.gmra.mrb[0].mxu0 %v36
  %v1349 = vpop.f32.mrb[0].mxu0
  %v1350 = vadd.f32 %v1085, %v1349
  %v1351 = vpop.f32.mrb[0].mxu0
  %1352 = vmatprep.mubr.f32.mxu0 %v41
  %1353 = vmatmul.mubr.f32.gmra.mrb[0].mxu0 %v40
  %v1354 = vpop.f32.mrb[0].mxu0
  %v1355 = vadd.f32 %v1090, %v1354
  %v1356 = vpop.f32.mrb[0].mxu0
  %1357 = vmatprep.mubr.f32.mxu0 %v45
  %1358 = vmatmul.mubr.f32.gmra.mrb[0].mxu0 %v44
  %v1359 = vpop.f32.mrb[0].mxu0
  %v1360 = vadd.f32 %v1095, %v1359
  %v1361 = vpop.f32.mrb[0].mxu0
  %1362 = vmatprep.mubr.f32.mxu0 %v49
  %1363 = vmatmul.mubr.f32.gmra.mrb[0].mxu0 %v48
  %v1364 = vpop.f32.mrb[0].mxu0
  %v1365 = vadd.f32 %v1100, %v1364
  %v1366 = vpop.f32.mrb[0].mxu0
  %1367 = vmatprep.mubr.f32.mxu0 %v53
  %1368 = vmatmul.mubr.f32.gmra.mrb[0].mxu0 %v52
  %v1369 = vpop.f32.mrb[0].mxu0
  %v1370 = vadd.f32 %v1105, %v1369
  %v1371 = vpop.f32.mrb[0].mxu0
  %1372 = vmatprep.mubr.f32.mxu0 %v57
  %1373 = vmatmul.mubr.f32.gmra.mrb[0].mxu0 %v56
  %v1374 = vpop.f32.mrb[0].mxu0
  %v1375 = vadd.f32 %v1110, %v1374
  %v1376 = vpop.f32.mrb[0].mxu0
  %1377 = vmatprep.mubr.f32.mxu0 %v61
  %1378 = vmatmul.mubr.f32.gmra.mrb[0].mxu0 %v60
  %v1379 = vpop.f32.mrb[0].mxu0
  %v1380 = vadd.f32 %v1115, %v1379
  %v1381 = vpop.f32.mrb[0].mxu0
  %1382 = vmatprep.mubr.f32.mxu0 %v65
  %1383 = vmatmul.mubr.f32.gmra.mrb[0].mxu0 %v64
  %v1384 = vpop.f32.mrb[0].mxu0
  %v1385 = vadd.f32 %v1120, %v1384
  %v1386 = vpop.f32.mrb[0].mxu0
  %1387 = vmatprep.mubr.f32.mxu0 %v69
  %1388 = vmatmul.mubr.f32.gmra.mrb[0].mxu0 %v68
  %v1389 = vpop.f32.mrb[0].mxu0
  %v1390 = vadd.f32 %v1125, %v1389
  %v1391 = vpop.f32.mrb[0].mxu0
  %1392 = vmatprep.mubr.f32.mxu0 %v73
  %1393 = vmatmul.mubr.f32.gmra.mrb[0].mxu0 %v72
  %v1394 = vpop.f32.mrb[0].mxu0
  %v1395 = vadd.f32 %v1130, %v1394
  %v1396 = vpop.f32.mrb[0].mxu0
  %1397 = vmatprep.mubr.f32.mxu0 %v77
  %1398 = vmatmul.mubr.f32.gmra.mrb[0].mxu0 %v76
  %v1399 = vpop.f32.mrb[0].mxu0
  %v1400 = vadd.f32 %v1135, %v1399
  %v1401 = vpop.f32.mrb[0].mxu0
  %1402 = vmatprep.mubr.f32.mxu0 %v81
  %1403 = vmatmul.mubr.f32.gmra.mrb[0].mxu0 %v80
  %v1404 = vpop.f32.mrb[0].mxu0
  %v1405 = vadd.f32 %v1140, %v1404
  %v1406 = vpop.f32.mrb[0].mxu0
  %1407 = vmatprep.mubr.f32.mxu0 %v85
  %1408 = vmatmul.mubr.f32.gmra.mrb[0].mxu0 %v84
  %v1409 = vpop.f32.mrb[0].mxu0
  %v1410 = vadd.f32 %v1145, %v1409
  %v1411 = vpop.f32.mrb[0].mxu0
  %1412 = vmatprep.mubr.f32.mxu0 %v89
  %1413 = vmatmul.mubr.f32.gmra.mrb[0].mxu0 %v88
  %v1414 = vpop.f32.mrb[0].mxu0
  %v1415 = vadd.f32 %v1150, %v1414
  %v1416 = vpop.f32.mrb[0].mxu0
  %1417 = vmatprep.mubr.f32.mxu0 %v93
  %1418 = vmatmul.mubr.f32.gmra.mrb[0].mxu0 %v92
  %v1419 = vpop.f32.mrb[0].mxu0
  %v1420 = vadd.f32 %v1155, %v1419
  %v1421 = vpop.f32.mrb[0].mxu0
  %1422 = vmatprep.mubr.f32.mxu0 %v97
  %1423 = vmatmul.mubr.f32.gmra.mrb[0].mxu0 %v96
  %v1424 = vpop.f32.mrb[0].mxu0
  %v1425 = vadd.f32 %v1160, %v1424
  %v1426 = vpop.f32.mrb[0].mxu0
  %1427 = vmatprep.mubr.f32.mxu0 %v101
  %1428 = vmatmul.mubr.f32.gmra.mrb[0].mxu0 %v100
  %v1429 = vpop.f32.mrb[0].mxu0
  %v1430 = vadd.f32 %v1165, %v1429
  %v1431 = vpop.f32.mrb[0].mxu0
  %1432 = vmatprep.mubr.f32.mxu0 %v105
  %1433 = vmatmul.mubr.f32.gmra.mrb[0].mxu0 %v104
  %v1434 = vpop.f32.mrb[0].mxu0
  %v1435 = vadd.f32 %v1170, %v1434
  %v1436 = vpop.f32.mrb[0].mxu0
  %1437 = vmatprep.mubr.f32.mxu0 %v109
  %1438 = vmatmul.mubr.f32.gmra.mrb[0].mxu0 %v108
  %v1439 = vpop.f32.mrb[0].mxu0
  %v1440 = vadd.f32 %v1175, %v1439
  %v1441 = vpop.f32.mrb[0].mxu0
  %1442 = vmatprep.mubr.f32.mxu0 %v113
  %1443 = vmatmul.mubr.f32.gmra.mrb[0].mxu0 %v112
  %v1444 = vpop.f32.mrb[0].mxu0
  %v1445 = vadd.f32 %v1180, %v1444
  %v1446 = vpop.f32.mrb[0].mxu0
  %1447 = vmatprep.mubr.f32.mxu0 %v117
  %1448 = vmatmul.mubr.f32.gmra.mrb[0].mxu0 %v116
  %v1449 = vpop.f32.mrb[0].mxu0
  %v1450 = vadd.f32 %v1185, %v1449
  %v1451 = vpop.f32.mrb[0].mxu0
  %1452 = vmatprep.mubr.f32.mxu0 %v121
  %1453 = vmatmul.mubr.f32.gmra.mrb[0].mxu0 %v120
  %v1454 = vpop.f32.mrb[0].mxu0
  %v1455 = vadd.f32 %v1190, %v1454
  %v1456 = vpop.f32.mrb[0].mxu0
  %1457 = vmatprep.mubr.f32.mxu0 %v125
  %1458 = vmatmul.mubr.f32.gmra.mrb[0].mxu0 %v124
  %v1459 = vpop.f32.mrb[0].mxu0
  %v1460 = vadd.f32 %v1195, %v1459
  %v1461 = vpop.f32.mrb[0].mxu0
  %1462 = vmatprep.mubr.f32.mxu0 %v129
  %1463 = vmatmul.mubr.f32.gmra.mrb[0].mxu0 %v128
  %v1464 = vpop.f32.mrb[0].mxu0
  %v1465 = vadd.f32 %v1200, %v1464
  %v1466 = vpop.f32.mrb[0].mxu0
  %1467 = vmatprep.mubr.f32.mxu0 %v133
  %1468 = vmatmul.mubr.f32.gmra.mrb[0].mxu0 %v132
  %v1469 = vpop.f32.mrb[0].mxu0
  %v1470 = vadd.f32 %v1205, %v1469
  %v1471 = vpop.f32.mrb[0].mxu0
  %1472 = vmatprep.mubr.f32.mxu0 %v137
  %1473 = vmatmul.mubr.f32.gmra.mrb[0].mxu0 %v136
  %v1474 = vpop.f32.mrb[0].mxu0
  %v1475 = vadd.f32 %v1210, %v1474
  %v1476 = vpop.f32.mrb[0].mxu0
  %1477 = vmatprep.mubr.f32.mxu0 %v141
  %1478 = vmatmul.mubr.f32.gmra.mrb[0].mxu0 %v140
  %v1479 = vpop.f32.mrb[0].mxu0
  %v1480 = vadd.f32 %v1215, %v1479
  %v1481 = vpop.f32.mrb[0].mxu0
  %1482 = vmatprep.mubr.f32.mxu0 %v145
  %1483 = vmatmul.mubr.f32.gmra.mrb[0].mxu0 %v144
  %v1484 = vpop.f32.mrb[0].mxu0
  %v1485 = vadd.f32 %v1220, %v1484
  %v1486 = vpop.f32.mrb[0].mxu0
  %1487 = vmatprep.mubr.f32.mxu0 %v149
  %1488 = vmatmul.mubr.f32.gmra.mrb[0].mxu0 %v148
  %v1489 = vpop.f32.mrb[0].mxu0
  %v1490 = vadd.f32 %v1225, %v1489
  %v1491 = vpop.f32.mrb[0].mxu0
  %1492 = vmatprep.mubr.f32.mxu0 %v153
  %1493 = vmatmul.mubr.f32.gmra.mrb[0].mxu0 %v152
  %v1494 = vpop.f32.mrb[0].mxu0
  %v1495 = vadd.f32 %v1230, %v1494
  %v1496 = vpop.f32.mrb[0].mxu0
  %1497 = vmatprep.mubr.f32.mxu0 %v157
  %1498 = vmatmul.mubr.f32.gmra.mrb[0].mxu0 %v156
  %v1499 = vpop.f32.mrb[0].mxu0
  %v1500 = vadd.f32 %v1235, %v1499
  %v1501 = vpop.f32.mrb[0].mxu0
  %1502 = vmatprep.mubr.f32.mxu0 %v161
  %1503 = vmatmul.mubr.f32.gmra.mrb[0].mxu0 %v160
  %v1504 = vpop.f32.mrb[0].mxu0
  %v1505 = vadd.f32 %v1240, %v1504
  %v1506 = vpop.f32.mrb[0].mxu0
  %1507 = vmatprep.mubr.f32.mxu0 %v165
  %1508 = vmatmul.mubr.f32.gmra.mrb[0].mxu0 %v164
  %v1509 = vpop.f32.mrb[0].mxu0
  %v1510 = vadd.f32 %v1245, %v1509
  %v1511 = vpop.f32.mrb[0].mxu0
  %1512 = vmatprep.mubr.f32.mxu0 %v169
  %1513 = vmatmul.mubr.f32.gmra.mrb[0].mxu0 %v168
  %v1514 = vpop.f32.mrb[0].mxu0
  %v1515 = vadd.f32 %v1250, %v1514
  %v1516 = vpop.f32.mrb[0].mxu0
  %1517 = vmatprep.mubr.f32.mxu0 %v173
  %1518 = vmatmul.mubr.f32.gmra.mrb[0].mxu0 %v172
  %v1519 = vpop.f32.mrb[0].mxu0
  %v1520 = vadd.f32 %v1255, %v1519
  %v1521 = vpop.f32.mrb[0].mxu0
  %1522 = vdwg.mxu0
  %1523 = vmatprep.subr.mxu0 0.0
  %1524 = vmatpush1.xpose.msra.mxu0 %v757
  %1525 = vmatprep.subr.mxu0 0.0
  %1526 = vmatpush1.xpose.msra.mxu0 %v763
  %1527 = vmatprep.subr.mxu0 0.0
  %1528 = vmatpush1.xpose.msra.mxu0 %v769
  %1529 = vmatprep.subr.mxu0 0.0
  %1530 = vmatpush1.xpose.msra.mxu0 %v775
  %1531 = vmatprep.subr.mxu0 0.0
  %1532 = vmatpush1.xpose.msra.mxu0 %v781
  %1533 = vmatprep.subr.mxu0 0.0
  %1534 = vmatpush1.xpose.msra.mxu0 %v787
  %1535 = vmatprep.subr.mxu0 0.0
  %1536 = vmatpush1.xpose.msra.mxu0 %v793
  %1537 = vmatprep.subr.mxu0 0.0
  %1538 = vmatpush1.xpose.msra.mxu0 %v799
  %1539 = vmatprep.subr.mxu0 0.0
  %1540 = vmatpush1.xpose.msra.mxu0 %v805
  %1541 = vmatprep.subr.mxu0 0.0
  %1542 = vmatpush1.xpose.msra.mxu0 %v811
  %1543 = vmatprep.subr.mxu0 0.0
  %1544 = vmatpush1.xpose.msra.mxu0 %v817
  %1545 = vmatprep.subr.mxu0 0.0
  %1546 = vmatpush1.xpose.msra.mxu0 %v823
  %1547 = vmatprep.subr.mxu0 0.0
  %1548 = vmatpush1.xpose.msra.mxu0 %v829
  %1549 = vmatprep.subr.mxu0 0.0
  %1550 = vmatpush1.xpose.msra.mxu0 %v835
  %1551 = vmatprep.subr.mxu0 0.0
  %1552 = vmatpush1.xpose.msra.mxu0 %v841
  %1553 = vmatprep.subr.mxu0 0.0
  %1554 = vmatpush1.xpose.msra.mxu0 %v847
  %1555 = vmatprep.subr.mxu0 0.0
  %1556 = vmatpush1.xpose.msra.mxu0 %v853
  %1557 = vmatprep.subr.mxu0 0.0
  %1558 = vmatpush1.xpose.msra.mxu0 %v859
  %1559 = vmatprep.subr.mxu0 0.0
  %1560 = vmatpush1.xpose.msra.mxu0 %v865
  %1561 = vmatprep.subr.mxu0 0.0
  %1562 = vmatpush1.xpose.msra.mxu0 %v871
  %1563 = vmatprep.subr.mxu0 0.0
  %1564 = vmatpush1.xpose.msra.mxu0 %v877
  %1565 = vmatprep.subr.mxu0 0.0
  %1566 = vmatpush1.xpose.msra.mxu0 %v883
  %1567 = vmatprep.subr.mxu0 0.0
  %1568 = vmatpush1.xpose.msra.mxu0 %v889
  %1569 = vmatprep.subr.mxu0 0.0
  %1570 = vmatpush1.xpose.msra.mxu0 %v895
  %1571 = vmatprep.subr.mxu0 0.0
  %1572 = vmatpush1.xpose.msra.mxu0 %v901
  %1573 = vmatprep.subr.mxu0 0.0
  %1574 = vmatpush1.xpose.msra.mxu0 %v907
  %1575 = vmatprep.subr.mxu0 0.0
  %1576 = vmatpush1.xpose.msra.mxu0 %v913
  %1577 = vmatprep.subr.mxu0 0.0
  %1578 = vmatpush1.xpose.msra.mxu0 %v919
  %1579 = vmatprep.subr.mxu0 0.0
  %1580 = vmatpush1.xpose.msra.mxu0 %v925
  %1581 = vmatprep.subr.mxu0 0.0
  %1582 = vmatpush1.xpose.msra.mxu0 %v931
  %1583 = vmatprep.subr.mxu0 0.0
  %1584 = vmatpush1.xpose.msra.mxu0 %v937
  %1585 = vmatprep.subr.mxu0 0.0
  %1586 = vmatpush1.xpose.msra.mxu0 %v943
  %1587 = vmatprep.mubr.f32.mxu0 0.0
  %1588 = vmatmul.mubr.f32.gmra.mrb[0].mxu0 %v755
  %v1589 = vpop.f32.mrb[0].mxu0
  %v1590 = vadd.f32 0.0, %v1589
  %v1591 = vpop.f32.mrb[0].mxu0
  %v1592 = vadd.f32 0.0, %v1591
  %1593 = vmatprep.mubr.f32.mxu0 0.0
  %1594 = vmatmul.mubr.f32.gmra.mrb[0].mxu0 %v761
  %v1595 = vpop.f32.mrb[0].mxu0
  %v1596 = vadd.f32 0.0, %v1595
  %v1597 = vpop.f32.mrb[0].mxu0
  %v1598 = vadd.f32 0.0, %v1597
  %1599 = vmatprep.mubr.f32.mxu0 0.0
  %1600 = vmatmul.mubr.f32.gmra.mrb[0].mxu0 %v767
  %v1601 = vpop.f32.mrb[0].mxu0
  %v1602 = vadd.f32 0.0, %v1601
  %v1603 = vpop.f32.mrb[0].mxu0
  %v1604 = vadd.f32 0.0, %v1603
  %1605 = vmatprep.mubr.f32.mxu0 0.0
  %1606 = vmatmul.mubr.f32.gmra.mrb[0].mxu0 %v773
  %v1607 = vpop.f32.mrb[0].mxu0
  %v1608 = vadd.f32 0.0, %v1607
  %v1609 = vpop.f32.mrb[0].mxu0
  %v1610 = vadd.f32 0.0, %v1609
  %1611 = vmatprep.mubr.f32.mxu0 0.0
  %1612 = vmatmul.mubr.f32.gmra.mrb[0].mxu0 %v779
  %v1613 = vpop.f32.mrb[0].mxu0
  %v1614 = vadd.f32 0.0, %v1613
  %v1615 = vpop.f32.mrb[0].mxu0
  %v1616 = vadd.f32 0.0, %v1615
  %1617 = vmatprep.mubr.f32.mxu0 0.0
  %1618 = vmatmul.mubr.f32.gmra.mrb[0].mxu0 %v785
  %v1619 = vpop.f32.mrb[0].mxu0
  %v1620 = vadd.f32 0.0, %v1619
  %v1621 = vpop.f32.mrb[0].mxu0
  %v1622 = vadd.f32 0.0, %v1621
  %1623 = vmatprep.mubr.f32.mxu0 0.0
  %1624 = vmatmul.mubr.f32.gmra.mrb[0].mxu0 %v791
  %v1625 = vpop.f32.mrb[0].mxu0
  %v1626 = vadd.f32 0.0, %v1625
  %v1627 = vpop.f32.mrb[0].mxu0
  %v1628 = vadd.f32 0.0, %v1627
  %1629 = vmatprep.mubr.f32.mxu0 0.0
  %1630 = vmatmul.mubr.f32.gmra.mrb[0].mxu0 %v797
  %v1631 = vpop.f32.mrb[0].mxu0
  %v1632 = vadd.f32 0.0, %v1631
  %v1633 = vpop.f32.mrb[0].mxu0
  %v1634 = vadd.f32 0.0, %v1633
  %1635 = vmatprep.mubr.f32.mxu0 0.0
  %1636 = vmatmul.mubr.f32.gmra.mrb[0].mxu0 %v803
  %v1637 = vpop.f32.mrb[0].mxu0
  %v1638 = vadd.f32 0.0, %v1637
  %v1639 = vpop.f32.mrb[0].mxu0
  %v1640 = vadd.f32 0.0, %v1639
  %1641 = vmatprep.mubr.f32.mxu0 0.0
  %1642 = vmatmul.mubr.f32.gmra.mrb[0].mxu0 %v809
  %v1643 = vpop.f32.mrb[0].mxu0
  %v1644 = vadd.f32 0.0, %v1643
  %v1645 = vpop.f32.mrb[0].mxu0
  %v1646 = vadd.f32 0.0, %v1645
  %1647 = vmatprep.mubr.f32.mxu0 0.0
  %1648 = vmatmul.mubr.f32.gmra.mrb[0].mxu0 %v815
  %v1649 = vpop.f32.mrb[0].mxu0
  %v1650 = vadd.f32 0.0, %v1649
  %v1651 = vpop.f32.mrb[0].mxu0
  %v1652 = vadd.f32 0.0, %v1651
  %1653 = vmatprep.mubr.f32.mxu0 0.0
  %1654 = vmatmul.mubr.f32.gmra.mrb[0].mxu0 %v821
  %v1655 = vpop.f32.mrb[0].mxu0
  %v1656 = vadd.f32 0.0, %v1655
  %v1657 = vpop.f32.mrb[0].mxu0
  %v1658 = vadd.f32 0.0, %v1657
  %1659 = vmatprep.mubr.f32.mxu0 0.0
  %1660 = vmatmul.mubr.f32.gmra.mrb[0].mxu0 %v827
  %v1661 = vpop.f32.mrb[0].mxu0
  %v1662 = vadd.f32 0.0, %v1661
  %v1663 = vpop.f32.mrb[0].mxu0
  %v1664 = vadd.f32 0.0, %v1663
  %1665 = vmatprep.mubr.f32.mxu0 0.0
  %1666 = vmatmul.mubr.f32.gmra.mrb[0].mxu0 %v833
  %v1667 = vpop.f32.mrb[0].mxu0
  %v1668 = vadd.f32 0.0, %v1667
  %v1669 = vpop.f32.mrb[0].mxu0
  %v1670 = vadd.f32 0.0, %v1669
  %1671 = vmatprep.mubr.f32.mxu0 0.0
  %1672 = vmatmul.mubr.f32.gmra.mrb[0].mxu0 %v839
  %v1673 = vpop.f32.mrb[0].mxu0
  %v1674 = vadd.f32 0.0, %v1673
  %v1675 = vpop.f32.mrb[0].mxu0
  %v1676 = vadd.f32 0.0, %v1675
  %1677 = vmatprep.mubr.f32.mxu0 0.0
  %1678 = vmatmul.mubr.f32.gmra.mrb[0].mxu0 %v845
  %v1679 = vpop.f32.mrb[0].mxu0
  %v1680 = vadd.f32 0.0, %v1679
  %v1681 = vpop.f32.mrb[0].mxu0
  %v1682 = vadd.f32 0.0, %v1681
  %1683 = vmatprep.mubr.f32.mxu0 0.0
  %1684 = vmatmul.mubr.f32.gmra.mrb[0].mxu0 %v851
  %v1685 = vpop.f32.mrb[0].mxu0
  %v1686 = vadd.f32 0.0, %v1685
  %v1687 = vpop.f32.mrb[0].mxu0
  %v1688 = vadd.f32 0.0, %v1687
  %1689 = vmatprep.mubr.f32.mxu0 0.0
  %1690 = vmatmul.mubr.f32.gmra.mrb[0].mxu0 %v857
  %v1691 = vpop.f32.mrb[0].mxu0
  %v1692 = vadd.f32 0.0, %v1691
  %v1693 = vpop.f32.mrb[0].mxu0
  %v1694 = vadd.f32 0.0, %v1693
  %1695 = vmatprep.mubr.f32.mxu0 0.0
  %1696 = vmatmul.mubr.f32.gmra.mrb[0].mxu0 %v863
  %v1697 = vpop.f32.mrb[0].mxu0
  %v1698 = vadd.f32 0.0, %v1697
  %v1699 = vpop.f32.mrb[0].mxu0
  %v1700 = vadd.f32 0.0, %v1699
  %1701 = vmatprep.mubr.f32.mxu0 0.0
  %1702 = vmatmul.mubr.f32.gmra.mrb[0].mxu0 %v869
  %v1703 = vpop.f32.mrb[0].mxu0
  %v1704 = vadd.f32 0.0, %v1703
  %v1705 = vpop.f32.mrb[0].mxu0
  %v1706 = vadd.f32 0.0, %v1705
  %1707 = vmatprep.mubr.f32.mxu0 0.0
  %1708 = vmatmul.mubr.f32.gmra.mrb[0].mxu0 %v875
  %v1709 = vpop.f32.mrb[0].mxu0
  %v1710 = vadd.f32 0.0, %v1709
  %v1711 = vpop.f32.mrb[0].mxu0
  %v1712 = vadd.f32 0.0, %v1711
  %1713 = vmatprep.mubr.f32.mxu0 0.0
  %1714 = vmatmul.mubr.f32.gmra.mrb[0].mxu0 %v881
  %v1715 = vpop.f32.mrb[0].mxu0
  %v1716 = vadd.f32 0.0, %v1715
  %v1717 = vpop.f32.mrb[0].mxu0
  %v1718 = vadd.f32 0.0, %v1717
  %1719 = vmatprep.mubr.f32.mxu0 0.0
  %1720 = vmatmul.mubr.f32.gmra.mrb[0].mxu0 %v887
  %v1721 = vpop.f32.mrb[0].mxu0
  %v1722 = vadd.f32 0.0, %v1721
  %v1723 = vpop.f32.mrb[0].mxu0
  %v1724 = vadd.f32 0.0, %v1723
  %1725 = vmatprep.mubr.f32.mxu0 0.0
  %1726 = vmatmul.mubr.f32.gmra.mrb[0].mxu0 %v893
  %v1727 = vpop.f32.mrb[0].mxu0
  %v1728 = vadd.f32 0.0, %v1727
  %v1729 = vpop.f32.mrb[0].mxu0
  %v1730 = vadd.f32 0.0, %v1729
  %1731 = vmatprep.mubr.f32.mxu0 0.0
  %1732 = vmatmul.mubr.f32.gmra.mrb[0].mxu0 %v899
  %v1733 = vpop.f32.mrb[0].mxu0
  %v1734 = vadd.f32 0.0, %v1733
  %v1735 = vpop.f32.mrb[0].mxu0
  %v1736 = vadd.f32 0.0, %v1735
  %1737 = vmatprep.mubr.f32.mxu0 0.0
  %1738 = vmatmul.mubr.f32.gmra.mrb[0].mxu0 %v905
  %v1739 = vpop.f32.mrb[0].mxu0
  %v1740 = vadd.f32 0.0, %v1739
  %v1741 = vpop.f32.mrb[0].mxu0
  %v1742 = vadd.f32 0.0, %v1741
  %1743 = vmatprep.mubr.f32.mxu0 0.0
  %1744 = vmatmul.mubr.f32.gmra.mrb[0].mxu0 %v911
  %v1745 = vpop.f32.mrb[0].mxu0
  %v1746 = vadd.f32 0.0, %v1745
  %v1747 = vpop.f32.mrb[0].mxu0
  %v1748 = vadd.f32 0.0, %v1747
  %1749 = vmatprep.mubr.f32.mxu0 0.0
  %1750 = vmatmul.mubr.f32.gmra.mrb[0].mxu0 %v917
  %v1751 = vpop.f32.mrb[0].mxu0
  %v1752 = vadd.f32 0.0, %v1751
  %v1753 = vpop.f32.mrb[0].mxu0
  %v1754 = vadd.f32 0.0, %v1753
  %1755 = vmatprep.mubr.f32.mxu0 0.0
  %1756 = vmatmul.mubr.f32.gmra.mrb[0].mxu0 %v923
  %v1757 = vpop.f32.mrb[0].mxu0
  %v1758 = vadd.f32 0.0, %v1757
  %v1759 = vpop.f32.mrb[0].mxu0
  %v1760 = vadd.f32 0.0, %v1759
  %1761 = vmatprep.mubr.f32.mxu0 0.0
  %1762 = vmatmul.mubr.f32.gmra.mrb[0].mxu0 %v929
  %v1763 = vpop.f32.mrb[0].mxu0
  %v1764 = vadd.f32 0.0, %v1763
  %v1765 = vpop.f32.mrb[0].mxu0
  %v1766 = vadd.f32 0.0, %v1765
  %1767 = vmatprep.mubr.f32.mxu0 0.0
  %1768 = vmatmul.mubr.f32.gmra.mrb[0].mxu0 %v935
  %v1769 = vpop.f32.mrb[0].mxu0
  %v1770 = vadd.f32 0.0, %v1769
  %v1771 = vpop.f32.mrb[0].mxu0
  %v1772 = vadd.f32 0.0, %v1771
  %1773 = vmatprep.mubr.f32.mxu0 0.0
  %1774 = vmatmul.mubr.f32.gmra.mrb[0].mxu0 %v941
  %v1775 = vpop.f32.mrb[0].mxu0
  %v1776 = vadd.f32 0.0, %v1775
  %v1777 = vpop.f32.mrb[0].mxu0
  %v1778 = vadd.f32 0.0, %v1777
  %1779 = vmatprep.mubr.f32.mxu0 0.0
  %1780 = vmatmul.mubr.f32.gmra.mrb[0].mxu0 %v947
  %v1781 = vpop.f32.mrb[0].mxu0
  %v1782 = vadd.f32 0.0, %v1781
  %v1783 = vpop.f32.mrb[0].mxu0
  %v1784 = vadd.f32 0.0, %v1783
  %1785 = vmatprep.mubr.f32.mxu0 0.0
  %1786 = vmatmul.mubr.f32.gmra.mrb[0].mxu0 %v953
  %v1787 = vpop.f32.mrb[0].mxu0
  %v1788 = vadd.f32 0.0, %v1787
  %v1789 = vpop.f32.mrb[0].mxu0
  %v1790 = vadd.f32 0.0, %v1789
  %1791 = vmatprep.mubr.f32.mxu0 0.0
  %1792 = vmatmul.mubr.f32.gmra.mrb[0].mxu0 %v959
  %v1793 = vpop.f32.mrb[0].mxu0
  %v1794 = vadd.f32 0.0, %v1793
  %v1795 = vpop.f32.mrb[0].mxu0
  %v1796 = vadd.f32 0.0, %v1795
  %1797 = vmatprep.mubr.f32.mxu0 0.0
  %1798 = vmatmul.mubr.f32.gmra.mrb[0].mxu0 %v965
  %v1799 = vpop.f32.mrb[0].mxu0
  %v1800 = vadd.f32 0.0, %v1799
  %v1801 = vpop.f32.mrb[0].mxu0
  %v1802 = vadd.f32 0.0, %v1801
  %1803 = vmatprep.mubr.f32.mxu0 0.0
  %1804 = vmatmul.mubr.f32.gmra.mrb[0].mxu0 %v971
  %v1805 = vpop.f32.mrb[0].mxu0
  %v1806 = vadd.f32 0.0, %v1805
  %v1807 = vpop.f32.mrb[0].mxu0
  %v1808 = vadd.f32 0.0, %v1807
  %1809 = vmatprep.mubr.f32.mxu0 0.0
  %1810 = vmatmul.mubr.f32.gmra.mrb[0].mxu0 %v977
  %v1811 = vpop.f32.mrb[0].mxu0
  %v1812 = vadd.f32 0.0, %v1811
  %v1813 = vpop.f32.mrb[0].mxu0
  %v1814 = vadd.f32 0.0, %v1813
  %1815 = vmatprep.mubr.f32.mxu0 0.0
  %1816 = vmatmul.mubr.f32.gmra.mrb[0].mxu0 %v983
  %v1817 = vpop.f32.mrb[0].mxu0
  %v1818 = vadd.f32 0.0, %v1817
  %v1819 = vpop.f32.mrb[0].mxu0
  %v1820 = vadd.f32 0.0, %v1819
  %1821 = vmatprep.mubr.f32.mxu0 0.0
  %1822 = vmatmul.mubr.f32.gmra.mrb[0].mxu0 %v989
  %v1823 = vpop.f32.mrb[0].mxu0
  %v1824 = vadd.f32 0.0, %v1823
  %v1825 = vpop.f32.mrb[0].mxu0
  %v1826 = vadd.f32 0.0, %v1825
  %1827 = vdwg.mxu0
  %1828 = vmatprep.subr.mxu0 0.0
  %1829 = vmatpush1.xpose.msra.mxu0 %v949
  %1830 = vmatprep.subr.mxu0 0.0
  %1831 = vmatpush1.xpose.msra.mxu0 %v955
  %1832 = vmatprep.subr.mxu0 0.0
  %1833 = vmatpush1.xpose.msra.mxu0 %v961
  %1834 = vmatprep.subr.mxu0 0.0
  %1835 = vmatpush1.xpose.msra.mxu0 %v967
  %1836 = vmatprep.subr.mxu0 0.0
  %1837 = vmatpush1.xpose.msra.mxu0 %v973
  %1838 = vmatprep.subr.mxu0 0.0
  %1839 = vmatpush1.xpose.msra.mxu0 %v979
  %1840 = vmatprep.subr.mxu0 0.0
  %1841 = vmatpush1.xpose.msra.mxu0 %v985
  %1842 = vmatprep.subr.mxu0 0.0
  %1843 = vmatpush1.xpose.msra.mxu0 %v991
  %1844 = vmatprep.subr.mxu0 0.0
  %1845 = vmatpush1.xpose.msra.mxu0 0.0
  %1846 = vmatprep.subr.mxu0 0.0
  %1847 = vmatpush1.xpose.msra.mxu0 0.0
  %1848 = vmatprep.subr.mxu0 0.0
  %1849 = vmatpush1.xpose.msra.mxu0 0.0
  %1850 = vmatprep.subr.mxu0 0.0
  %1851 = vmatpush1.xpose.msra.mxu0 0.0
  %1852 = vmatprep.subr.mxu0 0.0
  %1853 = vmatpush1.xpose.msra.mxu0 0.0
  %1854 = vmatprep.subr.mxu0 0.0
  %1855 = vmatpush1.xpose.msra.mxu0 0.0
  %1856 = vmatprep.subr.mxu0 0.0
  %1857 = vmatpush1.xpose.msra.mxu0 0.0
  %1858 = vmatprep.subr.mxu0 0.0
  %1859 = vmatpush1.xpose.msra.mxu0 0.0
  %1860 = vmatprep.subr.mxu0 0.0
  %1861 = vmatpush1.xpose.msra.mxu0 0.0
  %1862 = vmatprep.subr.mxu0 0.0
  %1863 = vmatpush1.xpose.msra.mxu0 0.0
  %1864 = vmatprep.subr.mxu0 0.0
  %1865 = vmatpush1.xpose.msra.mxu0 0.0
  %1866 = vmatprep.subr.mxu0 0.0
  %1867 = vmatpush1.xpose.msra.mxu0 0.0
  %1868 = vmatprep.subr.mxu0 0.0
  %1869 = vmatpush1.xpose.msra.mxu0 0.0
  %1870 = vmatprep.subr.mxu0 0.0
  %1871 = vmatpush1.xpose.msra.mxu0 0.0
  %1872 = vmatprep.subr.mxu0 0.0
  %1873 = vmatpush1.xpose.msra.mxu0 0.0
  %1874 = vmatprep.subr.mxu0 0.0
  %1875 = vmatpush1.xpose.msra.mxu0 0.0
  %1876 = vmatprep.subr.mxu0 0.0
  %1877 = vmatpush1.xpose.msra.mxu0 0.0
  %1878 = vmatprep.subr.mxu0 0.0
  %1879 = vmatpush1.xpose.msra.mxu0 0.0
  %1880 = vmatprep.subr.mxu0 0.0
  %1881 = vmatpush1.xpose.msra.mxu0 0.0
  %1882 = vmatprep.subr.mxu0 0.0
  %1883 = vmatpush1.xpose.msra.mxu0 0.0
  %1884 = vmatprep.subr.mxu0 0.0
  %1885 = vmatpush1.xpose.msra.mxu0 0.0
  %1886 = vmatprep.subr.mxu0 0.0
  %1887 = vmatpush1.xpose.msra.mxu0 0.0
  %1888 = vmatprep.subr.mxu0 0.0
  %1889 = vmatpush1.xpose.msra.mxu0 0.0
  %1890 = vmatprep.subr.mxu0 0.0
  %1891 = vmatpush1.xpose.msra.mxu0 0.0
  %1892 = vmatprep.mubr.f32.mxu0 0.0
  %1893 = vmatmul.mubr.f32.gmra.mrb[0].mxu0 %v755
  %v1894 = vpop.f32.mrb[0].mxu0
  %v1895 = vadd.f32 0.0, %v1894
  %v1896 = vpop.f32.mrb[0].mxu0
  %1897 = vmatprep.mubr.f32.mxu0 0.0
  %1898 = vmatmul.mubr.f32.gmra.mrb[0].mxu0 %v761
  %v1899 = vpop.f32.mrb[0].mxu0
  %v1900 = vadd.f32 0.0, %v1899
  %v1901 = vpop.f32.mrb[0].mxu0
  %1902 = vmatprep.mubr.f32.mxu0 0.0
  %1903 = vmatmul.mubr.f32.gmra.mrb[0].mxu0 %v767
  %v1904 = vpop.f32.mrb[0].mxu0
  %v1905 = vadd.f32 0.0, %v1904
  %v1906 = vpop.f32.mrb[0].mxu0
  %1907 = vmatprep.mubr.f32.mxu0 0.0
  %1908 = vmatmul.mubr.f32.gmra.mrb[0].mxu0 %v773
  %v1909 = vpop.f32.mrb[0].mxu0
  %v1910 = vadd.f32 0.0, %v1909
  %v1911 = vpop.f32.mrb[0].mxu0
  %1912 = vmatprep.mubr.f32.mxu0 0.0
  %1913 = vmatmul.mubr.f32.gmra.mrb[0].mxu0 %v779
  %v1914 = vpop.f32.mrb[0].mxu0
  %v1915 = vadd.f32 0.0, %v1914
  %v1916 = vpop.f32.mrb[0].mxu0
  %1917 = vmatprep.mubr.f32.mxu0 0.0
  %1918 = vmatmul.mubr.f32.gmra.mrb[0].mxu0 %v785
  %v1919 = vpop.f32.mrb[0].mxu0
  %v1920 = vadd.f32 0.0, %v1919
  %v1921 = vpop.f32.mrb[0].mxu0
  %1922 = vmatprep.mubr.f32.mxu0 0.0
  %1923 = vmatmul.mubr.f32.gmra.mrb[0].mxu0 %v791
  %v1924 = vpop.f32.mrb[0].mxu0
  %v1925 = vadd.f32 0.0, %v1924
  %v1926 = vpop.f32.mrb[0].mxu0
  %1927 = vmatprep.mubr.f32.mxu0 0.0
  %1928 = vmatmul.mubr.f32.gmra.mrb[0].mxu0 %v797
  %v1929 = vpop.f32.mrb[0].mxu0
  %v1930 = vadd.f32 0.0, %v1929
  %v1931 = vpop.f32.mrb[0].mxu0
  %1932 = vmatprep.mubr.f32.mxu0 0.0
  %1933 = vmatmul.mubr.f32.gmra.mrb[0].mxu0 %v803
  %v1934 = vpop.f32.mrb[0].mxu0
  %v1935 = vadd.f32 0.0, %v1934
  %v1936 = vpop.f32.mrb[0].mxu0
  %1937 = vmatprep.mubr.f32.mxu0 0.0
  %1938 = vmatmul.mubr.f32.gmra.mrb[0].mxu0 %v809
  %v1939 = vpop.f32.mrb[0].mxu0
  %v1940 = vadd.f32 0.0, %v1939
  %v1941 = vpop.f32.mrb[0].mxu0
  %1942 = vmatprep.mubr.f32.mxu0 0.0
  %1943 = vmatmul.mubr.f32.gmra.mrb[0].mxu0 %v815
  %v1944 = vpop.f32.mrb[0].mxu0
  %v1945 = vadd.f32 0.0, %v1944
  %v1946 = vpop.f32.mrb[0].mxu0
  %1947 = vmatprep.mubr.f32.mxu0 0.0
  %1948 = vmatmul.mubr.f32.gmra.mrb[0].mxu0 %v821
  %v1949 = vpop.f32.mrb[0].mxu0
  %v1950 = vadd.f32 0.0, %v1949
  %v1951 = vpop.f32.mrb[0].mxu0
  %1952 = vmatprep.mubr.f32.mxu0 0.0
  %1953 = vmatmul.mubr.f32.gmra.mrb[0].mxu0 %v827
  %v1954 = vpop.f32.mrb[0].mxu0
  %v1955 = vadd.f32 0.0, %v1954
  %v1956 = vpop.f32.mrb[0].mxu0
  %1957 = vmatprep.mubr.f32.mxu0 0.0
  %1958 = vmatmul.mubr.f32.gmra.mrb[0].mxu0 %v833
  %v1959 = vpop.f32.mrb[0].mxu0
  %v1960 = vadd.f32 0.0, %v1959
  %v1961 = vpop.f32.mrb[0].mxu0
  %1962 = vmatprep.mubr.f32.mxu0 0.0
  %1963 = vmatmul.mubr.f32.gmra.mrb[0].mxu0 %v839
  %v1964 = vpop.f32.mrb[0].mxu0
  %v1965 = vadd.f32 0.0, %v1964
  %v1966 = vpop.f32.mrb[0].mxu0
  %1967 = vmatprep.mubr.f32.mxu0 0.0
  %1968 = vmatmul.mubr.f32.gmra.mrb[0].mxu0 %v845
  %v1969 = vpop.f32.mrb[0].mxu0
  %v1970 = vadd.f32 0.0, %v1969
  %v1971 = vpop.f32.mrb[0].mxu0
  %1972 = vmatprep.mubr.f32.mxu0 0.0
  %1973 = vmatmul.mubr.f32.gmra.mrb[0].mxu0 %v851
  %v1974 = vpop.f32.mrb[0].mxu0
  %v1975 = vadd.f32 0.0, %v1974
  %v1976 = vpop.f32.mrb[0].mxu0
  %1977 = vmatprep.mubr.f32.mxu0 0.0
  %1978 = vmatmul.mubr.f32.gmra.mrb[0].mxu0 %v857
  %v1979 = vpop.f32.mrb[0].mxu0
  %v1980 = vadd.f32 0.0, %v1979
  %v1981 = vpop.f32.mrb[0].mxu0
  %1982 = vmatprep.mubr.f32.mxu0 0.0
  %1983 = vmatmul.mubr.f32.gmra.mrb[0].mxu0 %v863
  %v1984 = vpop.f32.mrb[0].mxu0
  %v1985 = vadd.f32 0.0, %v1984
  %v1986 = vpop.f32.mrb[0].mxu0
  %1987 = vmatprep.mubr.f32.mxu0 0.0
  %1988 = vmatmul.mubr.f32.gmra.mrb[0].mxu0 %v869
  %v1989 = vpop.f32.mrb[0].mxu0
  %v1990 = vadd.f32 0.0, %v1989
  %v1991 = vpop.f32.mrb[0].mxu0
  %1992 = vmatprep.mubr.f32.mxu0 0.0
  %1993 = vmatmul.mubr.f32.gmra.mrb[0].mxu0 %v875
  %v1994 = vpop.f32.mrb[0].mxu0
  %v1995 = vadd.f32 0.0, %v1994
  %v1996 = vpop.f32.mrb[0].mxu0
  %1997 = vmatprep.mubr.f32.mxu0 0.0
  %1998 = vmatmul.mubr.f32.gmra.mrb[0].mxu0 %v881
  %v1999 = vpop.f32.mrb[0].mxu0
  %v2000 = vadd.f32 0.0, %v1999
  %v2001 = vpop.f32.mrb[0].mxu0
  %2002 = vmatprep.mubr.f32.mxu0 0.0
  %2003 = vmatmul.mubr.f32.gmra.mrb[0].mxu0 %v887
  %v2004 = vpop.f32.mrb[0].mxu0
  %v2005 = vadd.f32 0.0, %v2004
  %v2006 = vpop.f32.mrb[0].mxu0
  %2007 = vmatprep.mubr.f32.mxu0 0.0
  %2008 = vmatmul.mubr.f32.gmra.mrb[0].mxu0 %v893
  %v2009 = vpop.f32.mrb[0].mxu0
  %v2010 = vadd.f32 0.0, %v2009
  %v2011 = vpop.f32.mrb[0].mxu0
  %2012 = vmatprep.mubr.f32.mxu0 0.0
  %2013 = vmatmul.mubr.f32.gmra.mrb[0].mxu0 %v899
  %v2014 = vpop.f32.mrb[0].mxu0
  %v2015 = vadd.f32 0.0, %v2014
  %v2016 = vpop.f32.mrb[0].mxu0
  %2017 = vmatprep.mubr.f32.mxu0 0.0
  %2018 = vmatmul.mubr.f32.gmra.mrb[0].mxu0 %v905
  %v2019 = vpop.f32.mrb[0].mxu0
  %v2020 = vadd.f32 0.0, %v2019
  %v2021 = vpop.f32.mrb[0].mxu0
  %2022 = vmatprep.mubr.f32.mxu0 0.0
  %2023 = vmatmul.mubr.f32.gmra.mrb[0].mxu0 %v911
  %v2024 = vpop.f32.mrb[0].mxu0
  %v2025 = vadd.f32 0.0, %v2024
  %v2026 = vpop.f32.mrb[0].mxu0
  %2027 = vmatprep.mubr.f32.mxu0 0.0
  %2028 = vmatmul.mubr.f32.gmra.mrb[0].mxu0 %v917
  %v2029 = vpop.f32.mrb[0].mxu0
  %v2030 = vadd.f32 0.0, %v2029
  %v2031 = vpop.f32.mrb[0].mxu0
  %2032 = vmatprep.mubr.f32.mxu0 0.0
  %2033 = vmatmul.mubr.f32.gmra.mrb[0].mxu0 %v923
  %v2034 = vpop.f32.mrb[0].mxu0
  %v2035 = vadd.f32 0.0, %v2034
  %v2036 = vpop.f32.mrb[0].mxu0
  %2037 = vmatprep.mubr.f32.mxu0 0.0
  %2038 = vmatmul.mubr.f32.gmra.mrb[0].mxu0 %v929
  %v2039 = vpop.f32.mrb[0].mxu0
  %v2040 = vadd.f32 0.0, %v2039
  %v2041 = vpop.f32.mrb[0].mxu0
  %2042 = vmatprep.mubr.f32.mxu0 0.0
  %2043 = vmatmul.mubr.f32.gmra.mrb[0].mxu0 %v935
  %v2044 = vpop.f32.mrb[0].mxu0
  %v2045 = vadd.f32 0.0, %v2044
  %v2046 = vpop.f32.mrb[0].mxu0
  %2047 = vmatprep.mubr.f32.mxu0 0.0
  %2048 = vmatmul.mubr.f32.gmra.mrb[0].mxu0 %v941
  %v2049 = vpop.f32.mrb[0].mxu0
  %v2050 = vadd.f32 0.0, %v2049
  %v2051 = vpop.f32.mrb[0].mxu0
  %2052 = vmatprep.mubr.f32.mxu0 0.0
  %2053 = vmatmul.mubr.f32.gmra.mrb[0].mxu0 %v947
  %v2054 = vpop.f32.mrb[0].mxu0
  %v2055 = vadd.f32 0.0, %v2054
  %v2056 = vpop.f32.mrb[0].mxu0
  %2057 = vmatprep.mubr.f32.mxu0 0.0
  %2058 = vmatmul.mubr.f32.gmra.mrb[0].mxu0 %v953
  %v2059 = vpop.f32.mrb[0].mxu0
  %v2060 = vadd.f32 0.0, %v2059
  %v2061 = vpop.f32.mrb[0].mxu0
  %2062 = vmatprep.mubr.f32.mxu0 0.0
  %2063 = vmatmul.mubr.f32.gmra.mrb[0].mxu0 %v959
  %v2064 = vpop.f32.mrb[0].mxu0
  %v2065 = vadd.f32 0.0, %v2064
  %v2066 = vpop.f32.mrb[0].mxu0
  %2067 = vmatprep.mubr.f32.mxu0 0.0
  %2068 = vmatmul.mubr.f32.gmra.mrb[0].mxu0 %v965
  %v2069 = vpop.f32.mrb[0].mxu0
  %v2070 = vadd.f32 0.0, %v2069
  %v2071 = vpop.f32.mrb[0].mxu0
  %2072 = vmatprep.mubr.f32.mxu0 0.0
  %2073 = vmatmul.mubr.f32.gmra.mrb[0].mxu0 %v971
  %v2074 = vpop.f32.mrb[0].mxu0
  %v2075 = vadd.f32 0.0, %v2074
  %v2076 = vpop.f32.mrb[0].mxu0
  %2077 = vmatprep.mubr.f32.mxu0 0.0
  %2078 = vmatmul.mubr.f32.gmra.mrb[0].mxu0 %v977
  %v2079 = vpop.f32.mrb[0].mxu0
  %v2080 = vadd.f32 0.0, %v2079
  %v2081 = vpop.f32.mrb[0].mxu0
  %2082 = vmatprep.mubr.f32.mxu0 0.0
  %2083 = vmatmul.mubr.f32.gmra.mrb[0].mxu0 %v983
  %v2084 = vpop.f32.mrb[0].mxu0
  %v2085 = vadd.f32 0.0, %v2084
  %v2086 = vpop.f32.mrb[0].mxu0
  %2087 = vmatprep.mubr.f32.mxu0 0.0
  %2088 = vmatmul.mubr.f32.gmra.mrb[0].mxu0 %v989
  %v2089 = vpop.f32.mrb[0].mxu0
  %v2090 = vadd.f32 0.0, %v2089
  %v2091 = vpop.f32.mrb[0].mxu0
  %2092 = vdwg.mxu0
  %v2093 = vlaneseq
  %v2094 = vshrl.u32 %v2093, 7
  %v2095 = vadd.s32 %v2094, 8
  %v2096 = vadd.s32 %v2094, 16
  %v2097 = vadd.s32 %v2094, 24
  %v2098 = vadd.s32 %v2094, 32
  %v2099 = vadd.s32 %v2094, 40
  %v2100 = vadd.s32 %v2094, 48
  %v2101 = vadd.s32 %v2094, 56
  %v2102 = vadd.s32 %v2094, 64
  %v2103 = vadd.s32 %v2094, 72
  %v2104 = vadd.s32 %v2094, 80
  %v2105 = vadd.s32 %v2094, 88
  %v2106 = vadd.s32 %v2094, 96
  %v2107 = vadd.s32 %v2094, 104
  %v2108 = vadd.s32 %v2094, 112
  %v2109 = vadd.s32 %v2094, 120
  %v2110 = vadd.s32 %v2094, 128
  %v2111 = vadd.s32 %v2094, 136
  %v2112 = vadd.s32 %v2094, 144
  %v2113 = vadd.s32 %v2094, 152
  %v2114 = vadd.s32 %v2094, 160
  %v2115 = vadd.s32 %v2094, 168
  %v2116 = vadd.s32 %v2094, 176
  %v2117 = vadd.s32 %v2094, 184
  %v2118 = vadd.s32 %v2094, 192
  %v2119 = vadd.s32 %v2094, 200
  %v2120 = vadd.s32 %v2094, 208
  %v2121 = vadd.s32 %v2094, 216
  %v2122 = vadd.s32 %v2094, 224
  %v2123 = vadd.s32 %v2094, 232
  %v2124 = vadd.s32 %v2094, 240
  %v2125 = vadd.s32 %v2094, 248
  %v2126 = vadd.s32 %v2094, 256
  %v2127 = vadd.s32 %v2094, 264
  %v2128 = vadd.s32 %v2094, 272
  %v2129 = vadd.s32 %v2094, 280
  %v2130 = vadd.s32 %v2094, 288
  %v2131 = vadd.s32 %v2094, 296
  %v2132 = vadd.s32 %v2094, 304
  %v2133 = vadd.s32 %v2094, 312
  %v2134 = vlaneseq
  %v2135 = vand.u32 %v2134, 127
  %v2136 = vadd.s32 %v2135, 128
  %v2137 = vadd.s32 %v2135, 256
  %v2138 = vcvt.s32.f32 %v2094
  %v2139 = vcvt.s32.f32 %v2095
  %v2140 = vcvt.s32.f32 %v2096
  %v2141 = vcvt.s32.f32 %v2097
  %v2142 = vcvt.s32.f32 %v2098
  %v2143 = vcvt.s32.f32 %v2099
  %v2144 = vcvt.s32.f32 %v2100
  %v2145 = vcvt.s32.f32 %v2101
  %v2146 = vcvt.s32.f32 %v2102
  %v2147 = vcvt.s32.f32 %v2103
  %v2148 = vcvt.s32.f32 %v2104
  %v2149 = vcvt.s32.f32 %v2105
  %v2150 = vcvt.s32.f32 %v2106
  %v2151 = vcvt.s32.f32 %v2107
  %v2152 = vcvt.s32.f32 %v2108
  %v2153 = vcvt.s32.f32 %v2109
  %v2154 = vcvt.s32.f32 %v2110
  %v2155 = vcvt.s32.f32 %v2111
  %v2156 = vcvt.s32.f32 %v2112
  %v2157 = vcvt.s32.f32 %v2113
  %v2158 = vcvt.s32.f32 %v2114
  %v2159 = vcvt.s32.f32 %v2115
  %v2160 = vcvt.s32.f32 %v2116
  %v2161 = vcvt.s32.f32 %v2117
  %v2162 = vcvt.s32.f32 %v2118
  %v2163 = vcvt.s32.f32 %v2119
  %v2164 = vcvt.s32.f32 %v2120
  %v2165 = vcvt.s32.f32 %v2121
  %v2166 = vcvt.s32.f32 %v2122
  %v2167 = vcvt.s32.f32 %v2123
  %v2168 = vcvt.s32.f32 %v2124
  %v2169 = vcvt.s32.f32 %v2125
  %v2170 = vcvt.s32.f32 %v2126
  %v2171 = vcvt.s32.f32 %v2127
  %v2172 = vcvt.s32.f32 %v2128
  %v2173 = vcvt.s32.f32 %v2129
  %v2174 = vcvt.s32.f32 %v2130
  %v2175 = vcvt.s32.f32 %v2131
  %v2176 = vcvt.s32.f32 %v2132
  %v2177 = vcvt.s32.f32 %v2133
  %v2178 = vadd.f32 %v2138, 0.5
  %v2179 = vadd.f32 %v2139, 0.5
  %v2180 = vadd.f32 %v2140, 0.5
  %v2181 = vadd.f32 %v2141, 0.5
  %v2182 = vadd.f32 %v2142, 0.5
  %v2183 = vadd.f32 %v2143, 0.5
  %v2184 = vadd.f32 %v2144, 0.5
  %v2185 = vadd.f32 %v2145, 0.5
  %v2186 = vadd.f32 %v2146, 0.5
  %v2187 = vadd.f32 %v2147, 0.5
  %v2188 = vadd.f32 %v2148, 0.5
  %v2189 = vadd.f32 %v2149, 0.5
  %v2190 = vadd.f32 %v2150, 0.5
  %v2191 = vadd.f32 %v2151, 0.5
  %v2192 = vadd.f32 %v2152, 0.5
  %v2193 = vadd.f32 %v2153, 0.5
  %v2194 = vadd.f32 %v2154, 0.5
  %v2195 = vadd.f32 %v2155, 0.5
  %v2196 = vadd.f32 %v2156, 0.5
  %v2197 = vadd.f32 %v2157, 0.5
  %v2198 = vadd.f32 %v2158, 0.5
  %v2199 = vadd.f32 %v2159, 0.5
  %v2200 = vadd.f32 %v2160, 0.5
  %v2201 = vadd.f32 %v2161, 0.5
  %v2202 = vadd.f32 %v2162, 0.5
  %v2203 = vadd.f32 %v2163, 0.5
  %v2204 = vadd.f32 %v2164, 0.5
  %v2205 = vadd.f32 %v2165, 0.5
  %v2206 = vadd.f32 %v2166, 0.5
  %v2207 = vadd.f32 %v2167, 0.5
  %v2208 = vadd.f32 %v2168, 0.5
  %v2209 = vadd.f32 %v2169, 0.5
  %v2210 = vadd.f32 %v2170, 0.5
  %v2211 = vadd.f32 %v2171, 0.5
  %v2212 = vadd.f32 %v2172, 0.5
  %v2213 = vadd.f32 %v2173, 0.5
  %v2214 = vadd.f32 %v2174, 0.5
  %v2215 = vadd.f32 %v2175, 0.5
  %v2216 = vadd.f32 %v2176, 0.5
  %v2217 = vadd.f32 %v2177, 0.5
  %v2218 = vmul.f32 %v2178, 0.1
  %v2219 = vmul.f32 %v2179, 0.1
  %v2220 = vmul.f32 %v2180, 0.1
  %v2221 = vmul.f32 %v2181, 0.1
  %v2222 = vmul.f32 %v2182, 0.1
  %v2223 = vmul.f32 %v2183, 0.1
  %v2224 = vmul.f32 %v2184, 0.1
  %v2225 = vmul.f32 %v2185, 0.1
  %v2226 = vmul.f32 %v2186, 0.1
  %v2227 = vmul.f32 %v2187, 0.1
  %v2228 = vmul.f32 %v2188, 0.1
  %v2229 = vmul.f32 %v2189, 0.1
  %v2230 = vmul.f32 %v2190, 0.1
  %v2231 = vmul.f32 %v2191, 0.1
  %v2232 = vmul.f32 %v2192, 0.1
  %v2233 = vmul.f32 %v2193, 0.1
  %v2234 = vmul.f32 %v2194, 0.1
  %v2235 = vmul.f32 %v2195, 0.1
  %v2236 = vmul.f32 %v2196, 0.1
  %v2237 = vmul.f32 %v2197, 0.1
  %v2238 = vmul.f32 %v2198, 0.1
  %v2239 = vmul.f32 %v2199, 0.1
  %v2240 = vmul.f32 %v2200, 0.1
  %v2241 = vmul.f32 %v2201, 0.1
  %v2242 = vmul.f32 %v2202, 0.1
  %v2243 = vmul.f32 %v2203, 0.1
  %v2244 = vmul.f32 %v2204, 0.1
  %v2245 = vmul.f32 %v2205, 0.1
  %v2246 = vmul.f32 %v2206, 0.1
  %v2247 = vmul.f32 %v2207, 0.1
  %v2248 = vmul.f32 %v2208, 0.1
  %v2249 = vmul.f32 %v2209, 0.1
  %v2250 = vmul.f32 %v2210, 0.1
  %v2251 = vmul.f32 %v2211, 0.1
  %v2252 = vmul.f32 %v2212, 0.1
  %v2253 = vmul.f32 %v2213, 0.1
  %v2254 = vmul.f32 %v2214, 0.1
  %v2255 = vmul.f32 %v2215, 0.1
  %v2256 = vmul.f32 %v2216, 0.1
  %v2257 = vmul.f32 %v2217, 0.1
  %v2258 = vfloor.f32 %v2218
  %v2259 = vfloor.f32 %v2219
  %v2260 = vfloor.f32 %v2220
  %v2261 = vfloor.f32 %v2221
  %v2262 = vfloor.f32 %v2222
  %v2263 = vfloor.f32 %v2223
  %v2264 = vfloor.f32 %v2224
  %v2265 = vfloor.f32 %v2225
  %v2266 = vfloor.f32 %v2226
  %v2267 = vfloor.f32 %v2227
  %v2268 = vfloor.f32 %v2228
  %v2269 = vfloor.f32 %v2229
  %v2270 = vfloor.f32 %v2230
  %v2271 = vfloor.f32 %v2231
  %v2272 = vfloor.f32 %v2232
  %v2273 = vfloor.f32 %v2233
  %v2274 = vfloor.f32 %v2234
  %v2275 = vfloor.f32 %v2235
  %v2276 = vfloor.f32 %v2236
  %v2277 = vfloor.f32 %v2237
  %v2278 = vfloor.f32 %v2238
  %v2279 = vfloor.f32 %v2239
  %v2280 = vfloor.f32 %v2240
  %v2281 = vfloor.f32 %v2241
  %v2282 = vfloor.f32 %v2242
  %v2283 = vfloor.f32 %v2243
  %v2284 = vfloor.f32 %v2244
  %v2285 = vfloor.f32 %v2245
  %v2286 = vfloor.f32 %v2246
  %v2287 = vfloor.f32 %v2247
  %v2288 = vfloor.f32 %v2248
  %v2289 = vfloor.f32 %v2249
  %v2290 = vfloor.f32 %v2250
  %v2291 = vfloor.f32 %v2251
  %v2292 = vfloor.f32 %v2252
  %v2293 = vfloor.f32 %v2253
  %v2294 = vfloor.f32 %v2254
  %v2295 = vfloor.f32 %v2255
  %v2296 = vfloor.f32 %v2256
  %v2297 = vfloor.f32 %v2257
  %v2298 = vcvt.s32.f32 %v2135
  %v2299 = vcvt.s32.f32 %v2136
  %v2300 = vcvt.s32.f32 %v2137
  %v2301 = vadd.f32 %v2298, 0.5
  %v2302 = vadd.f32 %v2299, 0.5
  %v2303 = vadd.f32 %v2300, 0.5
  %v2304 = vmul.f32 %v2301, 0.1
  %v2305 = vmul.f32 %v2302, 0.1
  %v2306 = vmul.f32 %v2303, 0.1
  %v2307 = vfloor.f32 %v2304
  %v2308 = vfloor.f32 %v2305
  %v2309 = vfloor.f32 %v2306
  %vm2310 = vcmp.eq.f32.partialorder %v2258, %v2307
  %vm2311 = vcmp.eq.f32.partialorder %v2258, %v2308
  %vm2312 = vcmp.eq.f32.partialorder %v2258, %v2309
  %vm2313 = vcmp.eq.f32.partialorder %v2259, %v2307
  %vm2314 = vcmp.eq.f32.partialorder %v2259, %v2308
  %vm2315 = vcmp.eq.f32.partialorder %v2259, %v2309
  %vm2316 = vcmp.eq.f32.partialorder %v2260, %v2307
  %vm2317 = vcmp.eq.f32.partialorder %v2260, %v2308
  %vm2318 = vcmp.eq.f32.partialorder %v2260, %v2309
  %vm2319 = vcmp.eq.f32.partialorder %v2261, %v2307
  %vm2320 = vcmp.eq.f32.partialorder %v2261, %v2308
  %vm2321 = vcmp.eq.f32.partialorder %v2261, %v2309
  %vm2322 = vcmp.eq.f32.partialorder %v2262, %v2307
  %vm2323 = vcmp.eq.f32.partialorder %v2262, %v2308
  %vm2324 = vcmp.eq.f32.partialorder %v2262, %v2309
  %vm2325 = vcmp.eq.f32.partialorder %v2263, %v2307
  %vm2326 = vcmp.eq.f32.partialorder %v2263, %v2308
  %vm2327 = vcmp.eq.f32.partialorder %v2263, %v2309
  %vm2328 = vcmp.eq.f32.partialorder %v2264, %v2307
  %vm2329 = vcmp.eq.f32.partialorder %v2264, %v2308
  %vm2330 = vcmp.eq.f32.partialorder %v2264, %v2309
  %vm2331 = vcmp.eq.f32.partialorder %v2265, %v2307
  %vm2332 = vcmp.eq.f32.partialorder %v2265, %v2308
  %vm2333 = vcmp.eq.f32.partialorder %v2265, %v2309
  %vm2334 = vcmp.eq.f32.partialorder %v2266, %v2307
  %vm2335 = vcmp.eq.f32.partialorder %v2266, %v2308
  %vm2336 = vcmp.eq.f32.partialorder %v2266, %v2309
  %vm2337 = vcmp.eq.f32.partialorder %v2267, %v2307
  %vm2338 = vcmp.eq.f32.partialorder %v2267, %v2308
  %vm2339 = vcmp.eq.f32.partialorder %v2267, %v2309
  %vm2340 = vcmp.eq.f32.partialorder %v2268, %v2307
  %vm2341 = vcmp.eq.f32.partialorder %v2268, %v2308
  %vm2342 = vcmp.eq.f32.partialorder %v2268, %v2309
  %vm2343 = vcmp.eq.f32.partialorder %v2269, %v2307
  %vm2344 = vcmp.eq.f32.partialorder %v2269, %v2308
  %vm2345 = vcmp.eq.f32.partialorder %v2269, %v2309
  %vm2346 = vcmp.eq.f32.partialorder %v2270, %v2307
  %vm2347 = vcmp.eq.f32.partialorder %v2270, %v2308
  %vm2348 = vcmp.eq.f32.partialorder %v2270, %v2309
  %vm2349 = vcmp.eq.f32.partialorder %v2271, %v2307
  %vm2350 = vcmp.eq.f32.partialorder %v2271, %v2308
  %vm2351 = vcmp.eq.f32.partialorder %v2271, %v2309
  %vm2352 = vcmp.eq.f32.partialorder %v2272, %v2307
  %vm2353 = vcmp.eq.f32.partialorder %v2272, %v2308
  %vm2354 = vcmp.eq.f32.partialorder %v2272, %v2309
  %vm2355 = vcmp.eq.f32.partialorder %v2273, %v2307
  %vm2356 = vcmp.eq.f32.partialorder %v2273, %v2308
  %vm2357 = vcmp.eq.f32.partialorder %v2273, %v2309
  %vm2358 = vcmp.eq.f32.partialorder %v2274, %v2307
  %vm2359 = vcmp.eq.f32.partialorder %v2274, %v2308
  %vm2360 = vcmp.eq.f32.partialorder %v2274, %v2309
  %vm2361 = vcmp.eq.f32.partialorder %v2275, %v2307
  %vm2362 = vcmp.eq.f32.partialorder %v2275, %v2308
  %vm2363 = vcmp.eq.f32.partialorder %v2275, %v2309
  %vm2364 = vcmp.eq.f32.partialorder %v2276, %v2307
  %vm2365 = vcmp.eq.f32.partialorder %v2276, %v2308
  %vm2366 = vcmp.eq.f32.partialorder %v2276, %v2309
  %vm2367 = vcmp.eq.f32.partialorder %v2277, %v2307
  %vm2368 = vcmp.eq.f32.partialorder %v2277, %v2308
  %vm2369 = vcmp.eq.f32.partialorder %v2277, %v2309
  %vm2370 = vcmp.eq.f32.partialorder %v2278, %v2307
  %vm2371 = vcmp.eq.f32.partialorder %v2278, %v2308
  %vm2372 = vcmp.eq.f32.partialorder %v2278, %v2309
  %vm2373 = vcmp.eq.f32.partialorder %v2279, %v2307
  %vm2374 = vcmp.eq.f32.partialorder %v2279, %v2308
  %vm2375 = vcmp.eq.f32.partialorder %v2279, %v2309
  %vm2376 = vcmp.eq.f32.partialorder %v2280, %v2307
  %vm2377 = vcmp.eq.f32.partialorder %v2280, %v2308
  %vm2378 = vcmp.eq.f32.partialorder %v2280, %v2309
  %vm2379 = vcmp.eq.f32.partialorder %v2281, %v2307
  %vm2380 = vcmp.eq.f32.partialorder %v2281, %v2308
  %vm2381 = vcmp.eq.f32.partialorder %v2281, %v2309
  %vm2382 = vcmp.eq.f32.partialorder %v2282, %v2307
  %vm2383 = vcmp.eq.f32.partialorder %v2282, %v2308
  %vm2384 = vcmp.eq.f32.partialorder %v2282, %v2309
  %vm2385 = vcmp.eq.f32.partialorder %v2283, %v2307
  %vm2386 = vcmp.eq.f32.partialorder %v2283, %v2308
  %vm2387 = vcmp.eq.f32.partialorder %v2283, %v2309
  %vm2388 = vcmp.eq.f32.partialorder %v2284, %v2307
  %vm2389 = vcmp.eq.f32.partialorder %v2284, %v2308
  %vm2390 = vcmp.eq.f32.partialorder %v2284, %v2309
  %vm2391 = vcmp.eq.f32.partialorder %v2285, %v2307
  %vm2392 = vcmp.eq.f32.partialorder %v2285, %v2308
  %vm2393 = vcmp.eq.f32.partialorder %v2285, %v2309
  %vm2394 = vcmp.eq.f32.partialorder %v2286, %v2307
  %vm2395 = vcmp.eq.f32.partialorder %v2286, %v2308
  %vm2396 = vcmp.eq.f32.partialorder %v2286, %v2309
  %vm2397 = vcmp.eq.f32.partialorder %v2287, %v2307
  %vm2398 = vcmp.eq.f32.partialorder %v2287, %v2308
  %vm2399 = vcmp.eq.f32.partialorder %v2287, %v2309
  %vm2400 = vcmp.eq.f32.partialorder %v2288, %v2307
  %vm2401 = vcmp.eq.f32.partialorder %v2288, %v2308
  %vm2402 = vcmp.eq.f32.partialorder %v2288, %v2309
  %vm2403 = vcmp.eq.f32.partialorder %v2289, %v2307
  %vm2404 = vcmp.eq.f32.partialorder %v2289, %v2308
  %vm2405 = vcmp.eq.f32.partialorder %v2289, %v2309
  %vm2406 = vcmp.eq.f32.partialorder %v2290, %v2307
  %vm2407 = vcmp.eq.f32.partialorder %v2290, %v2308
  %vm2408 = vcmp.eq.f32.partialorder %v2290, %v2309
  %vm2409 = vcmp.eq.f32.partialorder %v2291, %v2307
  %vm2410 = vcmp.eq.f32.partialorder %v2291, %v2308
  %vm2411 = vcmp.eq.f32.partialorder %v2291, %v2309
  %vm2412 = vcmp.eq.f32.partialorder %v2292, %v2307
  %vm2413 = vcmp.eq.f32.partialorder %v2292, %v2308
  %vm2414 = vcmp.eq.f32.partialorder %v2292, %v2309
  %vm2415 = vcmp.eq.f32.partialorder %v2293, %v2307
  %vm2416 = vcmp.eq.f32.partialorder %v2293, %v2308
  %vm2417 = vcmp.eq.f32.partialorder %v2293, %v2309
  %vm2418 = vcmp.eq.f32.partialorder %v2294, %v2307
  %vm2419 = vcmp.eq.f32.partialorder %v2294, %v2308
  %vm2420 = vcmp.eq.f32.partialorder %v2294, %v2309
  %vm2421 = vcmp.eq.f32.partialorder %v2295, %v2307
  %vm2422 = vcmp.eq.f32.partialorder %v2295, %v2308
  %vm2423 = vcmp.eq.f32.partialorder %v2295, %v2309
  %vm2424 = vcmp.eq.f32.partialorder %v2296, %v2307
  %vm2425 = vcmp.eq.f32.partialorder %v2296, %v2308
  %vm2426 = vcmp.eq.f32.partialorder %v2296, %v2309
  %vm2427 = vcmp.eq.f32.partialorder %v2297, %v2307
  %vm2428 = vcmp.eq.f32.partialorder %v2297, %v2308
  %vm2429 = vcmp.eq.f32.partialorder %v2297, %v2309
  %v2430 = vsel %vm2310, %v1590, -1e+30
  %v2431 = vsel %vm2311, %v1592, -1e+30
  %v2432 = vsel %vm2312, %v1895, -1e+30
  %v2433 = vsel %vm2313, %v1596, -1e+30
  %v2434 = vsel %vm2314, %v1598, -1e+30
  %v2435 = vsel %vm2315, %v1900, -1e+30
  %v2436 = vsel %vm2316, %v1602, -1e+30
  %v2437 = vsel %vm2317, %v1604, -1e+30
  %v2438 = vsel %vm2318, %v1905, -1e+30
  %v2439 = vsel %vm2319, %v1608, -1e+30
  %v2440 = vsel %vm2320, %v1610, -1e+30
  %v2441 = vsel %vm2321, %v1910, -1e+30
  %v2442 = vsel %vm2322, %v1614, -1e+30
  %v2443 = vsel %vm2323, %v1616, -1e+30
  %v2444 = vsel %vm2324, %v1915, -1e+30
  %v2445 = vsel %vm2325, %v1620, -1e+30
  %v2446 = vsel %vm2326, %v1622, -1e+30
  %v2447 = vsel %vm2327, %v1920, -1e+30
  %v2448 = vsel %vm2328, %v1626, -1e+30
  %v2449 = vsel %vm2329, %v1628, -1e+30
  %v2450 = vsel %vm2330, %v1925, -1e+30
  %v2451 = vsel %vm2331, %v1632, -1e+30
  %v2452 = vsel %vm2332, %v1634, -1e+30
  %v2453 = vsel %vm2333, %v1930, -1e+30
  %v2454 = vsel %vm2334, %v1638, -1e+30
  %v2455 = vsel %vm2335, %v1640, -1e+30
  %v2456 = vsel %vm2336, %v1935, -1e+30
  %v2457 = vsel %vm2337, %v1644, -1e+30
  %v2458 = vsel %vm2338, %v1646, -1e+30
  %v2459 = vsel %vm2339, %v1940, -1e+30
  %v2460 = vsel %vm2340, %v1650, -1e+30
  %v2461 = vsel %vm2341, %v1652, -1e+30
  %v2462 = vsel %vm2342, %v1945, -1e+30
  %v2463 = vsel %vm2343, %v1656, -1e+30
  %v2464 = vsel %vm2344, %v1658, -1e+30
  %v2465 = vsel %vm2345, %v1950, -1e+30
  %v2466 = vsel %vm2346, %v1662, -1e+30
  %v2467 = vsel %vm2347, %v1664, -1e+30
  %v2468 = vsel %vm2348, %v1955, -1e+30
  %v2469 = vsel %vm2349, %v1668, -1e+30
  %v2470 = vsel %vm2350, %v1670, -1e+30
  %v2471 = vsel %vm2351, %v1960, -1e+30
  %v2472 = vsel %vm2352, %v1674, -1e+30
  %v2473 = vsel %vm2353, %v1676, -1e+30
  %v2474 = vsel %vm2354, %v1965, -1e+30
  %v2475 = vsel %vm2355, %v1680, -1e+30
  %v2476 = vsel %vm2356, %v1682, -1e+30
  %v2477 = vsel %vm2357, %v1970, -1e+30
  %v2478 = vsel %vm2358, %v1686, -1e+30
  %v2479 = vsel %vm2359, %v1688, -1e+30
  %v2480 = vsel %vm2360, %v1975, -1e+30
  %v2481 = vsel %vm2361, %v1692, -1e+30
  %v2482 = vsel %vm2362, %v1694, -1e+30
  %v2483 = vsel %vm2363, %v1980, -1e+30
  %v2484 = vsel %vm2364, %v1698, -1e+30
  %v2485 = vsel %vm2365, %v1700, -1e+30
  %v2486 = vsel %vm2366, %v1985, -1e+30
  %v2487 = vsel %vm2367, %v1704, -1e+30
  %v2488 = vsel %vm2368, %v1706, -1e+30
  %v2489 = vsel %vm2369, %v1990, -1e+30
  %v2490 = vsel %vm2370, %v1710, -1e+30
  %v2491 = vsel %vm2371, %v1712, -1e+30
  %v2492 = vsel %vm2372, %v1995, -1e+30
  %v2493 = vsel %vm2373, %v1716, -1e+30
  %v2494 = vsel %vm2374, %v1718, -1e+30
  %v2495 = vsel %vm2375, %v2000, -1e+30
  %v2496 = vsel %vm2376, %v1722, -1e+30
  %v2497 = vsel %vm2377, %v1724, -1e+30
  %v2498 = vsel %vm2378, %v2005, -1e+30
  %v2499 = vsel %vm2379, %v1728, -1e+30
  %v2500 = vsel %vm2380, %v1730, -1e+30
  %v2501 = vsel %vm2381, %v2010, -1e+30
  %v2502 = vsel %vm2382, %v1734, -1e+30
  %v2503 = vsel %vm2383, %v1736, -1e+30
  %v2504 = vsel %vm2384, %v2015, -1e+30
  %v2505 = vsel %vm2385, %v1740, -1e+30
  %v2506 = vsel %vm2386, %v1742, -1e+30
  %v2507 = vsel %vm2387, %v2020, -1e+30
  %v2508 = vsel %vm2388, %v1746, -1e+30
  %v2509 = vsel %vm2389, %v1748, -1e+30
  %v2510 = vsel %vm2390, %v2025, -1e+30
  %v2511 = vsel %vm2391, %v1752, -1e+30
  %v2512 = vsel %vm2392, %v1754, -1e+30
  %v2513 = vsel %vm2393, %v2030, -1e+30
  %v2514 = vsel %vm2394, %v1758, -1e+30
  %v2515 = vsel %vm2395, %v1760, -1e+30
  %v2516 = vsel %vm2396, %v2035, -1e+30
  %v2517 = vsel %vm2397, %v1764, -1e+30
  %v2518 = vsel %vm2398, %v1766, -1e+30
  %v2519 = vsel %vm2399, %v2040, -1e+30
  %v2520 = vsel %vm2400, %v1770, -1e+30
  %v2521 = vsel %vm2401, %v1772, -1e+30
  %v2522 = vsel %vm2402, %v2045, -1e+30
  %v2523 = vsel %vm2403, %v1776, -1e+30
  %v2524 = vsel %vm2404, %v1778, -1e+30
  %v2525 = vsel %vm2405, %v2050, -1e+30
  %v2526 = vsel %vm2406, %v1782, -1e+30
  %v2527 = vsel %vm2407, %v1784, -1e+30
  %v2528 = vsel %vm2408, %v2055, -1e+30
  %v2529 = vsel %vm2409, %v1788, -1e+30
  %v2530 = vsel %vm2410, %v1790, -1e+30
  %v2531 = vsel %vm2411, %v2060, -1e+30
  %v2532 = vsel %vm2412, %v1794, -1e+30
  %v2533 = vsel %vm2413, %v1796, -1e+30
  %v2534 = vsel %vm2414, %v2065, -1e+30
  %v2535 = vsel %vm2415, %v1800, -1e+30
  %v2536 = vsel %vm2416, %v1802, -1e+30
  %v2537 = vsel %vm2417, %v2070, -1e+30
  %v2538 = vsel %vm2418, %v1806, -1e+30
  %v2539 = vsel %vm2419, %v1808, -1e+30
  %v2540 = vsel %vm2420, %v2075, -1e+30
  %v2541 = vsel %vm2421, %v1812, -1e+30
  %v2542 = vsel %vm2422, %v1814, -1e+30
  %v2543 = vsel %vm2423, %v2080, -1e+30
  %v2544 = vsel %vm2424, %v1818, -1e+30
  %v2545 = vsel %vm2425, %v1820, -1e+30
  %v2546 = vsel %vm2426, %v2085, -1e+30
  %v2547 = vsel %vm2427, %v1824, -1e+30
  %v2548 = vsel %vm2428, %v1826, -1e+30
  %v2549 = vsel %vm2429, %v2090, -1e+30
  %v2550 = vmax.f32 %v2430, %v2431
  %vm2551 = vcmask 523264
  %v2552 = vsel %vm2551, %v2432, -inf
  %v2553 = vmax.f32 %v2550, %v2552
  %2554 = vmax.xlane.f32.xlu0 %v2553
  %v2555 = vpop.xlane.xlu0 %2554
  %v2556 = vmax.f32 %v2433, %v2434
  %v2557 = vsel %vm2551, %v2435, -inf
  %v2558 = vmax.f32 %v2556, %v2557
  %2559 = vmax.xlane.f32.xlu0 %v2558
  %v2560 = vpop.xlane.xlu0 %2559
  %v2561 = vmax.f32 %v2436, %v2437
  %v2562 = vsel %vm2551, %v2438, -inf
  %v2563 = vmax.f32 %v2561, %v2562
  %2564 = vmax.xlane.f32.xlu0 %v2563
  %v2565 = vpop.xlane.xlu0 %2564
  %v2566 = vmax.f32 %v2439, %v2440
  %v2567 = vsel %vm2551, %v2441, -inf
  %v2568 = vmax.f32 %v2566, %v2567
  %2569 = vmax.xlane.f32.xlu0 %v2568
  %v2570 = vpop.xlane.xlu0 %2569
  %v2571 = vmax.f32 %v2442, %v2443
  %v2572 = vsel %vm2551, %v2444, -inf
  %v2573 = vmax.f32 %v2571, %v2572
  %2574 = vmax.xlane.f32.xlu0 %v2573
  %v2575 = vpop.xlane.xlu0 %2574
  %v2576 = vmax.f32 %v2445, %v2446
  %v2577 = vsel %vm2551, %v2447, -inf
  %v2578 = vmax.f32 %v2576, %v2577
  %2579 = vmax.xlane.f32.xlu0 %v2578
  %v2580 = vpop.xlane.xlu0 %2579
  %v2581 = vmax.f32 %v2448, %v2449
  %v2582 = vsel %vm2551, %v2450, -inf
  %v2583 = vmax.f32 %v2581, %v2582
  %2584 = vmax.xlane.f32.xlu0 %v2583
  %v2585 = vpop.xlane.xlu0 %2584
  %v2586 = vmax.f32 %v2451, %v2452
  %v2587 = vsel %vm2551, %v2453, -inf
  %v2588 = vmax.f32 %v2586, %v2587
  %2589 = vmax.xlane.f32.xlu0 %v2588
  %v2590 = vpop.xlane.xlu0 %2589
  %v2591 = vmax.f32 %v2454, %v2455
  %v2592 = vsel %vm2551, %v2456, -inf
  %v2593 = vmax.f32 %v2591, %v2592
  %2594 = vmax.xlane.f32.xlu0 %v2593
  %v2595 = vpop.xlane.xlu0 %2594
  %v2596 = vmax.f32 %v2457, %v2458
  %v2597 = vsel %vm2551, %v2459, -inf
  %v2598 = vmax.f32 %v2596, %v2597
  %2599 = vmax.xlane.f32.xlu0 %v2598
  %v2600 = vpop.xlane.xlu0 %2599
  %v2601 = vmax.f32 %v2460, %v2461
  %v2602 = vsel %vm2551, %v2462, -inf
  %v2603 = vmax.f32 %v2601, %v2602
  %2604 = vmax.xlane.f32.xlu0 %v2603
  %v2605 = vpop.xlane.xlu0 %2604
  %v2606 = vmax.f32 %v2463, %v2464
  %v2607 = vsel %vm2551, %v2465, -inf
  %v2608 = vmax.f32 %v2606, %v2607
  %2609 = vmax.xlane.f32.xlu0 %v2608
  %v2610 = vpop.xlane.xlu0 %2609
  %v2611 = vmax.f32 %v2466, %v2467
  %v2612 = vsel %vm2551, %v2468, -inf
  %v2613 = vmax.f32 %v2611, %v2612
  %2614 = vmax.xlane.f32.xlu0 %v2613
  %v2615 = vpop.xlane.xlu0 %2614
  %v2616 = vmax.f32 %v2469, %v2470
  %v2617 = vsel %vm2551, %v2471, -inf
  %v2618 = vmax.f32 %v2616, %v2617
  %2619 = vmax.xlane.f32.xlu0 %v2618
  %v2620 = vpop.xlane.xlu0 %2619
  %v2621 = vmax.f32 %v2472, %v2473
  %v2622 = vsel %vm2551, %v2474, -inf
  %v2623 = vmax.f32 %v2621, %v2622
  %2624 = vmax.xlane.f32.xlu0 %v2623
  %v2625 = vpop.xlane.xlu0 %2624
  %v2626 = vmax.f32 %v2475, %v2476
  %v2627 = vsel %vm2551, %v2477, -inf
  %v2628 = vmax.f32 %v2626, %v2627
  %2629 = vmax.xlane.f32.xlu0 %v2628
  %v2630 = vpop.xlane.xlu0 %2629
  %v2631 = vmax.f32 %v2478, %v2479
  %v2632 = vsel %vm2551, %v2480, -inf
  %v2633 = vmax.f32 %v2631, %v2632
  %2634 = vmax.xlane.f32.xlu0 %v2633
  %v2635 = vpop.xlane.xlu0 %2634
  %v2636 = vmax.f32 %v2481, %v2482
  %v2637 = vsel %vm2551, %v2483, -inf
  %v2638 = vmax.f32 %v2636, %v2637
  %2639 = vmax.xlane.f32.xlu0 %v2638
  %v2640 = vpop.xlane.xlu0 %2639
  %v2641 = vmax.f32 %v2484, %v2485
  %v2642 = vsel %vm2551, %v2486, -inf
  %v2643 = vmax.f32 %v2641, %v2642
  %2644 = vmax.xlane.f32.xlu0 %v2643
  %v2645 = vpop.xlane.xlu0 %2644
  %v2646 = vmax.f32 %v2487, %v2488
  %v2647 = vsel %vm2551, %v2489, -inf
  %v2648 = vmax.f32 %v2646, %v2647
  %2649 = vmax.xlane.f32.xlu0 %v2648
  %v2650 = vpop.xlane.xlu0 %2649
  %v2651 = vmax.f32 %v2490, %v2491
  %v2652 = vsel %vm2551, %v2492, -inf
  %v2653 = vmax.f32 %v2651, %v2652
  %2654 = vmax.xlane.f32.xlu0 %v2653
  %v2655 = vpop.xlane.xlu0 %2654
  %v2656 = vmax.f32 %v2493, %v2494
  %v2657 = vsel %vm2551, %v2495, -inf
  %v2658 = vmax.f32 %v2656, %v2657
  %2659 = vmax.xlane.f32.xlu0 %v2658
  %v2660 = vpop.xlane.xlu0 %2659
  %v2661 = vmax.f32 %v2496, %v2497
  %v2662 = vsel %vm2551, %v2498, -inf
  %v2663 = vmax.f32 %v2661, %v2662
  %2664 = vmax.xlane.f32.xlu0 %v2663
  %v2665 = vpop.xlane.xlu0 %2664
  %v2666 = vmax.f32 %v2499, %v2500
  %v2667 = vsel %vm2551, %v2501, -inf
  %v2668 = vmax.f32 %v2666, %v2667
  %2669 = vmax.xlane.f32.xlu0 %v2668
  %v2670 = vpop.xlane.xlu0 %2669
  %v2671 = vmax.f32 %v2502, %v2503
  %v2672 = vsel %vm2551, %v2504, -inf
  %v2673 = vmax.f32 %v2671, %v2672
  %2674 = vmax.xlane.f32.xlu0 %v2673
  %v2675 = vpop.xlane.xlu0 %2674
  %v2676 = vmax.f32 %v2505, %v2506
  %v2677 = vsel %vm2551, %v2507, -inf
  %v2678 = vmax.f32 %v2676, %v2677
  %2679 = vmax.xlane.f32.xlu0 %v2678
  %v2680 = vpop.xlane.xlu0 %2679
  %v2681 = vmax.f32 %v2508, %v2509
  %v2682 = vsel %vm2551, %v2510, -inf
  %v2683 = vmax.f32 %v2681, %v2682
  %2684 = vmax.xlane.f32.xlu0 %v2683
  %v2685 = vpop.xlane.xlu0 %2684
  %v2686 = vmax.f32 %v2511, %v2512
  %v2687 = vsel %vm2551, %v2513, -inf
  %v2688 = vmax.f32 %v2686, %v2687
  %2689 = vmax.xlane.f32.xlu0 %v2688
  %v2690 = vpop.xlane.xlu0 %2689
  %v2691 = vmax.f32 %v2514, %v2515
  %v2692 = vsel %vm2551, %v2516, -inf
  %v2693 = vmax.f32 %v2691, %v2692
  %2694 = vmax.xlane.f32.xlu0 %v2693
  %v2695 = vpop.xlane.xlu0 %2694
  %v2696 = vmax.f32 %v2517, %v2518
  %v2697 = vsel %vm2551, %v2519, -inf
  %v2698 = vmax.f32 %v2696, %v2697
  %2699 = vmax.xlane.f32.xlu0 %v2698
  %v2700 = vpop.xlane.xlu0 %2699
  %v2701 = vmax.f32 %v2520, %v2521
  %v2702 = vsel %vm2551, %v2522, -inf
  %v2703 = vmax.f32 %v2701, %v2702
  %2704 = vmax.xlane.f32.xlu0 %v2703
  %v2705 = vpop.xlane.xlu0 %2704
  %v2706 = vmax.f32 %v2523, %v2524
  %v2707 = vsel %vm2551, %v2525, -inf
  %v2708 = vmax.f32 %v2706, %v2707
  %2709 = vmax.xlane.f32.xlu0 %v2708
  %v2710 = vpop.xlane.xlu0 %2709
  %v2711 = vmax.f32 %v2526, %v2527
  %v2712 = vsel %vm2551, %v2528, -inf
  %v2713 = vmax.f32 %v2711, %v2712
  %2714 = vmax.xlane.f32.xlu0 %v2713
  %v2715 = vpop.xlane.xlu0 %2714
  %v2716 = vmax.f32 %v2529, %v2530
  %v2717 = vsel %vm2551, %v2531, -inf
  %v2718 = vmax.f32 %v2716, %v2717
  %2719 = vmax.xlane.f32.xlu0 %v2718
  %v2720 = vpop.xlane.xlu0 %2719
  %v2721 = vmax.f32 %v2532, %v2533
  %v2722 = vsel %vm2551, %v2534, -inf
  %v2723 = vmax.f32 %v2721, %v2722
  %2724 = vmax.xlane.f32.xlu0 %v2723
  %v2725 = vpop.xlane.xlu0 %2724
  %v2726 = vmax.f32 %v2535, %v2536
  %v2727 = vsel %vm2551, %v2537, -inf
  %v2728 = vmax.f32 %v2726, %v2727
  %2729 = vmax.xlane.f32.xlu0 %v2728
  %v2730 = vpop.xlane.xlu0 %2729
  %v2731 = vmax.f32 %v2538, %v2539
  %v2732 = vsel %vm2551, %v2540, -inf
  %v2733 = vmax.f32 %v2731, %v2732
  %2734 = vmax.xlane.f32.xlu0 %v2733
  %v2735 = vpop.xlane.xlu0 %2734
  %v2736 = vmax.f32 %v2541, %v2542
  %v2737 = vsel %vm2551, %v2543, -inf
  %v2738 = vmax.f32 %v2736, %v2737
  %2739 = vmax.xlane.f32.xlu0 %v2738
  %v2740 = vpop.xlane.xlu0 %2739
  %v2741 = vmax.f32 %v2544, %v2545
  %v2742 = vsel %vm2551, %v2546, -inf
  %v2743 = vmax.f32 %v2741, %v2742
  %2744 = vmax.xlane.f32.xlu0 %v2743
  %v2745 = vpop.xlane.xlu0 %2744
  %v2746 = vmax.f32 %v2547, %v2548
  %v2747 = vsel %vm2551, %v2549, -inf
  %v2748 = vmax.f32 %v2746, %v2747
  %2749 = vmax.xlane.f32.xlu0 %v2748
  %v2750 = vpop.xlane.xlu0 %2749
  %v2751 = vsub.f32 %v2430, %v2555
  %v2752 = vsub.f32 %v2431, %v2555
  %v2753 = vsub.f32 %v2432, %v2555
  %v2754 = vsub.f32 %v2433, %v2560
  %v2755 = vsub.f32 %v2434, %v2560
  %v2756 = vsub.f32 %v2435, %v2560
  %v2757 = vsub.f32 %v2436, %v2565
  %v2758 = vsub.f32 %v2437, %v2565
  %v2759 = vsub.f32 %v2438, %v2565
  %v2760 = vsub.f32 %v2439, %v2570
  %v2761 = vsub.f32 %v2440, %v2570
  %v2762 = vsub.f32 %v2441, %v2570
  %v2763 = vsub.f32 %v2442, %v2575
  %v2764 = vsub.f32 %v2443, %v2575
  %v2765 = vsub.f32 %v2444, %v2575
  %v2766 = vsub.f32 %v2445, %v2580
  %v2767 = vsub.f32 %v2446, %v2580
  %v2768 = vsub.f32 %v2447, %v2580
  %v2769 = vsub.f32 %v2448, %v2585
  %v2770 = vsub.f32 %v2449, %v2585
  %v2771 = vsub.f32 %v2450, %v2585
  %v2772 = vsub.f32 %v2451, %v2590
  %v2773 = vsub.f32 %v2452, %v2590
  %v2774 = vsub.f32 %v2453, %v2590
  %v2775 = vsub.f32 %v2454, %v2595
  %v2776 = vsub.f32 %v2455, %v2595
  %v2777 = vsub.f32 %v2456, %v2595
  %v2778 = vsub.f32 %v2457, %v2600
  %v2779 = vsub.f32 %v2458, %v2600
  %v2780 = vsub.f32 %v2459, %v2600
  %v2781 = vsub.f32 %v2460, %v2605
  %v2782 = vsub.f32 %v2461, %v2605
  %v2783 = vsub.f32 %v2462, %v2605
  %v2784 = vsub.f32 %v2463, %v2610
  %v2785 = vsub.f32 %v2464, %v2610
  %v2786 = vsub.f32 %v2465, %v2610
  %v2787 = vsub.f32 %v2466, %v2615
  %v2788 = vsub.f32 %v2467, %v2615
  %v2789 = vsub.f32 %v2468, %v2615
  %v2790 = vsub.f32 %v2469, %v2620
  %v2791 = vsub.f32 %v2470, %v2620
  %v2792 = vsub.f32 %v2471, %v2620
  %v2793 = vsub.f32 %v2472, %v2625
  %v2794 = vsub.f32 %v2473, %v2625
  %v2795 = vsub.f32 %v2474, %v2625
  %v2796 = vsub.f32 %v2475, %v2630
  %v2797 = vsub.f32 %v2476, %v2630
  %v2798 = vsub.f32 %v2477, %v2630
  %v2799 = vsub.f32 %v2478, %v2635
  %v2800 = vsub.f32 %v2479, %v2635
  %v2801 = vsub.f32 %v2480, %v2635
  %v2802 = vsub.f32 %v2481, %v2640
  %v2803 = vsub.f32 %v2482, %v2640
  %v2804 = vsub.f32 %v2483, %v2640
  %v2805 = vsub.f32 %v2484, %v2645
  %v2806 = vsub.f32 %v2485, %v2645
  %v2807 = vsub.f32 %v2486, %v2645
  %v2808 = vsub.f32 %v2487, %v2650
  %v2809 = vsub.f32 %v2488, %v2650
  %v2810 = vsub.f32 %v2489, %v2650
  %v2811 = vsub.f32 %v2490, %v2655
  %v2812 = vsub.f32 %v2491, %v2655
  %v2813 = vsub.f32 %v2492, %v2655
  %v2814 = vsub.f32 %v2493, %v2660
  %v2815 = vsub.f32 %v2494, %v2660
  %v2816 = vsub.f32 %v2495, %v2660
  %v2817 = vsub.f32 %v2496, %v2665
  %v2818 = vsub.f32 %v2497, %v2665
  %v2819 = vsub.f32 %v2498, %v2665
  %v2820 = vsub.f32 %v2499, %v2670
  %v2821 = vsub.f32 %v2500, %v2670
  %v2822 = vsub.f32 %v2501, %v2670
  %v2823 = vsub.f32 %v2502, %v2675
  %v2824 = vsub.f32 %v2503, %v2675
  %v2825 = vsub.f32 %v2504, %v2675
  %v2826 = vsub.f32 %v2505, %v2680
  %v2827 = vsub.f32 %v2506, %v2680
  %v2828 = vsub.f32 %v2507, %v2680
  %v2829 = vsub.f32 %v2508, %v2685
  %v2830 = vsub.f32 %v2509, %v2685
  %v2831 = vsub.f32 %v2510, %v2685
  %v2832 = vsub.f32 %v2511, %v2690
  %v2833 = vsub.f32 %v2512, %v2690
  %v2834 = vsub.f32 %v2513, %v2690
  %v2835 = vsub.f32 %v2514, %v2695
  %v2836 = vsub.f32 %v2515, %v2695
  %v2837 = vsub.f32 %v2516, %v2695
  %v2838 = vsub.f32 %v2517, %v2700
  %v2839 = vsub.f32 %v2518, %v2700
  %v2840 = vsub.f32 %v2519, %v2700
  %v2841 = vsub.f32 %v2520, %v2705
  %v2842 = vsub.f32 %v2521, %v2705
  %v2843 = vsub.f32 %v2522, %v2705
  %v2844 = vsub.f32 %v2523, %v2710
  %v2845 = vsub.f32 %v2524, %v2710
  %v2846 = vsub.f32 %v2525, %v2710
  %v2847 = vsub.f32 %v2526, %v2715
  %v2848 = vsub.f32 %v2527, %v2715
  %v2849 = vsub.f32 %v2528, %v2715
  %v2850 = vsub.f32 %v2529, %v2720
  %v2851 = vsub.f32 %v2530, %v2720
  %v2852 = vsub.f32 %v2531, %v2720
  %v2853 = vsub.f32 %v2532, %v2725
  %v2854 = vsub.f32 %v2533, %v2725
  %v2855 = vsub.f32 %v2534, %v2725
  %v2856 = vsub.f32 %v2535, %v2730
  %v2857 = vsub.f32 %v2536, %v2730
  %v2858 = vsub.f32 %v2537, %v2730
  %v2859 = vsub.f32 %v2538, %v2735
  %v2860 = vsub.f32 %v2539, %v2735
  %v2861 = vsub.f32 %v2540, %v2735
  %v2862 = vsub.f32 %v2541, %v2740
  %v2863 = vsub.f32 %v2542, %v2740
  %v2864 = vsub.f32 %v2543, %v2740
  %v2865 = vsub.f32 %v2544, %v2745
  %v2866 = vsub.f32 %v2545, %v2745
  %v2867 = vsub.f32 %v2546, %v2745
  %v2868 = vsub.f32 %v2547, %v2750
  %v2869 = vsub.f32 %v2548, %v2750
  %v2870 = vsub.f32 %v2549, %v2750
  %v2871 = vmul.f32 %v2751, 1.442695
  %v2872 = vpow.pop %v2871
  %v2873 = vmul.f32 %v2752, 1.442695
  %v2874 = vpow.pop %v2873
  %v2875 = vmul.f32 %v2753, 1.442695
  %v2876 = vpow.pop %v2875
  %v2877 = vmul.f32 %v2754, 1.442695
  %v2878 = vpow.pop %v2877
  %v2879 = vmul.f32 %v2755, 1.442695
  %v2880 = vpow.pop %v2879
  %v2881 = vmul.f32 %v2756, 1.442695
  %v2882 = vpow.pop %v2881
  %v2883 = vmul.f32 %v2757, 1.442695
  %v2884 = vpow.pop %v2883
  %v2885 = vmul.f32 %v2758, 1.442695
  %v2886 = vpow.pop %v2885
  %v2887 = vmul.f32 %v2759, 1.442695
  %v2888 = vpow.pop %v2887
  %v2889 = vmul.f32 %v2760, 1.442695
  %v2890 = vpow.pop %v2889
  %v2891 = vmul.f32 %v2761, 1.442695
  %v2892 = vpow.pop %v2891
  %v2893 = vmul.f32 %v2762, 1.442695
  %v2894 = vpow.pop %v2893
  %v2895 = vmul.f32 %v2763, 1.442695
  %v2896 = vpow.pop %v2895
  %v2897 = vmul.f32 %v2764, 1.442695
  %v2898 = vpow.pop %v2897
  %v2899 = vmul.f32 %v2765, 1.442695
  %v2900 = vpow.pop %v2899
  %v2901 = vmul.f32 %v2766, 1.442695
  %v2902 = vpow.pop %v2901
  %v2903 = vmul.f32 %v2767, 1.442695
  %v2904 = vpow.pop %v2903
  %v2905 = vmul.f32 %v2768, 1.442695
  %v2906 = vpow.pop %v2905
  %v2907 = vmul.f32 %v2769, 1.442695
  %v2908 = vpow.pop %v2907
  %v2909 = vmul.f32 %v2770, 1.442695
  %v2910 = vpow.pop %v2909
  %v2911 = vmul.f32 %v2771, 1.442695
  %v2912 = vpow.pop %v2911
  %v2913 = vmul.f32 %v2772, 1.442695
  %v2914 = vpow.pop %v2913
  %v2915 = vmul.f32 %v2773, 1.442695
  %v2916 = vpow.pop %v2915
  %v2917 = vmul.f32 %v2774, 1.442695
  %v2918 = vpow.pop %v2917
  %v2919 = vmul.f32 %v2775, 1.442695
  %v2920 = vpow.pop %v2919
  %v2921 = vmul.f32 %v2776, 1.442695
  %v2922 = vpow.pop %v2921
  %v2923 = vmul.f32 %v2777, 1.442695
  %v2924 = vpow.pop %v2923
  %v2925 = vmul.f32 %v2778, 1.442695
  %v2926 = vpow.pop %v2925
  %v2927 = vmul.f32 %v2779, 1.442695
  %v2928 = vpow.pop %v2927
  %v2929 = vmul.f32 %v2780, 1.442695
  %v2930 = vpow.pop %v2929
  %v2931 = vmul.f32 %v2781, 1.442695
  %v2932 = vpow.pop %v2931
  %v2933 = vmul.f32 %v2782, 1.442695
  %v2934 = vpow.pop %v2933
  %v2935 = vmul.f32 %v2783, 1.442695
  %v2936 = vpow.pop %v2935
  %v2937 = vmul.f32 %v2784, 1.442695
  %v2938 = vpow.pop %v2937
  %v2939 = vmul.f32 %v2785, 1.442695
  %v2940 = vpow.pop %v2939
  %v2941 = vmul.f32 %v2786, 1.442695
  %v2942 = vpow.pop %v2941
  %v2943 = vmul.f32 %v2787, 1.442695
  %v2944 = vpow.pop %v2943
  %v2945 = vmul.f32 %v2788, 1.442695
  %v2946 = vpow.pop %v2945
  %v2947 = vmul.f32 %v2789, 1.442695
  %v2948 = vpow.pop %v2947
  %v2949 = vmul.f32 %v2790, 1.442695
  %v2950 = vpow.pop %v2949
  %v2951 = vmul.f32 %v2791, 1.442695
  %v2952 = vpow.pop %v2951
  %v2953 = vmul.f32 %v2792, 1.442695
  %v2954 = vpow.pop %v2953
  %v2955 = vmul.f32 %v2793, 1.442695
  %v2956 = vpow.pop %v2955
  %v2957 = vmul.f32 %v2794, 1.442695
  %v2958 = vpow.pop %v2957
  %v2959 = vmul.f32 %v2795, 1.442695
  %v2960 = vpow.pop %v2959
  %v2961 = vmul.f32 %v2796, 1.442695
  %v2962 = vpow.pop %v2961
  %v2963 = vmul.f32 %v2797, 1.442695
  %v2964 = vpow.pop %v2963
  %v2965 = vmul.f32 %v2798, 1.442695
  %v2966 = vpow.pop %v2965
  %v2967 = vmul.f32 %v2799, 1.442695
  %v2968 = vpow.pop %v2967
  %v2969 = vmul.f32 %v2800, 1.442695
  %v2970 = vpow.pop %v2969
  %v2971 = vmul.f32 %v2801, 1.442695
  %v2972 = vpow.pop %v2971
  %v2973 = vmul.f32 %v2802, 1.442695
  %v2974 = vpow.pop %v2973
  %v2975 = vmul.f32 %v2803, 1.442695
  %v2976 = vpow.pop %v2975
  %v2977 = vmul.f32 %v2804, 1.442695
  %v2978 = vpow.pop %v2977
  %v2979 = vmul.f32 %v2805, 1.442695
  %v2980 = vpow.pop %v2979
  %v2981 = vmul.f32 %v2806, 1.442695
  %v2982 = vpow.pop %v2981
  %v2983 = vmul.f32 %v2807, 1.442695
  %v2984 = vpow.pop %v2983
  %v2985 = vmul.f32 %v2808, 1.442695
  %v2986 = vpow.pop %v2985
  %v2987 = vmul.f32 %v2809, 1.442695
  %v2988 = vpow.pop %v2987
  %v2989 = vmul.f32 %v2810, 1.442695
  %v2990 = vpow.pop %v2989
  %v2991 = vmul.f32 %v2811, 1.442695
  %v2992 = vpow.pop %v2991
  %v2993 = vmul.f32 %v2812, 1.442695
  %v2994 = vpow.pop %v2993
  %v2995 = vmul.f32 %v2813, 1.442695
  %v2996 = vpow.pop %v2995
  %v2997 = vmul.f32 %v2814, 1.442695
  %v2998 = vpow.pop %v2997
  %v2999 = vmul.f32 %v2815, 1.442695
  %v3000 = vpow.pop %v2999
  %v3001 = vmul.f32 %v2816, 1.442695
  %v3002 = vpow.pop %v3001
  %v3003 = vmul.f32 %v2817, 1.442695
  %v3004 = vpow.pop %v3003
  %v3005 = vmul.f32 %v2818, 1.442695
  %v3006 = vpow.pop %v3005
  %v3007 = vmul.f32 %v2819, 1.442695
  %v3008 = vpow.pop %v3007
  %v3009 = vmul.f32 %v2820, 1.442695
  %v3010 = vpow.pop %v3009
  %v3011 = vmul.f32 %v2821, 1.442695
  %v3012 = vpow.pop %v3011
  %v3013 = vmul.f32 %v2822, 1.442695
  %v3014 = vpow.pop %v3013
  %v3015 = vmul.f32 %v2823, 1.442695
  %v3016 = vpow.pop %v3015
  %v3017 = vmul.f32 %v2824, 1.442695
  %v3018 = vpow.pop %v3017
  %v3019 = vmul.f32 %v2825, 1.442695
  %v3020 = vpow.pop %v3019
  %v3021 = vmul.f32 %v2826, 1.442695
  %v3022 = vpow.pop %v3021
  %v3023 = vmul.f32 %v2827, 1.442695
  %v3024 = vpow.pop %v3023
  %v3025 = vmul.f32 %v2828, 1.442695
  %v3026 = vpow.pop %v3025
  %v3027 = vmul.f32 %v2829, 1.442695
  %v3028 = vpow.pop %v3027
  %v3029 = vmul.f32 %v2830, 1.442695
  %v3030 = vpow.pop %v3029
  %v3031 = vmul.f32 %v2831, 1.442695
  %v3032 = vpow.pop %v3031
  %v3033 = vmul.f32 %v2832, 1.442695
  %v3034 = vpow.pop %v3033
  %v3035 = vmul.f32 %v2833, 1.442695
  %v3036 = vpow.pop %v3035
  %v3037 = vmul.f32 %v2834, 1.442695
  %v3038 = vpow.pop %v3037
  %v3039 = vmul.f32 %v2835, 1.442695
  %v3040 = vpow.pop %v3039
  %v3041 = vmul.f32 %v2836, 1.442695
  %v3042 = vpow.pop %v3041
  %v3043 = vmul.f32 %v2837, 1.442695
  %v3044 = vpow.pop %v3043
  %v3045 = vmul.f32 %v2838, 1.442695
  %v3046 = vpow.pop %v3045
  %v3047 = vmul.f32 %v2839, 1.442695
  %v3048 = vpow.pop %v3047
  %v3049 = vmul.f32 %v2840, 1.442695
  %v3050 = vpow.pop %v3049
  %v3051 = vmul.f32 %v2841, 1.442695
  %v3052 = vpow.pop %v3051
  %v3053 = vmul.f32 %v2842, 1.442695
  %v3054 = vpow.pop %v3053
  %v3055 = vmul.f32 %v2843, 1.442695
  %v3056 = vpow.pop %v3055
  %v3057 = vmul.f32 %v2844, 1.442695
  %v3058 = vpow.pop %v3057
  %v3059 = vmul.f32 %v2845, 1.442695
  %v3060 = vpow.pop %v3059
  %v3061 = vmul.f32 %v2846, 1.442695
  %v3062 = vpow.pop %v3061
  %v3063 = vmul.f32 %v2847, 1.442695
  %v3064 = vpow.pop %v3063
  %v3065 = vmul.f32 %v2848, 1.442695
  %v3066 = vpow.pop %v3065
  %v3067 = vmul.f32 %v2849, 1.442695
  %v3068 = vpow.pop %v3067
  %v3069 = vmul.f32 %v2850, 1.442695
  %v3070 = vpow.pop %v3069
  %v3071 = vmul.f32 %v2851, 1.442695
  %v3072 = vpow.pop %v3071
  %v3073 = vmul.f32 %v2852, 1.442695
  %v3074 = vpow.pop %v3073
  %v3075 = vmul.f32 %v2853, 1.442695
  %v3076 = vpow.pop %v3075
  %v3077 = vmul.f32 %v2854, 1.442695
  %v3078 = vpow.pop %v3077
  %v3079 = vmul.f32 %v2855, 1.442695
  %v3080 = vpow.pop %v3079
  %v3081 = vmul.f32 %v2856, 1.442695
  %v3082 = vpow.pop %v3081
  %v3083 = vmul.f32 %v2857, 1.442695
  %v3084 = vpow.pop %v3083
  %v3085 = vmul.f32 %v2858, 1.442695
  %v3086 = vpow.pop %v3085
  %v3087 = vmul.f32 %v2859, 1.442695
  %v3088 = vpow.pop %v3087
  %v3089 = vmul.f32 %v2860, 1.442695
  %v3090 = vpow.pop %v3089
  %v3091 = vmul.f32 %v2861, 1.442695
  %v3092 = vpow.pop %v3091
  %v3093 = vmul.f32 %v2862, 1.442695
  %v3094 = vpow.pop %v3093
  %v3095 = vmul.f32 %v2863, 1.442695
  %v3096 = vpow.pop %v3095
  %v3097 = vmul.f32 %v2864, 1.442695
  %v3098 = vpow.pop %v3097
  %v3099 = vmul.f32 %v2865, 1.442695
  %v3100 = vpow.pop %v3099
  %v3101 = vmul.f32 %v2866, 1.442695
  %v3102 = vpow.pop %v3101
  %v3103 = vmul.f32 %v2867, 1.442695
  %v3104 = vpow.pop %v3103
  %v3105 = vmul.f32 %v2868, 1.442695
  %v3106 = vpow.pop %v3105
  %v3107 = vmul.f32 %v2869, 1.442695
  %v3108 = vpow.pop %v3107
  %v3109 = vmul.f32 %v2870, 1.442695
  %v3110 = vpow.pop %v3109
  %v3111 = vadd.f32 %v2872, %v2874
  %v3112 = vsel %vm2551, %v2876, 0.0
  %v3113 = vadd.f32 %v3111, %v3112
  %3114 = vadd.xlane.f32.xlu0 %v3113
  %v3115 = vpop.xlane.xlu0 %3114
  %v3116 = vadd.f32 %v2878, %v2880
  %v3117 = vsel %vm2551, %v2882, 0.0
  %v3118 = vadd.f32 %v3116, %v3117
  %3119 = vadd.xlane.f32.xlu0 %v3118
  %v3120 = vpop.xlane.xlu0 %3119
  %v3121 = vadd.f32 %v2884, %v2886
  %v3122 = vsel %vm2551, %v2888, 0.0
  %v3123 = vadd.f32 %v3121, %v3122
  %3124 = vadd.xlane.f32.xlu0 %v3123
  %v3125 = vpop.xlane.xlu0 %3124
  %v3126 = vadd.f32 %v2890, %v2892
  %v3127 = vsel %vm2551, %v2894, 0.0
  %v3128 = vadd.f32 %v3126, %v3127
  %3129 = vadd.xlane.f32.xlu0 %v3128
  %v3130 = vpop.xlane.xlu0 %3129
  %v3131 = vadd.f32 %v2896, %v2898
  %v3132 = vsel %vm2551, %v2900, 0.0
  %v3133 = vadd.f32 %v3131, %v3132
  %3134 = vadd.xlane.f32.xlu0 %v3133
  %v3135 = vpop.xlane.xlu0 %3134
  %v3136 = vadd.f32 %v2902, %v2904
  %v3137 = vsel %vm2551, %v2906, 0.0
  %v3138 = vadd.f32 %v3136, %v3137
  %3139 = vadd.xlane.f32.xlu0 %v3138
  %v3140 = vpop.xlane.xlu0 %3139
  %v3141 = vadd.f32 %v2908, %v2910
  %v3142 = vsel %vm2551, %v2912, 0.0
  %v3143 = vadd.f32 %v3141, %v3142
  %3144 = vadd.xlane.f32.xlu0 %v3143
  %v3145 = vpop.xlane.xlu0 %3144
  %v3146 = vadd.f32 %v2914, %v2916
  %v3147 = vsel %vm2551, %v2918, 0.0
  %v3148 = vadd.f32 %v3146, %v3147
  %3149 = vadd.xlane.f32.xlu0 %v3148
  %v3150 = vpop.xlane.xlu0 %3149
  %v3151 = vadd.f32 %v2920, %v2922
  %v3152 = vsel %vm2551, %v2924, 0.0
  %v3153 = vadd.f32 %v3151, %v3152
  %3154 = vadd.xlane.f32.xlu0 %v3153
  %v3155 = vpop.xlane.xlu0 %3154
  %v3156 = vadd.f32 %v2926, %v2928
  %v3157 = vsel %vm2551, %v2930, 0.0
  %v3158 = vadd.f32 %v3156, %v3157
  %3159 = vadd.xlane.f32.xlu0 %v3158
  %v3160 = vpop.xlane.xlu0 %3159
  %v3161 = vadd.f32 %v2932, %v2934
  %v3162 = vsel %vm2551, %v2936, 0.0
  %v3163 = vadd.f32 %v3161, %v3162
  %3164 = vadd.xlane.f32.xlu0 %v3163
  %v3165 = vpop.xlane.xlu0 %3164
  %v3166 = vadd.f32 %v2938, %v2940
  %v3167 = vsel %vm2551, %v2942, 0.0
  %v3168 = vadd.f32 %v3166, %v3167
  %3169 = vadd.xlane.f32.xlu0 %v3168
  %v3170 = vpop.xlane.xlu0 %3169
  %v3171 = vadd.f32 %v2944, %v2946
  %v3172 = vsel %vm2551, %v2948, 0.0
  %v3173 = vadd.f32 %v3171, %v3172
  %3174 = vadd.xlane.f32.xlu0 %v3173
  %v3175 = vpop.xlane.xlu0 %3174
  %v3176 = vadd.f32 %v2950, %v2952
  %v3177 = vsel %vm2551, %v2954, 0.0
  %v3178 = vadd.f32 %v3176, %v3177
  %3179 = vadd.xlane.f32.xlu0 %v3178
  %v3180 = vpop.xlane.xlu0 %3179
  %v3181 = vadd.f32 %v2956, %v2958
  %v3182 = vsel %vm2551, %v2960, 0.0
  %v3183 = vadd.f32 %v3181, %v3182
  %3184 = vadd.xlane.f32.xlu0 %v3183
  %v3185 = vpop.xlane.xlu0 %3184
  %v3186 = vadd.f32 %v2962, %v2964
  %v3187 = vsel %vm2551, %v2966, 0.0
  %v3188 = vadd.f32 %v3186, %v3187
  %3189 = vadd.xlane.f32.xlu0 %v3188
  %v3190 = vpop.xlane.xlu0 %3189
  %v3191 = vadd.f32 %v2968, %v2970
  %v3192 = vsel %vm2551, %v2972, 0.0
  %v3193 = vadd.f32 %v3191, %v3192
  %3194 = vadd.xlane.f32.xlu0 %v3193
  %v3195 = vpop.xlane.xlu0 %3194
  %v3196 = vadd.f32 %v2974, %v2976
  %v3197 = vsel %vm2551, %v2978, 0.0
  %v3198 = vadd.f32 %v3196, %v3197
  %3199 = vadd.xlane.f32.xlu0 %v3198
  %v3200 = vpop.xlane.xlu0 %3199
  %v3201 = vadd.f32 %v2980, %v2982
  %v3202 = vsel %vm2551, %v2984, 0.0
  %v3203 = vadd.f32 %v3201, %v3202
  %3204 = vadd.xlane.f32.xlu0 %v3203
  %v3205 = vpop.xlane.xlu0 %3204
  %v3206 = vadd.f32 %v2986, %v2988
  %v3207 = vsel %vm2551, %v2990, 0.0
  %v3208 = vadd.f32 %v3206, %v3207
  %3209 = vadd.xlane.f32.xlu0 %v3208
  %v3210 = vpop.xlane.xlu0 %3209
  %v3211 = vadd.f32 %v2992, %v2994
  %v3212 = vsel %vm2551, %v2996, 0.0
  %v3213 = vadd.f32 %v3211, %v3212
  %3214 = vadd.xlane.f32.xlu0 %v3213
  %v3215 = vpop.xlane.xlu0 %3214
  %v3216 = vadd.f32 %v2998, %v3000
  %v3217 = vsel %vm2551, %v3002, 0.0
  %v3218 = vadd.f32 %v3216, %v3217
  %3219 = vadd.xlane.f32.xlu0 %v3218
  %v3220 = vpop.xlane.xlu0 %3219
  %v3221 = vadd.f32 %v3004, %v3006
  %v3222 = vsel %vm2551, %v3008, 0.0
  %v3223 = vadd.f32 %v3221, %v3222
  %3224 = vadd.xlane.f32.xlu0 %v3223
  %v3225 = vpop.xlane.xlu0 %3224
  %v3226 = vadd.f32 %v3010, %v3012
  %v3227 = vsel %vm2551, %v3014, 0.0
  %v3228 = vadd.f32 %v3226, %v3227
  %3229 = vadd.xlane.f32.xlu0 %v3228
  %v3230 = vpop.xlane.xlu0 %3229
  %v3231 = vadd.f32 %v3016, %v3018
  %v3232 = vsel %vm2551, %v3020, 0.0
  %v3233 = vadd.f32 %v3231, %v3232
  %3234 = vadd.xlane.f32.xlu0 %v3233
  %v3235 = vpop.xlane.xlu0 %3234
  %v3236 = vadd.f32 %v3022, %v3024
  %v3237 = vsel %vm2551, %v3026, 0.0
  %v3238 = vadd.f32 %v3236, %v3237
  %3239 = vadd.xlane.f32.xlu0 %v3238
  %v3240 = vpop.xlane.xlu0 %3239
  %v3241 = vadd.f32 %v3028, %v3030
  %v3242 = vsel %vm2551, %v3032, 0.0
  %v3243 = vadd.f32 %v3241, %v3242
  %3244 = vadd.xlane.f32.xlu0 %v3243
  %v3245 = vpop.xlane.xlu0 %3244
  %v3246 = vadd.f32 %v3034, %v3036
  %v3247 = vsel %vm2551, %v3038, 0.0
  %v3248 = vadd.f32 %v3246, %v3247
  %3249 = vadd.xlane.f32.xlu0 %v3248
  %v3250 = vpop.xlane.xlu0 %3249
  %v3251 = vadd.f32 %v3040, %v3042
  %v3252 = vsel %vm2551, %v3044, 0.0
  %v3253 = vadd.f32 %v3251, %v3252
  %3254 = vadd.xlane.f32.xlu0 %v3253
  %v3255 = vpop.xlane.xlu0 %3254
  %v3256 = vadd.f32 %v3046, %v3048
  %v3257 = vsel %vm2551, %v3050, 0.0
  %v3258 = vadd.f32 %v3256, %v3257
  %3259 = vadd.xlane.f32.xlu0 %v3258
  %v3260 = vpop.xlane.xlu0 %3259
  %v3261 = vadd.f32 %v3052, %v3054
  %v3262 = vsel %vm2551, %v3056, 0.0
  %v3263 = vadd.f32 %v3261, %v3262
  %3264 = vadd.xlane.f32.xlu0 %v3263
  %v3265 = vpop.xlane.xlu0 %3264
  %v3266 = vadd.f32 %v3058, %v3060
  %v3267 = vsel %vm2551, %v3062, 0.0
  %v3268 = vadd.f32 %v3266, %v3267
  %3269 = vadd.xlane.f32.xlu0 %v3268
  %v3270 = vpop.xlane.xlu0 %3269
  %v3271 = vadd.f32 %v3064, %v3066
  %v3272 = vsel %vm2551, %v3068, 0.0
  %v3273 = vadd.f32 %v3271, %v3272
  %3274 = vadd.xlane.f32.xlu0 %v3273
  %v3275 = vpop.xlane.xlu0 %3274
  %v3276 = vadd.f32 %v3070, %v3072
  %v3277 = vsel %vm2551, %v3074, 0.0
  %v3278 = vadd.f32 %v3276, %v3277
  %3279 = vadd.xlane.f32.xlu0 %v3278
  %v3280 = vpop.xlane.xlu0 %3279
  %v3281 = vadd.f32 %v3076, %v3078
  %v3282 = vsel %vm2551, %v3080, 0.0
  %v3283 = vadd.f32 %v3281, %v3282
  %3284 = vadd.xlane.f32.xlu0 %v3283
  %v3285 = vpop.xlane.xlu0 %3284
  %v3286 = vadd.f32 %v3082, %v3084
  %v3287 = vsel %vm2551, %v3086, 0.0
  %v3288 = vadd.f32 %v3286, %v3287
  %3289 = vadd.xlane.f32.xlu0 %v3288
  %v3290 = vpop.xlane.xlu0 %3289
  %v3291 = vadd.f32 %v3088, %v3090
  %v3292 = vsel %vm2551, %v3092, 0.0
  %v3293 = vadd.f32 %v3291, %v3292
  %3294 = vadd.xlane.f32.xlu0 %v3293
  %v3295 = vpop.xlane.xlu0 %3294
  %v3296 = vadd.f32 %v3094, %v3096
  %v3297 = vsel %vm2551, %v3098, 0.0
  %v3298 = vadd.f32 %v3296, %v3297
  %3299 = vadd.xlane.f32.xlu0 %v3298
  %v3300 = vpop.xlane.xlu0 %3299
  %v3301 = vadd.f32 %v3100, %v3102
  %v3302 = vsel %vm2551, %v3104, 0.0
  %v3303 = vadd.f32 %v3301, %v3302
  %3304 = vadd.xlane.f32.xlu0 %v3303
  %v3305 = vpop.xlane.xlu0 %3304
  %v3306 = vadd.f32 %v3106, %v3108
  %v3307 = vsel %vm2551, %v3110, 0.0
  %v3308 = vadd.f32 %v3306, %v3307
  %3309 = vadd.xlane.f32.xlu0 %v3308
  %v3310 = vpop.xlane.xlu0 %3309
  %v3311 = vrcp.pop %v3115
  %v3312 = vrcp.pop %v3120
  %v3313 = vrcp.pop %v3125
  %v3314 = vrcp.pop %v3130
  %v3315 = vrcp.pop %v3135
  %v3316 = vrcp.pop %v3140
  %v3317 = vrcp.pop %v3145
  %v3318 = vrcp.pop %v3150
  %v3319 = vrcp.pop %v3155
  %v3320 = vrcp.pop %v3160
  %v3321 = vrcp.pop %v3165
  %v3322 = vrcp.pop %v3170
  %v3323 = vrcp.pop %v3175
  %v3324 = vrcp.pop %v3180
  %v3325 = vrcp.pop %v3185
  %v3326 = vrcp.pop %v3190
  %v3327 = vrcp.pop %v3195
  %v3328 = vrcp.pop %v3200
  %v3329 = vrcp.pop %v3205
  %v3330 = vrcp.pop %v3210
  %v3331 = vrcp.pop %v3215
  %v3332 = vrcp.pop %v3220
  %v3333 = vrcp.pop %v3225
  %v3334 = vrcp.pop %v3230
  %v3335 = vrcp.pop %v3235
  %v3336 = vrcp.pop %v3240
  %v3337 = vrcp.pop %v3245
  %v3338 = vrcp.pop %v3250
  %v3339 = vrcp.pop %v3255
  %v3340 = vrcp.pop %v3260
  %v3341 = vrcp.pop %v3265
  %v3342 = vrcp.pop %v3270
  %v3343 = vrcp.pop %v3275
  %v3344 = vrcp.pop %v3280
  %v3345 = vrcp.pop %v3285
  %v3346 = vrcp.pop %v3290
  %v3347 = vrcp.pop %v3295
  %v3348 = vrcp.pop %v3300
  %v3349 = vrcp.pop %v3305
  %v3350 = vrcp.pop %v3310
  %v3351 = vmul.f32 %v2872, %v3311
  %v3352 = vmul.f32 %v2874, %v3311
  %v3353 = vmul.f32 %v2876, %v3311
  %v3354 = vmul.f32 %v2878, %v3312
  %v3355 = vmul.f32 %v2880, %v3312
  %v3356 = vmul.f32 %v2882, %v3312
  %v3357 = vmul.f32 %v2884, %v3313
  %v3358 = vmul.f32 %v2886, %v3313
  %v3359 = vmul.f32 %v2888, %v3313
  %v3360 = vmul.f32 %v2890, %v3314
  %v3361 = vmul.f32 %v2892, %v3314
  %v3362 = vmul.f32 %v2894, %v3314
  %v3363 = vmul.f32 %v2896, %v3315
  %v3364 = vmul.f32 %v2898, %v3315
  %v3365 = vmul.f32 %v2900, %v3315
  %v3366 = vmul.f32 %v2902, %v3316
  %v3367 = vmul.f32 %v2904, %v3316
  %v3368 = vmul.f32 %v2906, %v3316
  %v3369 = vmul.f32 %v2908, %v3317
  %v3370 = vmul.f32 %v2910, %v3317
  %v3371 = vmul.f32 %v2912, %v3317
  %v3372 = vmul.f32 %v2914, %v3318
  %v3373 = vmul.f32 %v2916, %v3318
  %v3374 = vmul.f32 %v2918, %v3318
  %v3375 = vmul.f32 %v2920, %v3319
  %v3376 = vmul.f32 %v2922, %v3319
  %v3377 = vmul.f32 %v2924, %v3319
  %v3378 = vmul.f32 %v2926, %v3320
  %v3379 = vmul.f32 %v2928, %v3320
  %v3380 = vmul.f32 %v2930, %v3320
  %v3381 = vmul.f32 %v2932, %v3321
  %v3382 = vmul.f32 %v2934, %v3321
  %v3383 = vmul.f32 %v2936, %v3321
  %v3384 = vmul.f32 %v2938, %v3322
  %v3385 = vmul.f32 %v2940, %v3322
  %v3386 = vmul.f32 %v2942, %v3322
  %v3387 = vmul.f32 %v2944, %v3323
  %v3388 = vmul.f32 %v2946, %v3323
  %v3389 = vmul.f32 %v2948, %v3323
  %v3390 = vmul.f32 %v2950, %v3324
  %v3391 = vmul.f32 %v2952, %v3324
  %v3392 = vmul.f32 %v2954, %v3324
  %v3393 = vmul.f32 %v2956, %v3325
  %v3394 = vmul.f32 %v2958, %v3325
  %v3395 = vmul.f32 %v2960, %v3325
  %v3396 = vmul.f32 %v2962, %v3326
  %v3397 = vmul.f32 %v2964, %v3326
  %v3398 = vmul.f32 %v2966, %v3326
  %v3399 = vmul.f32 %v2968, %v3327
  %v3400 = vmul.f32 %v2970, %v3327
  %v3401 = vmul.f32 %v2972, %v3327
  %v3402 = vmul.f32 %v2974, %v3328
  %v3403 = vmul.f32 %v2976, %v3328
  %v3404 = vmul.f32 %v2978, %v3328
  %v3405 = vmul.f32 %v2980, %v3329
  %v3406 = vmul.f32 %v2982, %v3329
  %v3407 = vmul.f32 %v2984, %v3329
  %v3408 = vmul.f32 %v2986, %v3330
  %v3409 = vmul.f32 %v2988, %v3330
  %v3410 = vmul.f32 %v2990, %v3330
  %v3411 = vmul.f32 %v2992, %v3331
  %v3412 = vmul.f32 %v2994, %v3331
  %v3413 = vmul.f32 %v2996, %v3331
  %v3414 = vmul.f32 %v2998, %v3332
  %v3415 = vmul.f32 %v3000, %v3332
  %v3416 = vmul.f32 %v3002, %v3332
  %v3417 = vmul.f32 %v3004, %v3333
  %v3418 = vmul.f32 %v3006, %v3333
  %v3419 = vmul.f32 %v3008, %v3333
  %v3420 = vmul.f32 %v3010, %v3334
  %v3421 = vmul.f32 %v3012, %v3334
  %v3422 = vmul.f32 %v3014, %v3334
  %v3423 = vmul.f32 %v3016, %v3335
  %v3424 = vmul.f32 %v3018, %v3335
  %v3425 = vmul.f32 %v3020, %v3335
  %v3426 = vmul.f32 %v3022, %v3336
  %v3427 = vmul.f32 %v3024, %v3336
  %v3428 = vmul.f32 %v3026, %v3336
  %v3429 = vmul.f32 %v3028, %v3337
  %v3430 = vmul.f32 %v3030, %v3337
  %v3431 = vmul.f32 %v3032, %v3337
  %v3432 = vmul.f32 %v3034, %v3338
  %v3433 = vmul.f32 %v3036, %v3338
  %v3434 = vmul.f32 %v3038, %v3338
  %v3435 = vmul.f32 %v3040, %v3339
  %v3436 = vmul.f32 %v3042, %v3339
  %v3437 = vmul.f32 %v3044, %v3339
  %v3438 = vmul.f32 %v3046, %v3340
  %v3439 = vmul.f32 %v3048, %v3340
  %v3440 = vmul.f32 %v3050, %v3340
  %v3441 = vmul.f32 %v3052, %v3341
  %v3442 = vmul.f32 %v3054, %v3341
  %v3443 = vmul.f32 %v3056, %v3341
  %v3444 = vmul.f32 %v3058, %v3342
  %v3445 = vmul.f32 %v3060, %v3342
  %v3446 = vmul.f32 %v3062, %v3342
  %v3447 = vmul.f32 %v3064, %v3343
  %v3448 = vmul.f32 %v3066, %v3343
  %v3449 = vmul.f32 %v3068, %v3343
  %v3450 = vmul.f32 %v3070, %v3344
  %v3451 = vmul.f32 %v3072, %v3344
  %v3452 = vmul.f32 %v3074, %v3344
  %v3453 = vmul.f32 %v3076, %v3345
  %v3454 = vmul.f32 %v3078, %v3345
  %v3455 = vmul.f32 %v3080, %v3345
  %v3456 = vmul.f32 %v3082, %v3346
  %v3457 = vmul.f32 %v3084, %v3346
  %v3458 = vmul.f32 %v3086, %v3346
  %v3459 = vmul.f32 %v3088, %v3347
  %v3460 = vmul.f32 %v3090, %v3347
  %v3461 = vmul.f32 %v3092, %v3347
  %v3462 = vmul.f32 %v3094, %v3348
  %v3463 = vmul.f32 %v3096, %v3348
  %v3464 = vmul.f32 %v3098, %v3348
  %v3465 = vmul.f32 %v3100, %v3349
  %v3466 = vmul.f32 %v3102, %v3349
  %v3467 = vmul.f32 %v3104, %v3349
  %v3468 = vmul.f32 %v3106, %v3350
  %v3469 = vmul.f32 %v3108, %v3350
  %v3470 = vmul.f32 %v3110, %v3350
  %v3472 = vsel %vm2551, %v3353, 0
  %v3475 = vsel %vm2551, %v3356, 0
  %v3478 = vsel %vm2551, %v3359, 0
  %v3481 = vsel %vm2551, %v3362, 0
  %v3484 = vsel %vm2551, %v3365, 0
  %v3487 = vsel %vm2551, %v3368, 0
  %v3490 = vsel %vm2551, %v3371, 0
  %v3493 = vsel %vm2551, %v3374, 0
  %v3496 = vsel %vm2551, %v3377, 0
  %v3499 = vsel %vm2551, %v3380, 0
  %v3502 = vsel %vm2551, %v3383, 0
  %v3505 = vsel %vm2551, %v3386, 0
  %v3508 = vsel %vm2551, %v3389, 0
  %v3511 = vsel %vm2551, %v3392, 0
  %v3514 = vsel %vm2551, %v3395, 0
  %v3517 = vsel %vm2551, %v3398, 0
  %v3520 = vsel %vm2551, %v3401, 0
  %v3523 = vsel %vm2551, %v3404, 0
  %v3526 = vsel %vm2551, %v3407, 0
  %v3529 = vsel %vm2551, %v3410, 0
  %v3532 = vsel %vm2551, %v3413, 0
  %v3535 = vsel %vm2551, %v3416, 0
  %v3538 = vsel %vm2551, %v3419, 0
  %v3541 = vsel %vm2551, %v3422, 0
  %v3544 = vsel %vm2551, %v3425, 0
  %v3547 = vsel %vm2551, %v3428, 0
  %v3550 = vsel %vm2551, %v3431, 0
  %v3553 = vsel %vm2551, %v3434, 0
  %v3556 = vsel %vm2551, %v3437, 0
  %v3559 = vsel %vm2551, %v3440, 0
  %v3562 = vsel %vm2551, %v3443, 0
  %v3565 = vsel %vm2551, %v3446, 0
  %v3568 = vsel %vm2551, %v3449, 0
  %v3571 = vsel %vm2551, %v3452, 0
  %v3574 = vsel %vm2551, %v3455, 0
  %v3577 = vsel %vm2551, %v3458, 0
  %v3580 = vsel %vm2551, %v3461, 0
  %v3583 = vsel %vm2551, %v3464, 0
  %v3586 = vsel %vm2551, %v3467, 0
  %v3589 = vsel %vm2551, %v3470, 0
  %3591 = vmatprep.subr.mxu0 0.0
  %3592 = vmatpush1.msra.mxu0 %v1325
  %3593 = vmatprep.subr.mxu0 0.0
  %3594 = vmatpush1.msra.mxu0 %v1330
  %3595 = vmatprep.subr.mxu0 0.0
  %3596 = vmatpush1.msra.mxu0 %v1335
  %3597 = vmatprep.subr.mxu0 0.0
  %3598 = vmatpush1.msra.mxu0 %v1340
  %3599 = vmatprep.subr.mxu0 0.0
  %3600 = vmatpush1.msra.mxu0 %v1345
  %3601 = vmatprep.subr.mxu0 0.0
  %3602 = vmatpush1.msra.mxu0 %v1350
  %3603 = vmatprep.subr.mxu0 0.0
  %3604 = vmatpush1.msra.mxu0 %v1355
  %3605 = vmatprep.subr.mxu0 0.0
  %3606 = vmatpush1.msra.mxu0 %v1360
  %3607 = vmatprep.subr.mxu0 0.0
  %3608 = vmatpush1.msra.mxu0 %v1365
  %3609 = vmatprep.subr.mxu0 0.0
  %3610 = vmatpush1.msra.mxu0 %v1370
  %3611 = vmatprep.subr.mxu0 0.0
  %3612 = vmatpush1.msra.mxu0 %v1375
  %3613 = vmatprep.subr.mxu0 0.0
  %3614 = vmatpush1.msra.mxu0 %v1380
  %3615 = vmatprep.subr.mxu0 0.0
  %3616 = vmatpush1.msra.mxu0 %v1385
  %3617 = vmatprep.subr.mxu0 0.0
  %3618 = vmatpush1.msra.mxu0 %v1390
  %3619 = vmatprep.subr.mxu0 0.0
  %3620 = vmatpush1.msra.mxu0 %v1395
  %3621 = vmatprep.subr.mxu0 0.0
  %3622 = vmatpush1.msra.mxu0 %v1400
  %3623 = vmatprep.subr.mxu0 0.0
  %3624 = vmatpush1.msra.mxu0 %v1405
  %3625 = vmatprep.subr.mxu0 0.0
  %3626 = vmatpush1.msra.mxu0 %v1410
  %3627 = vmatprep.subr.mxu0 0.0
  %3628 = vmatpush1.msra.mxu0 %v1415
  %3629 = vmatprep.subr.mxu0 0.0
  %3630 = vmatpush1.msra.mxu0 %v1420
  %3631 = vmatprep.subr.mxu0 0.0
  %3632 = vmatpush1.msra.mxu0 %v1425
  %3633 = vmatprep.subr.mxu0 0.0
  %3634 = vmatpush1.msra.mxu0 %v1430
  %3635 = vmatprep.subr.mxu0 0.0
  %3636 = vmatpush1.msra.mxu0 %v1435
  %3637 = vmatprep.subr.mxu0 0.0
  %3638 = vmatpush1.msra.mxu0 %v1440
  %3639 = vmatprep.subr.mxu0 0.0
  %3640 = vmatpush1.msra.mxu0 %v1445
  %3641 = vmatprep.subr.mxu0 0.0
  %3642 = vmatpush1.msra.mxu0 %v1450
  %3643 = vmatprep.subr.mxu0 0.0
  %3644 = vmatpush1.msra.mxu0 %v1455
  %3645 = vmatprep.subr.mxu0 0.0
  %3646 = vmatpush1.msra.mxu0 %v1460
  %3647 = vmatprep.subr.mxu0 0.0
  %3648 = vmatpush1.msra.mxu0 %v1465
  %3649 = vmatprep.subr.mxu0 0.0
  %3650 = vmatpush1.msra.mxu0 %v1470
  %3651 = vmatprep.subr.mxu0 0.0
  %3652 = vmatpush1.msra.mxu0 %v1475
  %3653 = vmatprep.subr.mxu0 0.0
  %3654 = vmatpush1.msra.mxu0 %v1480
  %3655 = vmatprep.mubr.f32.mxu0 %v3352
  %3656 = vmatmul.mubr.f32.gmra.mrb[0].mxu0 %v3351
  %v3657 = vpop.f32.mrb[0].mxu0
  %v3658 = vadd.f32 0.0, %v3657
  %v3659 = vpop.f32.mrb[0].mxu0
  %3660 = vmatprep.mubr.f32.mxu0 %v3355
  %3661 = vmatmul.mubr.f32.gmra.mrb[0].mxu0 %v3354
  %v3662 = vpop.f32.mrb[0].mxu0
  %v3663 = vadd.f32 0.0, %v3662
  %v3664 = vpop.f32.mrb[0].mxu0
  %3665 = vmatprep.mubr.f32.mxu0 %v3358
  %3666 = vmatmul.mubr.f32.gmra.mrb[0].mxu0 %v3357
  %v3667 = vpop.f32.mrb[0].mxu0
  %v3668 = vadd.f32 0.0, %v3667
  %v3669 = vpop.f32.mrb[0].mxu0
  %3670 = vmatprep.mubr.f32.mxu0 %v3361
  %3671 = vmatmul.mubr.f32.gmra.mrb[0].mxu0 %v3360
  %v3672 = vpop.f32.mrb[0].mxu0
  %v3673 = vadd.f32 0.0, %v3672
  %v3674 = vpop.f32.mrb[0].mxu0
  %3675 = vmatprep.mubr.f32.mxu0 %v3364
  %3676 = vmatmul.mubr.f32.gmra.mrb[0].mxu0 %v3363
  %v3677 = vpop.f32.mrb[0].mxu0
  %v3678 = vadd.f32 0.0, %v3677
  %v3679 = vpop.f32.mrb[0].mxu0
  %3680 = vmatprep.mubr.f32.mxu0 %v3367
  %3681 = vmatmul.mubr.f32.gmra.mrb[0].mxu0 %v3366
  %v3682 = vpop.f32.mrb[0].mxu0
  %v3683 = vadd.f32 0.0, %v3682
  %v3684 = vpop.f32.mrb[0].mxu0
  %3685 = vmatprep.mubr.f32.mxu0 %v3370
  %3686 = vmatmul.mubr.f32.gmra.mrb[0].mxu0 %v3369
  %v3687 = vpop.f32.mrb[0].mxu0
  %v3688 = vadd.f32 0.0, %v3687
  %v3689 = vpop.f32.mrb[0].mxu0
  %3690 = vmatprep.mubr.f32.mxu0 %v3373
  %3691 = vmatmul.mubr.f32.gmra.mrb[0].mxu0 %v3372
  %v3692 = vpop.f32.mrb[0].mxu0
  %v3693 = vadd.f32 0.0, %v3692
  %v3694 = vpop.f32.mrb[0].mxu0
  %3695 = vmatprep.mubr.f32.mxu0 %v3376
  %3696 = vmatmul.mubr.f32.gmra.mrb[0].mxu0 %v3375
  %v3697 = vpop.f32.mrb[0].mxu0
  %v3698 = vadd.f32 0.0, %v3697
  %v3699 = vpop.f32.mrb[0].mxu0
  %3700 = vmatprep.mubr.f32.mxu0 %v3379
  %3701 = vmatmul.mubr.f32.gmra.mrb[0].mxu0 %v3378
  %v3702 = vpop.f32.mrb[0].mxu0
  %v3703 = vadd.f32 0.0, %v3702
  %v3704 = vpop.f32.mrb[0].mxu0
  %3705 = vmatprep.mubr.f32.mxu0 %v3382
  %3706 = vmatmul.mubr.f32.gmra.mrb[0].mxu0 %v3381
  %v3707 = vpop.f32.mrb[0].mxu0
  %v3708 = vadd.f32 0.0, %v3707
  %v3709 = vpop.f32.mrb[0].mxu0
  %3710 = vmatprep.mubr.f32.mxu0 %v3385
  %3711 = vmatmul.mubr.f32.gmra.mrb[0].mxu0 %v3384
  %v3712 = vpop.f32.mrb[0].mxu0
  %v3713 = vadd.f32 0.0, %v3712
  %v3714 = vpop.f32.mrb[0].mxu0
  %3715 = vmatprep.mubr.f32.mxu0 %v3388
  %3716 = vmatmul.mubr.f32.gmra.mrb[0].mxu0 %v3387
  %v3717 = vpop.f32.mrb[0].mxu0
  %v3718 = vadd.f32 0.0, %v3717
  %v3719 = vpop.f32.mrb[0].mxu0
  %3720 = vmatprep.mubr.f32.mxu0 %v3391
  %3721 = vmatmul.mubr.f32.gmra.mrb[0].mxu0 %v3390
  %v3722 = vpop.f32.mrb[0].mxu0
  %v3723 = vadd.f32 0.0, %v3722
  %v3724 = vpop.f32.mrb[0].mxu0
  %3725 = vmatprep.mubr.f32.mxu0 %v3394
  %3726 = vmatmul.mubr.f32.gmra.mrb[0].mxu0 %v3393
  %v3727 = vpop.f32.mrb[0].mxu0
  %v3728 = vadd.f32 0.0, %v3727
  %v3729 = vpop.f32.mrb[0].mxu0
  %3730 = vmatprep.mubr.f32.mxu0 %v3397
  %3731 = vmatmul.mubr.f32.gmra.mrb[0].mxu0 %v3396
  %v3732 = vpop.f32.mrb[0].mxu0
  %v3733 = vadd.f32 0.0, %v3732
  %v3734 = vpop.f32.mrb[0].mxu0
  %3735 = vmatprep.mubr.f32.mxu0 %v3400
  %3736 = vmatmul.mubr.f32.gmra.mrb[0].mxu0 %v3399
  %v3737 = vpop.f32.mrb[0].mxu0
  %v3738 = vadd.f32 0.0, %v3737
  %v3739 = vpop.f32.mrb[0].mxu0
  %3740 = vmatprep.mubr.f32.mxu0 %v3403
  %3741 = vmatmul.mubr.f32.gmra.mrb[0].mxu0 %v3402
  %v3742 = vpop.f32.mrb[0].mxu0
  %v3743 = vadd.f32 0.0, %v3742
  %v3744 = vpop.f32.mrb[0].mxu0
  %3745 = vmatprep.mubr.f32.mxu0 %v3406
  %3746 = vmatmul.mubr.f32.gmra.mrb[0].mxu0 %v3405
  %v3747 = vpop.f32.mrb[0].mxu0
  %v3748 = vadd.f32 0.0, %v3747
  %v3749 = vpop.f32.mrb[0].mxu0
  %3750 = vmatprep.mubr.f32.mxu0 %v3409
  %3751 = vmatmul.mubr.f32.gmra.mrb[0].mxu0 %v3408
  %v3752 = vpop.f32.mrb[0].mxu0
  %v3753 = vadd.f32 0.0, %v3752
  %v3754 = vpop.f32.mrb[0].mxu0
  %3755 = vmatprep.mubr.f32.mxu0 %v3412
  %3756 = vmatmul.mubr.f32.gmra.mrb[0].mxu0 %v3411
  %v3757 = vpop.f32.mrb[0].mxu0
  %v3758 = vadd.f32 0.0, %v3757
  %v3759 = vpop.f32.mrb[0].mxu0
  %3760 = vmatprep.mubr.f32.mxu0 %v3415
  %3761 = vmatmul.mubr.f32.gmra.mrb[0].mxu0 %v3414
  %v3762 = vpop.f32.mrb[0].mxu0
  %v3763 = vadd.f32 0.0, %v3762
  %v3764 = vpop.f32.mrb[0].mxu0
  %3765 = vmatprep.mubr.f32.mxu0 %v3418
  %3766 = vmatmul.mubr.f32.gmra.mrb[0].mxu0 %v3417
  %v3767 = vpop.f32.mrb[0].mxu0
  %v3768 = vadd.f32 0.0, %v3767
  %v3769 = vpop.f32.mrb[0].mxu0
  %3770 = vmatprep.mubr.f32.mxu0 %v3421
  %3771 = vmatmul.mubr.f32.gmra.mrb[0].mxu0 %v3420
  %v3772 = vpop.f32.mrb[0].mxu0
  %v3773 = vadd.f32 0.0, %v3772
  %v3774 = vpop.f32.mrb[0].mxu0
  %3775 = vmatprep.mubr.f32.mxu0 %v3424
  %3776 = vmatmul.mubr.f32.gmra.mrb[0].mxu0 %v3423
  %v3777 = vpop.f32.mrb[0].mxu0
  %v3778 = vadd.f32 0.0, %v3777
  %v3779 = vpop.f32.mrb[0].mxu0
  %3780 = vmatprep.mubr.f32.mxu0 %v3427
  %3781 = vmatmul.mubr.f32.gmra.mrb[0].mxu0 %v3426
  %v3782 = vpop.f32.mrb[0].mxu0
  %v3783 = vadd.f32 0.0, %v3782
  %v3784 = vpop.f32.mrb[0].mxu0
  %3785 = vmatprep.mubr.f32.mxu0 %v3430
  %3786 = vmatmul.mubr.f32.gmra.mrb[0].mxu0 %v3429
  %v3787 = vpop.f32.mrb[0].mxu0
  %v3788 = vadd.f32 0.0, %v3787
  %v3789 = vpop.f32.mrb[0].mxu0
  %3790 = vmatprep.mubr.f32.mxu0 %v3433
  %3791 = vmatmul.mubr.f32.gmra.mrb[0].mxu0 %v3432
  %v3792 = vpop.f32.mrb[0].mxu0
  %v3793 = vadd.f32 0.0, %v3792
  %v3794 = vpop.f32.mrb[0].mxu0
  %3795 = vmatprep.mubr.f32.mxu0 %v3436
  %3796 = vmatmul.mubr.f32.gmra.mrb[0].mxu0 %v3435
  %v3797 = vpop.f32.mrb[0].mxu0
  %v3798 = vadd.f32 0.0, %v3797
  %v3799 = vpop.f32.mrb[0].mxu0
  %3800 = vmatprep.mubr.f32.mxu0 %v3439
  %3801 = vmatmul.mubr.f32.gmra.mrb[0].mxu0 %v3438
  %v3802 = vpop.f32.mrb[0].mxu0
  %v3803 = vadd.f32 0.0, %v3802
  %v3804 = vpop.f32.mrb[0].mxu0
  %3805 = vmatprep.mubr.f32.mxu0 %v3442
  %3806 = vmatmul.mubr.f32.gmra.mrb[0].mxu0 %v3441
  %v3807 = vpop.f32.mrb[0].mxu0
  %v3808 = vadd.f32 0.0, %v3807
  %v3809 = vpop.f32.mrb[0].mxu0
  %3810 = vmatprep.mubr.f32.mxu0 %v3445
  %3811 = vmatmul.mubr.f32.gmra.mrb[0].mxu0 %v3444
  %v3812 = vpop.f32.mrb[0].mxu0
  %v3813 = vadd.f32 0.0, %v3812
  %v3814 = vpop.f32.mrb[0].mxu0
  %3815 = vmatprep.mubr.f32.mxu0 %v3448
  %3816 = vmatmul.mubr.f32.gmra.mrb[0].mxu0 %v3447
  %v3817 = vpop.f32.mrb[0].mxu0
  %v3818 = vadd.f32 0.0, %v3817
  %v3819 = vpop.f32.mrb[0].mxu0
  %3820 = vmatprep.mubr.f32.mxu0 %v3451
  %3821 = vmatmul.mubr.f32.gmra.mrb[0].mxu0 %v3450
  %v3822 = vpop.f32.mrb[0].mxu0
  %v3823 = vadd.f32 0.0, %v3822
  %v3824 = vpop.f32.mrb[0].mxu0
  %3825 = vmatprep.mubr.f32.mxu0 %v3454
  %3826 = vmatmul.mubr.f32.gmra.mrb[0].mxu0 %v3453
  %v3827 = vpop.f32.mrb[0].mxu0
  %v3828 = vadd.f32 0.0, %v3827
  %v3829 = vpop.f32.mrb[0].mxu0
  %3830 = vmatprep.mubr.f32.mxu0 %v3457
  %3831 = vmatmul.mubr.f32.gmra.mrb[0].mxu0 %v3456
  %v3832 = vpop.f32.mrb[0].mxu0
  %v3833 = vadd.f32 0.0, %v3832
  %v3834 = vpop.f32.mrb[0].mxu0
  %3835 = vmatprep.mubr.f32.mxu0 %v3460
  %3836 = vmatmul.mubr.f32.gmra.mrb[0].mxu0 %v3459
  %v3837 = vpop.f32.mrb[0].mxu0
  %v3838 = vadd.f32 0.0, %v3837
  %v3839 = vpop.f32.mrb[0].mxu0
  %3840 = vmatprep.mubr.f32.mxu0 %v3463
  %3841 = vmatmul.mubr.f32.gmra.mrb[0].mxu0 %v3462
  %v3842 = vpop.f32.mrb[0].mxu0
  %v3843 = vadd.f32 0.0, %v3842
  %v3844 = vpop.f32.mrb[0].mxu0
  %3845 = vmatprep.mubr.f32.mxu0 %v3466
  %3846 = vmatmul.mubr.f32.gmra.mrb[0].mxu0 %v3465
  %v3847 = vpop.f32.mrb[0].mxu0
  %v3848 = vadd.f32 0.0, %v3847
  %v3849 = vpop.f32.mrb[0].mxu0
  %3850 = vmatprep.mubr.f32.mxu0 %v3469
  %3851 = vmatmul.mubr.f32.gmra.mrb[0].mxu0 %v3468
  %v3852 = vpop.f32.mrb[0].mxu0
  %v3853 = vadd.f32 0.0, %v3852
  %v3854 = vpop.f32.mrb[0].mxu0
  %3855 = vdwg.mxu0
  %3856 = vmatprep.subr.mxu0 0.0
  %3857 = vmatpush1.msra.mxu0 %v1485
  %3858 = vmatprep.subr.mxu0 0.0
  %3859 = vmatpush1.msra.mxu0 %v1490
  %3860 = vmatprep.subr.mxu0 0.0
  %3861 = vmatpush1.msra.mxu0 %v1495
  %3862 = vmatprep.subr.mxu0 0.0
  %3863 = vmatpush1.msra.mxu0 %v1500
  %3864 = vmatprep.subr.mxu0 0.0
  %3865 = vmatpush1.msra.mxu0 %v1505
  %3866 = vmatprep.subr.mxu0 0.0
  %3867 = vmatpush1.msra.mxu0 %v1510
  %3868 = vmatprep.subr.mxu0 0.0
  %3869 = vmatpush1.msra.mxu0 %v1515
  %3870 = vmatprep.subr.mxu0 0.0
  %3871 = vmatpush1.msra.mxu0 %v1520
  %3872 = vmatprep.subr.mxu0 0.0
  %3873 = vmatpush1.msra.mxu0 0.0
  %3874 = vmatprep.subr.mxu0 0.0
  %3875 = vmatpush1.msra.mxu0 0.0
  %3876 = vmatprep.subr.mxu0 0.0
  %3877 = vmatpush1.msra.mxu0 0.0
  %3878 = vmatprep.subr.mxu0 0.0
  %3879 = vmatpush1.msra.mxu0 0.0
  %3880 = vmatprep.subr.mxu0 0.0
  %3881 = vmatpush1.msra.mxu0 0.0
  %3882 = vmatprep.subr.mxu0 0.0
  %3883 = vmatpush1.msra.mxu0 0.0
  %3884 = vmatprep.subr.mxu0 0.0
  %3885 = vmatpush1.msra.mxu0 0.0
  %3886 = vmatprep.subr.mxu0 0.0
  %3887 = vmatpush1.msra.mxu0 0.0
  %3888 = vmatprep.subr.mxu0 0.0
  %3889 = vmatpush1.msra.mxu0 0.0
  %3890 = vmatprep.subr.mxu0 0.0
  %3891 = vmatpush1.msra.mxu0 0.0
  %3892 = vmatprep.subr.mxu0 0.0
  %3893 = vmatpush1.msra.mxu0 0.0
  %3894 = vmatprep.subr.mxu0 0.0
  %3895 = vmatpush1.msra.mxu0 0.0
  %3896 = vmatprep.subr.mxu0 0.0
  %3897 = vmatpush1.msra.mxu0 0.0
  %3898 = vmatprep.subr.mxu0 0.0
  %3899 = vmatpush1.msra.mxu0 0.0
  %3900 = vmatprep.subr.mxu0 0.0
  %3901 = vmatpush1.msra.mxu0 0.0
  %3902 = vmatprep.subr.mxu0 0.0
  %3903 = vmatpush1.msra.mxu0 0.0
  %3904 = vmatprep.subr.mxu0 0.0
  %3905 = vmatpush1.msra.mxu0 0.0
  %3906 = vmatprep.subr.mxu0 0.0
  %3907 = vmatpush1.msra.mxu0 0.0
  %3908 = vmatprep.subr.mxu0 0.0
  %3909 = vmatpush1.msra.mxu0 0.0
  %3910 = vmatprep.subr.mxu0 0.0
  %3911 = vmatpush1.msra.mxu0 0.0
  %3912 = vmatprep.subr.mxu0 0.0
  %3913 = vmatpush1.msra.mxu0 0.0
  %3914 = vmatprep.subr.mxu0 0.0
  %3915 = vmatpush1.msra.mxu0 0.0
  %3916 = vmatprep.subr.mxu0 0.0
  %3917 = vmatpush1.msra.mxu0 0.0
  %3918 = vmatprep.subr.mxu0 0.0
  %3919 = vmatpush1.msra.mxu0 0.0
  %3920 = vmatprep.mubr.f32.mxu0 0.0
  %3921 = vmatmul.mubr.f32.gmra.mrb[0].mxu0 %v3472
  %v3922 = vpop.f32.mrb[0].mxu0
  %v3923 = vadd.f32 %v3658, %v3922
  %v3924 = vpop.f32.mrb[0].mxu0
  %3925 = vmatprep.mubr.f32.mxu0 0.0
  %3926 = vmatmul.mubr.f32.gmra.mrb[0].mxu0 %v3475
  %v3927 = vpop.f32.mrb[0].mxu0
  %v3928 = vadd.f32 %v3663, %v3927
  %v3929 = vpop.f32.mrb[0].mxu0
  %3930 = vmatprep.mubr.f32.mxu0 0.0
  %3931 = vmatmul.mubr.f32.gmra.mrb[0].mxu0 %v3478
  %v3932 = vpop.f32.mrb[0].mxu0
  %v3933 = vadd.f32 %v3668, %v3932
  %v3934 = vpop.f32.mrb[0].mxu0
  %3935 = vmatprep.mubr.f32.mxu0 0.0
  %3936 = vmatmul.mubr.f32.gmra.mrb[0].mxu0 %v3481
  %v3937 = vpop.f32.mrb[0].mxu0
  %v3938 = vadd.f32 %v3673, %v3937
  %v3939 = vpop.f32.mrb[0].mxu0
  %3940 = vmatprep.mubr.f32.mxu0 0.0
  %3941 = vmatmul.mubr.f32.gmra.mrb[0].mxu0 %v3484
  %v3942 = vpop.f32.mrb[0].mxu0
  %v3943 = vadd.f32 %v3678, %v3942
  %v3944 = vpop.f32.mrb[0].mxu0
  %3945 = vmatprep.mubr.f32.mxu0 0.0
  %3946 = vmatmul.mubr.f32.gmra.mrb[0].mxu0 %v3487
  %v3947 = vpop.f32.mrb[0].mxu0
  %v3948 = vadd.f32 %v3683, %v3947
  %v3949 = vpop.f32.mrb[0].mxu0
  %3950 = vmatprep.mubr.f32.mxu0 0.0
  %3951 = vmatmul.mubr.f32.gmra.mrb[0].mxu0 %v3490
  %v3952 = vpop.f32.mrb[0].mxu0
  %v3953 = vadd.f32 %v3688, %v3952
  %v3954 = vpop.f32.mrb[0].mxu0
  %3955 = vmatprep.mubr.f32.mxu0 0.0
  %3956 = vmatmul.mubr.f32.gmra.mrb[0].mxu0 %v3493
  %v3957 = vpop.f32.mrb[0].mxu0
  %v3958 = vadd.f32 %v3693, %v3957
  %v3959 = vpop.f32.mrb[0].mxu0
  %3960 = vmatprep.mubr.f32.mxu0 0.0
  %3961 = vmatmul.mubr.f32.gmra.mrb[0].mxu0 %v3496
  %v3962 = vpop.f32.mrb[0].mxu0
  %v3963 = vadd.f32 %v3698, %v3962
  %v3964 = vpop.f32.mrb[0].mxu0
  %3965 = vmatprep.mubr.f32.mxu0 0.0
  %3966 = vmatmul.mubr.f32.gmra.mrb[0].mxu0 %v3499
  %v3967 = vpop.f32.mrb[0].mxu0
  %v3968 = vadd.f32 %v3703, %v3967
  %v3969 = vpop.f32.mrb[0].mxu0
  %3970 = vmatprep.mubr.f32.mxu0 0.0
  %3971 = vmatmul.mubr.f32.gmra.mrb[0].mxu0 %v3502
  %v3972 = vpop.f32.mrb[0].mxu0
  %v3973 = vadd.f32 %v3708, %v3972
  %v3974 = vpop.f32.mrb[0].mxu0
  %3975 = vmatprep.mubr.f32.mxu0 0.0
  %3976 = vmatmul.mubr.f32.gmra.mrb[0].mxu0 %v3505
  %v3977 = vpop.f32.mrb[0].mxu0
  %v3978 = vadd.f32 %v3713, %v3977
  %v3979 = vpop.f32.mrb[0].mxu0
  %3980 = vmatprep.mubr.f32.mxu0 0.0
  %3981 = vmatmul.mubr.f32.gmra.mrb[0].mxu0 %v3508
  %v3982 = vpop.f32.mrb[0].mxu0
  %v3983 = vadd.f32 %v3718, %v3982
  %v3984 = vpop.f32.mrb[0].mxu0
  %3985 = vmatprep.mubr.f32.mxu0 0.0
  %3986 = vmatmul.mubr.f32.gmra.mrb[0].mxu0 %v3511
  %v3987 = vpop.f32.mrb[0].mxu0
  %v3988 = vadd.f32 %v3723, %v3987
  %v3989 = vpop.f32.mrb[0].mxu0
  %3990 = vmatprep.mubr.f32.mxu0 0.0
  %3991 = vmatmul.mubr.f32.gmra.mrb[0].mxu0 %v3514
  %v3992 = vpop.f32.mrb[0].mxu0
  %v3993 = vadd.f32 %v3728, %v3992
  %v3994 = vpop.f32.mrb[0].mxu0
  %3995 = vmatprep.mubr.f32.mxu0 0.0
  %3996 = vmatmul.mubr.f32.gmra.mrb[0].mxu0 %v3517
  %v3997 = vpop.f32.mrb[0].mxu0
  %v3998 = vadd.f32 %v3733, %v3997
  %v3999 = vpop.f32.mrb[0].mxu0
  %4000 = vmatprep.mubr.f32.mxu0 0.0
  %4001 = vmatmul.mubr.f32.gmra.mrb[0].mxu0 %v3520
  %v4002 = vpop.f32.mrb[0].mxu0
  %v4003 = vadd.f32 %v3738, %v4002
  %v4004 = vpop.f32.mrb[0].mxu0
  %4005 = vmatprep.mubr.f32.mxu0 0.0
  %4006 = vmatmul.mubr.f32.gmra.mrb[0].mxu0 %v3523
  %v4007 = vpop.f32.mrb[0].mxu0
  %v4008 = vadd.f32 %v3743, %v4007
  %v4009 = vpop.f32.mrb[0].mxu0
  %4010 = vmatprep.mubr.f32.mxu0 0.0
  %4011 = vmatmul.mubr.f32.gmra.mrb[0].mxu0 %v3526
  %v4012 = vpop.f32.mrb[0].mxu0
  %v4013 = vadd.f32 %v3748, %v4012
  %v4014 = vpop.f32.mrb[0].mxu0
  %4015 = vmatprep.mubr.f32.mxu0 0.0
  %4016 = vmatmul.mubr.f32.gmra.mrb[0].mxu0 %v3529
  %v4017 = vpop.f32.mrb[0].mxu0
  %v4018 = vadd.f32 %v3753, %v4017
  %v4019 = vpop.f32.mrb[0].mxu0
  %4020 = vmatprep.mubr.f32.mxu0 0.0
  %4021 = vmatmul.mubr.f32.gmra.mrb[0].mxu0 %v3532
  %v4022 = vpop.f32.mrb[0].mxu0
  %v4023 = vadd.f32 %v3758, %v4022
  %v4024 = vpop.f32.mrb[0].mxu0
  %4025 = vmatprep.mubr.f32.mxu0 0.0
  %4026 = vmatmul.mubr.f32.gmra.mrb[0].mxu0 %v3535
  %v4027 = vpop.f32.mrb[0].mxu0
  %v4028 = vadd.f32 %v3763, %v4027
  %v4029 = vpop.f32.mrb[0].mxu0
  %4030 = vmatprep.mubr.f32.mxu0 0.0
  %4031 = vmatmul.mubr.f32.gmra.mrb[0].mxu0 %v3538
  %v4032 = vpop.f32.mrb[0].mxu0
  %v4033 = vadd.f32 %v3768, %v4032
  %v4034 = vpop.f32.mrb[0].mxu0
  %4035 = vmatprep.mubr.f32.mxu0 0.0
  %4036 = vmatmul.mubr.f32.gmra.mrb[0].mxu0 %v3541
  %v4037 = vpop.f32.mrb[0].mxu0
  %v4038 = vadd.f32 %v3773, %v4037
  %v4039 = vpop.f32.mrb[0].mxu0
  %4040 = vmatprep.mubr.f32.mxu0 0.0
  %4041 = vmatmul.mubr.f32.gmra.mrb[0].mxu0 %v3544
  %v4042 = vpop.f32.mrb[0].mxu0
  %v4043 = vadd.f32 %v3778, %v4042
  %v4044 = vpop.f32.mrb[0].mxu0
  %4045 = vmatprep.mubr.f32.mxu0 0.0
  %4046 = vmatmul.mubr.f32.gmra.mrb[0].mxu0 %v3547
  %v4047 = vpop.f32.mrb[0].mxu0
  %v4048 = vadd.f32 %v3783, %v4047
  %v4049 = vpop.f32.mrb[0].mxu0
  %4050 = vmatprep.mubr.f32.mxu0 0.0
  %4051 = vmatmul.mubr.f32.gmra.mrb[0].mxu0 %v3550
  %v4052 = vpop.f32.mrb[0].mxu0
  %v4053 = vadd.f32 %v3788, %v4052
  %v4054 = vpop.f32.mrb[0].mxu0
  %4055 = vmatprep.mubr.f32.mxu0 0.0
  %4056 = vmatmul.mubr.f32.gmra.mrb[0].mxu0 %v3553
  %v4057 = vpop.f32.mrb[0].mxu0
  %v4058 = vadd.f32 %v3793, %v4057
  %v4059 = vpop.f32.mrb[0].mxu0
  %4060 = vmatprep.mubr.f32.mxu0 0.0
  %4061 = vmatmul.mubr.f32.gmra.mrb[0].mxu0 %v3556
  %v4062 = vpop.f32.mrb[0].mxu0
  %v4063 = vadd.f32 %v3798, %v4062
  %v4064 = vpop.f32.mrb[0].mxu0
  %4065 = vmatprep.mubr.f32.mxu0 0.0
  %4066 = vmatmul.mubr.f32.gmra.mrb[0].mxu0 %v3559
  %v4067 = vpop.f32.mrb[0].mxu0
  %v4068 = vadd.f32 %v3803, %v4067
  %v4069 = vpop.f32.mrb[0].mxu0
  %4070 = vmatprep.mubr.f32.mxu0 0.0
  %4071 = vmatmul.mubr.f32.gmra.mrb[0].mxu0 %v3562
  %v4072 = vpop.f32.mrb[0].mxu0
  %v4073 = vadd.f32 %v3808, %v4072
  %v4074 = vpop.f32.mrb[0].mxu0
  %4075 = vmatprep.mubr.f32.mxu0 0.0
  %4076 = vmatmul.mubr.f32.gmra.mrb[0].mxu0 %v3565
  %v4077 = vpop.f32.mrb[0].mxu0
  %v4078 = vadd.f32 %v3813, %v4077
  %v4079 = vpop.f32.mrb[0].mxu0
  %4080 = vmatprep.mubr.f32.mxu0 0.0
  %4081 = vmatmul.mubr.f32.gmra.mrb[0].mxu0 %v3568
  %v4082 = vpop.f32.mrb[0].mxu0
  %v4083 = vadd.f32 %v3818, %v4082
  %v4084 = vpop.f32.mrb[0].mxu0
  %4085 = vmatprep.mubr.f32.mxu0 0.0
  %4086 = vmatmul.mubr.f32.gmra.mrb[0].mxu0 %v3571
  %v4087 = vpop.f32.mrb[0].mxu0
  %v4088 = vadd.f32 %v3823, %v4087
  %v4089 = vpop.f32.mrb[0].mxu0
  %4090 = vmatprep.mubr.f32.mxu0 0.0
  %4091 = vmatmul.mubr.f32.gmra.mrb[0].mxu0 %v3574
  %v4092 = vpop.f32.mrb[0].mxu0
  %v4093 = vadd.f32 %v3828, %v4092
  %v4094 = vpop.f32.mrb[0].mxu0
  %4095 = vmatprep.mubr.f32.mxu0 0.0
  %4096 = vmatmul.mubr.f32.gmra.mrb[0].mxu0 %v3577
  %v4097 = vpop.f32.mrb[0].mxu0
  %v4098 = vadd.f32 %v3833, %v4097
  %v4099 = vpop.f32.mrb[0].mxu0
  %4100 = vmatprep.mubr.f32.mxu0 0.0
  %4101 = vmatmul.mubr.f32.gmra.mrb[0].mxu0 %v3580
  %v4102 = vpop.f32.mrb[0].mxu0
  %v4103 = vadd.f32 %v3838, %v4102
  %v4104 = vpop.f32.mrb[0].mxu0
  %4105 = vmatprep.mubr.f32.mxu0 0.0
  %4106 = vmatmul.mubr.f32.gmra.mrb[0].mxu0 %v3583
  %v4107 = vpop.f32.mrb[0].mxu0
  %v4108 = vadd.f32 %v3843, %v4107
  %v4109 = vpop.f32.mrb[0].mxu0
  %4110 = vmatprep.mubr.f32.mxu0 0.0
  %4111 = vmatmul.mubr.f32.gmra.mrb[0].mxu0 %v3586
  %v4112 = vpop.f32.mrb[0].mxu0
  %v4113 = vadd.f32 %v3848, %v4112
  %v4114 = vpop.f32.mrb[0].mxu0
  %4115 = vmatprep.mubr.f32.mxu0 0.0
  %4116 = vmatmul.mubr.f32.gmra.mrb[0].mxu0 %v3589
  %v4117 = vpop.f32.mrb[0].mxu0
  %v4118 = vadd.f32 %v3853, %v4117
  %v4119 = vpop.f32.mrb[0].mxu0
  %4120 = vdwg.mxu0
  %4121 = vst [vmem:[%s3] sm:$0xff] %v3923
  %4122 = vst [vmem:[%s3 + $0x8] sm:$0xff] %v3928
  %4123 = vst [vmem:[%s3 + $0x10] sm:$0xff] %v3933
  %4124 = vst [vmem:[%s3 + $0x18] sm:$0xff] %v3938
  %4125 = vst [vmem:[%s3 + $0x20] sm:$0xff] %v3943
  %4126 = vst [vmem:[%s3 + $0x28] sm:$0xff] %v3948
  %4127 = vst [vmem:[%s3 + $0x30] sm:$0xff] %v3953
  %4128 = vst [vmem:[%s3 + $0x38] sm:$0xff] %v3958
  %4129 = vst [vmem:[%s3 + $0x40] sm:$0xff] %v3963
  %4130 = vst [vmem:[%s3 + $0x48] sm:$0xff] %v3968
  %4131 = vst [vmem:[%s3 + $0x50] sm:$0xff] %v3973
  %4132 = vst [vmem:[%s3 + $0x58] sm:$0xff] %v3978
  %4133 = vst [vmem:[%s3 + $0x60] sm:$0xff] %v3983
  %4134 = vst [vmem:[%s3 + $0x68] sm:$0xff] %v3988
  %4135 = vst [vmem:[%s3 + $0x70] sm:$0xff] %v3993
  %4136 = vst [vmem:[%s3 + $0x78] sm:$0xff] %v3998
  %4137 = vst [vmem:[%s3 + $0x80] sm:$0xff] %v4003
  %4138 = vst [vmem:[%s3 + $0x88] sm:$0xff] %v4008
  %4139 = vst [vmem:[%s3 + $0x90] sm:$0xff] %v4013
  %4140 = vst [vmem:[%s3 + $0x98] sm:$0xff] %v4018
  %4141 = vst [vmem:[%s3 + $0xa0] sm:$0xff] %v4023
  %4142 = vst [vmem:[%s3 + $0xa8] sm:$0xff] %v4028
  %4143 = vst [vmem:[%s3 + $0xb0] sm:$0xff] %v4033
  %4144 = vst [vmem:[%s3 + $0xb8] sm:$0xff] %v4038
  %4145 = vst [vmem:[%s3 + $0xc0] sm:$0xff] %v4043
  %4146 = vst [vmem:[%s3 + $0xc8] sm:$0xff] %v4048
  %4147 = vst [vmem:[%s3 + $0xd0] sm:$0xff] %v4053
  %4148 = vst [vmem:[%s3 + $0xd8] sm:$0xff] %v4058
  %4149 = vst [vmem:[%s3 + $0xe0] sm:$0xff] %v4063
  %4150 = vst [vmem:[%s3 + $0xe8] sm:$0xff] %v4068
  %4151 = vst [vmem:[%s3 + $0xf0] sm:$0xff] %v4073
  %4152 = vst [vmem:[%s3 + $0xf8] sm:$0xff] %v4078
  %4153 = vst [vmem:[%s3 + $0x100] sm:$0xff] %v4083
  %4154 = vst [vmem:[%s3 + $0x108] sm:$0xff] %v4088
  %4155 = vst [vmem:[%s3 + $0x110] sm:$0xff] %v4093
  %4156 = vst [vmem:[%s3 + $0x118] sm:$0xff] %v4098
  %4157 = vst [vmem:[%s3 + $0x120] sm:$0xff] %v4103
  %4158 = vst [vmem:[%s3 + $0x128] sm:$0xff] %v4108
  %4159 = vst [vmem:[%s3 + $0x130] sm:$0xff] %v4113
  %4160 = vst [vmem:[%s3 + $0x138] sm:$0xff] %v4118
  // Predicated region
  $region14: #{self_attention_pallas.1} parent=0 // pred_check
    _
  $region15: #{self_attention_pallas.1} parent=0 // pred_check_branch
    %4162 = sbr.rel (0) target = $region17
  $region16: #{self_attention_pallas.1} parent=0 // pred_region
    _
  $region17: #{self_attention_pallas.1} parent=0 // pred_fallthru
    _
  // Predicated region
  $region18: #{self_attention_pallas.1} parent=0 // pred_check
    _
  $region19: #{self_attention_pallas.1} parent=0 // pred_check_branch
    %4164 = sbr.rel (0) target = $region21
  $region20: #{self_attention_pallas.1} parent=0 // pred_region
    _
  $region21: #{self_attention_pallas.1} parent=0 // pred_fallthru
    _

</llo_original>
